<compile_context>
chip_gen: v6e
topology: v6e:2x2x1
jax: 0.10.0
libtpu: 0.0.40
codegen_flags: <defaults>
</compile_context>

<pallas_src>
import functools
import math

import jax
import jax.numpy as jnp
from jax import lax
from jax.experimental import pallas as pl
from jax.experimental.pallas import tpu as pltpu


# ----------------------------- small helpers -----------------------------

def _gelu_exact(x):
    # PyTorch nn.GELU default = exact erf form (f32).
    return 0.5 * x * (1.0 + lax.erf(x * (1.0 / math.sqrt(2.0))))


def _layernorm(t, g_ref, b_ref, eps=1e-5):
    # t: (N, C) f32 ; g_ref/b_ref: (1, C) refs. Stats kept in f32.
    mu = jnp.mean(t, axis=-1, keepdims=True)
    var = jnp.mean((t - mu) * (t - mu), axis=-1, keepdims=True)
    return (t - mu) * lax.rsqrt(var + eps) * g_ref[0] + b_ref[0]


def _mha(q_in, k_in, v_in,
         wq, bq, wk, bk, wv, bv, wo, bo,
         attn_buf, *, num_heads, scale):
    """Multi-head attention for one batch row.  q_in:(N,C)  k_in/v_in:(M,C)."""
    C = q_in.shape[-1]
    hd = C // num_heads
    bf16 = jnp.bfloat16

    # Projections: bf16 operands on the MXU, f32 accumulate, f32 bias add.
    q = jnp.dot(q_in.astype(bf16), wq[...], preferred_element_type=jnp.float32) + bq[0]
    k = jnp.dot(k_in.astype(bf16), wk[...], preferred_element_type=jnp.float32) + bk[0]
    v = jnp.dot(v_in.astype(bf16), wv[...], preferred_element_type=jnp.float32) + bv[0]

    # Fold the softmax scale into q once (O(N*C)) instead of scaling (N,M) per head.
    q = q * scale

    for h in range(num_heads):            # static loop; results go into VMEM scratch
        lo, hi = h * hd, (h + 1) * hd
        qh = q[:, lo:hi].astype(bf16)     # (N, hd)
        kh = k[:, lo:hi].astype(bf16)     # (M, hd)
        vh = v[:, lo:hi].astype(bf16)     # (M, hd)

        # q @ k^T with the transpose folded into dot_general (no separate XLU transpose).
        s = lax.dot_general(qh, kh, (((1,), (1,)), ((), ())),
                            preferred_element_type=jnp.float32)      # (N, M) f32

        m = jnp.max(s, axis=-1, keepdims=True)
        e = jnp.exp(s - m)
        p = e * pl.reciprocal(jnp.sum(e, axis=-1, keepdims=True), approx=True)

        attn_buf[:, lo:hi] = jnp.dot(p.astype(bf16), vh,
                                     preferred_element_type=jnp.float32)

    # Single lane-dense (N,C)@(C,C) output projection over the concatenated heads.
    return jnp.dot(attn_buf[...].astype(bf16), wo[...],
                   preferred_element_type=jnp.float32) + bo[0]


# ------------------------------- the kernel -------------------------------

def _decoder_block_kernel(x_ref, z_ref, pos_ref, zpos_ref, *refs, num_heads):
    (ln1_g, ln1_b,
     sa_wq, sa_bq, sa_wk, sa_bk, sa_wv, sa_bv, sa_wo, sa_bo,
     ln2_g, ln2_b,
     ca_wq, ca_bq, ca_wk, ca_bk, ca_wv, ca_bv, ca_wo, ca_bo,
     ln3_g, ln3_b,
     w1, b1, w2, b2,
     o_ref, attn_buf) = refs

    x = x_ref[0]          # (N, C) f32
    z = z_ref[0]          # (M, C) f32
    pos = pos_ref[0]      # (N, C)
    zpos = zpos_ref[0]    # (M, C)
    C = x.shape[-1]
    scale = (C // num_heads) ** (-0.5)

    # ---- self-attention (q = k = norm1(x); qpos = kpos = pos; v has no pos) ----
    nx = _layernorm(x, ln1_g, ln1_b)
    qk_in = nx + pos                       # computed once, reused for q and k
    x = x + _mha(qk_in, qk_in, nx,
                 sa_wq, sa_bq, sa_wk, sa_bk, sa_wv, sa_bv, sa_wo, sa_bo,
                 attn_buf, num_heads=num_heads, scale=scale)

    # ---- cross-attention (norm2 applied to BOTH x and z, as in the reference) ----
    nx2 = _layernorm(x, ln2_g, ln2_b)
    nz = _layernorm(z, ln2_g, ln2_b)
    x = x + _mha(nx2 + pos, nz + zpos, nz,
                 ca_wq, ca_bq, ca_wk, ca_bk, ca_wv, ca_bv, ca_wo, ca_bo,
                 attn_buf, num_heads=num_heads, scale=scale)

    # ---- MLP (norm3 -> fc1 -> GELU -> fc2), GELU in f32, matmuls in bf16 ----
    nx3 = _layernorm(x, ln3_g, ln3_b)
    h = jnp.dot(nx3.astype(jnp.bfloat16), w1[...],
                preferred_element_type=jnp.float32) + b1[0]
    h = _gelu_exact(h)
    h = jnp.dot(h.astype(jnp.bfloat16), w2[...],
                preferred_element_type=jnp.float32) + b2[0]

    o_ref[0] = (x + h).astype(o_ref.dtype)


# ------------------------------- the wrapper -------------------------------

_PARAM_ORDER = (
    "ln1_g", "ln1_b",
    "sa_wq", "sa_bq", "sa_wk", "sa_bk", "sa_wv", "sa_bv", "sa_wo", "sa_bo",
    "ln2_g", "ln2_b",
    "ca_wq", "ca_bq", "ca_wk", "ca_bk", "ca_wv", "ca_bv", "ca_wo", "ca_bo",
    "ln3_g", "ln3_b",
    "w1", "b1", "w2", "b2",
)
_BF16_PARAMS = frozenset({
    "sa_wq", "sa_wk", "sa_wv", "sa_wo",
    "ca_wq", "ca_wk", "ca_wv", "ca_wo",
    "w1", "w2",
})


def decoder_block(x, z, pos, zpos, params, *, num_heads):
    B, N, C = x.shape
    Bz, M, Cz = z.shape
    assert Bz == B and Cz == C and C % num_heads == 0

    args, specs = [], []
    for name in _PARAM_ORDER:
        a = params[name]
        if name in _BF16_PARAMS:
            a = a.astype(jnp.bfloat16)     # bf16 weights at the pallas_call boundary
        args.append(a)
        specs.append(pl.BlockSpec(a.shape, lambda b: (0, 0)))

    kernel = functools.partial(_decoder_block_kernel, num_heads=num_heads)

    # VMEM budget: double-buffered I/O plus headroom for f32 intermediates; keep it
    # below the 64 MiB physical VMEM of a v7x TensorCore.
    io_bytes = (
        sum(int(a.size) * a.dtype.itemsize for a in args)
        + 2 * N * C * x.dtype.itemsize        # x + pos blocks
        + 2 * M * C * z.dtype.itemsize        # z + zpos blocks
        + N * C * x.dtype.itemsize            # output block
    )
    vmem_limit = int(min(max(6 * io_bytes, 32 * 1024 * 1024), 56 * 1024 * 1024))

    return pl.pallas_call(
        kernel,
        out_shape=jax.ShapeDtypeStruct((B, N, C), x.dtype),
        grid=(B,),
        in_specs=[
            pl.BlockSpec((1, N, C), lambda b: (b, 0, 0)),   # x
            pl.BlockSpec((1, M, C), lambda b: (b, 0, 0)),   # z (memory)
            pl.BlockSpec((1, N, C), lambda b: (b, 0, 0)),   # pos
            pl.BlockSpec((1, M, C), lambda b: (b, 0, 0)),   # zpos
        ] + specs,
        out_specs=pl.BlockSpec((1, N, C), lambda b: (b, 0, 0)),
        scratch_shapes=[pltpu.VMEM((N, C), jnp.float32)],   # concatenated head outputs
        compiler_params=pltpu.CompilerParams(
            dimension_semantics=("parallel",),
            vmem_limit_bytes=vmem_limit,
        ),
    )(x, z, pos, zpos, *args)


# ---------------------------- params & reference ----------------------------

def init_params(key, dim, mlp_hidden_dim):
    keys = jax.random.split(key, 10)
    s = 0.02

    def lin(k, fin, fout):
        kw, kb = jax.random.split(k)
        return (s * jax.random.normal(kw, (fin, fout), jnp.float32),
                s * jax.random.normal(kb, (1, fout), jnp.float32))

    p = {}
    for n in ("ln1", "ln2", "ln3"):
        p[n + "_g"] = jnp.ones((1, dim), jnp.float32)
        p[n + "_b"] = jnp.zeros((1, dim), jnp.float32)
    attn_names = (("sa_wq", "sa_bq"), ("sa_wk", "sa_bk"), ("sa_wv", "sa_bv"), ("sa_wo", "sa_bo"),
                  ("ca_wq", "ca_bq"), ("ca_wk", "ca_bk"), ("ca_wv", "ca_bv"), ("ca_wo", "ca_bo"))
    for i, (wn, bn) in enumerate(attn_names):
        p[wn], p[bn] = lin(keys[i], dim, dim)
    p["w1"], p["b1"] = lin(keys[8], dim, mlp_hidden_dim)
    p["w2"], p["b2"] = lin(keys[9], mlp_hidden_dim, dim)
    return p


def decoder_block_reference(x, z, pos, zpos, params, *, num_heads):
    """Pure-JAX f32 reference mirroring the PyTorch DecoderBlock (inference)."""
    def ln(t, g, b):
        mu = jnp.mean(t, axis=-1, keepdims=True)
        var = jnp.mean((t - mu) ** 2, axis=-1, keepdims=True)
        return (t - mu) / jnp.sqrt(var + 1e-5) * g + b

    def attn(qx, kx, vx, pre):
        B, N, C = qx.shape
        M = kx.shape[1]
        hd = C // num_heads
        q = (qx @ params[pre + "_wq"] + params[pre + "_bq"]).reshape(B, N, num_heads, hd).transpose(0, 2, 1, 3)
        k = (kx @ params[pre + "_wk"] + params[pre + "_bk"]).reshape(B, M, num_heads, hd).transpose(0, 2, 1, 3)
        v = (vx @ params[pre + "_wv"] + params[pre + "_bv"]).reshape(B, M, num_heads, hd).transpose(0, 2, 1, 3)
        s = jnp.einsum("bhqd,bhkd->bhqk", q, k) * (hd ** (-0.5))
        a = jax.nn.softmax(s, axis=-1)
        o = jnp.einsum("bhqk,bhkd->bhqd", a, v).transpose(0, 2, 1, 3).reshape(B, N, C)
        return o @ params[pre + "_wo"] + params[pre + "_bo"]

    nx = ln(x, params["ln1_g"], params["ln1_b"])
    x = x + attn(nx + pos, nx + pos, nx, "sa")
    nx = ln(x, params["ln2_g"], params["ln2_b"])
    nz = ln(z, params["ln2_g"], params["ln2_b"])
    x = x + attn(nx + pos, nz + zpos, nz, "ca")
    nx = ln(x, params["ln3_g"], params["ln3_b"])
    h = _gelu_exact(nx @ params["w1"] + params["b1"])
    h = h @ params["w2"] + params["b2"]
    return x + h


if __name__ == "__main__":
    # Small but lane-dense shapes: C and H multiples of 128, sequence dims multiples of 8.
    B, N, M, C = 2, 16, 32, 128
    num_heads = 4
    mlp_hidden = 256

    key = jax.random.PRNGKey(0)
    kx, kz, kp, kzp, kw = jax.random.split(key, 5)
    x = jax.random.normal(kx, (B, N, C), jnp.float32)
    z = jax.random.normal(kz, (B, M, C), jnp.float32)
    pos = 0.1 * jax.random.normal(kp, (B, N, C), jnp.float32)
    zpos = 0.1 * jax.random.normal(kzp, (B, M, C), jnp.float32)
    params = init_params(kw, C, mlp_hidden)

    out = decoder_block(x, z, pos, zpos, params, num_heads=num_heads)
    out = jax.block_until_ready(out)
    assert out.shape == (B, N, C)

    ref = decoder_block_reference(x, z, pos, zpos, params, num_heads=num_heads)
    err = float(jnp.max(jnp.abs(out - ref)))
    assert err < 5e-2, f"max abs error vs f32 reference: {err}"
    print("KERNEL_OK")
</pallas_src>

<mosaic_0001>
module attributes {stable_mosaic.version = 11 : i64} {
  func.func @_decoder_block_kernel(%arg0: i32, %arg1: memref<1x16x128xf32, #tpu.memory_space<vmem>>, %arg2: memref<1x32x128xf32, #tpu.memory_space<vmem>>, %arg3: memref<1x16x128xf32, #tpu.memory_space<vmem>>, %arg4: memref<1x32x128xf32, #tpu.memory_space<vmem>>, %arg5: memref<1x128xf32, #tpu.memory_space<vmem>>, %arg6: memref<1x128xf32, #tpu.memory_space<vmem>>, %arg7: memref<128x128xbf16, #tpu.memory_space<vmem>>, %arg8: memref<1x128xf32, #tpu.memory_space<vmem>>, %arg9: memref<128x128xbf16, #tpu.memory_space<vmem>>, %arg10: memref<1x128xf32, #tpu.memory_space<vmem>>, %arg11: memref<128x128xbf16, #tpu.memory_space<vmem>>, %arg12: memref<1x128xf32, #tpu.memory_space<vmem>>, %arg13: memref<128x128xbf16, #tpu.memory_space<vmem>>, %arg14: memref<1x128xf32, #tpu.memory_space<vmem>>, %arg15: memref<1x128xf32, #tpu.memory_space<vmem>>, %arg16: memref<1x128xf32, #tpu.memory_space<vmem>>, %arg17: memref<128x128xbf16, #tpu.memory_space<vmem>>, %arg18: memref<1x128xf32, #tpu.memory_space<vmem>>, %arg19: memref<128x128xbf16, #tpu.memory_space<vmem>>, %arg20: memref<1x128xf32, #tpu.memory_space<vmem>>, %arg21: memref<128x128xbf16, #tpu.memory_space<vmem>>, %arg22: memref<1x128xf32, #tpu.memory_space<vmem>>, %arg23: memref<128x128xbf16, #tpu.memory_space<vmem>>, %arg24: memref<1x128xf32, #tpu.memory_space<vmem>>, %arg25: memref<1x128xf32, #tpu.memory_space<vmem>>, %arg26: memref<1x128xf32, #tpu.memory_space<vmem>>, %arg27: memref<128x256xbf16, #tpu.memory_space<vmem>>, %arg28: memref<1x256xf32, #tpu.memory_space<vmem>>, %arg29: memref<256x128xbf16, #tpu.memory_space<vmem>>, %arg30: memref<1x128xf32, #tpu.memory_space<vmem>>, %arg31: memref<1x16x128xf32, #tpu.memory_space<vmem>>, %arg32: memref<16x128xf32, #tpu.memory_space<vmem>>) attributes {dimension_semantics = [#tpu.dimension_semantics<parallel>], iteration_bounds = array<i64: 2>, scalar_prefetch = 0 : i64, scratch_operands = 1 : i64, tpu.core_type = #tpu.core_type<tc>, window_params = [{transform_indices = @transform_0, window_bounds = array<i64: 1, 16, 128>}, {transform_indices = @transform_1, window_bounds = array<i64: 1, 32, 128>}, {transform_indices = @transform_2, window_bounds = array<i64: 1, 16, 128>}, {transform_indices = @transform_3, window_bounds = array<i64: 1, 32, 128>}, {pipeline_mode = #tpu.pipeline_mode<synchronous>, transform_indices = @transform_4, window_bounds = array<i64: 1, 128>}, {pipeline_mode = #tpu.pipeline_mode<synchronous>, transform_indices = @transform_5, window_bounds = array<i64: 1, 128>}, {pipeline_mode = #tpu.pipeline_mode<synchronous>, transform_indices = @transform_6, window_bounds = array<i64: 128, 128>}, {pipeline_mode = #tpu.pipeline_mode<synchronous>, transform_indices = @transform_7, window_bounds = array<i64: 1, 128>}, {pipeline_mode = #tpu.pipeline_mode<synchronous>, transform_indices = @transform_8, window_bounds = array<i64: 128, 128>}, {pipeline_mode = #tpu.pipeline_mode<synchronous>, transform_indices = @transform_9, window_bounds = array<i64: 1, 128>}, {pipeline_mode = #tpu.pipeline_mode<synchronous>, transform_indices = @transform_10, window_bounds = array<i64: 128, 128>}, {pipeline_mode = #tpu.pipeline_mode<synchronous>, transform_indices = @transform_11, window_bounds = array<i64: 1, 128>}, {pipeline_mode = #tpu.pipeline_mode<synchronous>, transform_indices = @transform_12, window_bounds = array<i64: 128, 128>}, {pipeline_mode = #tpu.pipeline_mode<synchronous>, transform_indices = @transform_13, window_bounds = array<i64: 1, 128>}, {pipeline_mode = #tpu.pipeline_mode<synchronous>, transform_indices = @transform_14, window_bounds = array<i64: 1, 128>}, {pipeline_mode = #tpu.pipeline_mode<synchronous>, transform_indices = @transform_15, window_bounds = array<i64: 1, 128>}, {pipeline_mode = #tpu.pipeline_mode<synchronous>, transform_indices = @transform_16, window_bounds = array<i64: 128, 128>}, {pipeline_mode = #tpu.pipeline_mode<synchronous>, transform_indices = @transform_17, window_bounds = array<i64: 1, 128>}, {pipeline_mode = #tpu.pipeline_mode<synchronous>, transform_indices = @transform_18, window_bounds = array<i64: 128, 128>}, {pipeline_mode = #tpu.pipeline_mode<synchronous>, transform_indices = @transform_19, window_bounds = array<i64: 1, 128>}, {pipeline_mode = #tpu.pipeline_mode<synchronous>, transform_indices = @transform_20, window_bounds = array<i64: 128, 128>}, {pipeline_mode = #tpu.pipeline_mode<synchronous>, transform_indices = @transform_21, window_bounds = array<i64: 1, 128>}, {pipeline_mode = #tpu.pipeline_mode<synchronous>, transform_indices = @transform_22, window_bounds = array<i64: 128, 128>}, {pipeline_mode = #tpu.pipeline_mode<synchronous>, transform_indices = @transform_23, window_bounds = array<i64: 1, 128>}, {pipeline_mode = #tpu.pipeline_mode<synchronous>, transform_indices = @transform_24, window_bounds = array<i64: 1, 128>}, {pipeline_mode = #tpu.pipeline_mode<synchronous>, transform_indices = @transform_25, window_bounds = array<i64: 1, 128>}, {pipeline_mode = #tpu.pipeline_mode<synchronous>, transform_indices = @transform_26, window_bounds = array<i64: 128, 256>}, {pipeline_mode = #tpu.pipeline_mode<synchronous>, transform_indices = @transform_27, window_bounds = array<i64: 1, 256>}, {pipeline_mode = #tpu.pipeline_mode<synchronous>, transform_indices = @transform_28, window_bounds = array<i64: 256, 128>}, {pipeline_mode = #tpu.pipeline_mode<synchronous>, transform_indices = @transform_29, window_bounds = array<i64: 1, 128>}, {transform_indices = @transform_30, window_bounds = array<i64: 1, 16, 128>}]} {
    %c0 = arith.constant 0 : index
    %c0_0 = arith.constant 0 : index
    %c0_1 = arith.constant 0 : index
    %0 = vector.load %arg1[%c0, %c0_0, %c0_1] : memref<1x16x128xf32, #tpu.memory_space<vmem>>, vector<1x16x128xf32>
    %1 = vector.shape_cast %0 : vector<1x16x128xf32> to vector<16x128xf32>
    %c0_2 = arith.constant 0 : index
    %c0_3 = arith.constant 0 : index
    %c0_4 = arith.constant 0 : index
    %2 = vector.load %arg2[%c0_2, %c0_3, %c0_4] : memref<1x32x128xf32, #tpu.memory_space<vmem>>, vector<1x32x128xf32>
    %3 = vector.shape_cast %2 : vector<1x32x128xf32> to vector<32x128xf32>
    %c0_5 = arith.constant 0 : index
    %c0_6 = arith.constant 0 : index
    %c0_7 = arith.constant 0 : index
    %4 = vector.load %arg3[%c0_5, %c0_6, %c0_7] : memref<1x16x128xf32, #tpu.memory_space<vmem>>, vector<1x16x128xf32>
    %5 = vector.shape_cast %4 : vector<1x16x128xf32> to vector<16x128xf32>
    %c0_8 = arith.constant 0 : index
    %c0_9 = arith.constant 0 : index
    %c0_10 = arith.constant 0 : index
    %6 = vector.load %arg4[%c0_8, %c0_9, %c0_10] : memref<1x32x128xf32, #tpu.memory_space<vmem>>, vector<1x32x128xf32>
    %7 = vector.shape_cast %6 : vector<1x32x128xf32> to vector<32x128xf32>
    %cst = arith.constant dense<0.000000e+00> : vector<16xf32>
    %8 = vector.multi_reduction <add>, %1, %cst [1] : vector<16x128xf32> to vector<16xf32>
    %9 = vector.shape_cast %8 : vector<16xf32> to vector<16x1xf32>
    %cst_11 = arith.constant 1.280000e+02 : f32
    %10 = vector.broadcast %cst_11 : f32 to vector<16x1xf32>
    %11 = arith.divf %9, %10 : vector<16x1xf32>
    %12 = vector.broadcast %11 : vector<16x1xf32> to vector<16x128xf32>
    %13 = arith.subf %1, %12 : vector<16x128xf32>
    %14 = vector.broadcast %11 : vector<16x1xf32> to vector<16x128xf32>
    %15 = arith.subf %1, %14 : vector<16x128xf32>
    %16 = arith.mulf %13, %15 : vector<16x128xf32>
    %cst_12 = arith.constant dense<0.000000e+00> : vector<16xf32>
    %17 = vector.multi_reduction <add>, %16, %cst_12 [1] : vector<16x128xf32> to vector<16xf32>
    %18 = vector.shape_cast %17 : vector<16xf32> to vector<16x1xf32>
    %cst_13 = arith.constant 1.280000e+02 : f32
    %19 = vector.broadcast %cst_13 : f32 to vector<16x1xf32>
    %20 = arith.divf %18, %19 : vector<16x1xf32>
    %21 = vector.broadcast %11 : vector<16x1xf32> to vector<16x128xf32>
    %22 = arith.subf %1, %21 : vector<16x128xf32>
    %cst_14 = arith.constant 9.99999974E-6 : f32
    %23 = vector.broadcast %cst_14 : f32 to vector<16x1xf32>
    %24 = arith.addf %20, %23 : vector<16x1xf32>
    %25 = math.rsqrt %24 : vector<16x1xf32>
    %26 = vector.broadcast %25 : vector<16x1xf32> to vector<16x128xf32>
    %27 = arith.mulf %22, %26 : vector<16x128xf32>
    %c0_15 = arith.constant 0 : index
    %c0_16 = arith.constant 0 : index
    %28 = vector.load %arg5[%c0_15, %c0_16] : memref<1x128xf32, #tpu.memory_space<vmem>>, vector<1x128xf32>
    %29 = vector.shape_cast %28 : vector<1x128xf32> to vector<128xf32>
    %30 = vector.shape_cast %29 : vector<128xf32> to vector<1x128xf32>
    %31 = vector.broadcast %30 : vector<1x128xf32> to vector<16x128xf32>
    %32 = arith.mulf %27, %31 : vector<16x128xf32>
    %c0_17 = arith.constant 0 : index
    %c0_18 = arith.constant 0 : index
    %33 = vector.load %arg6[%c0_17, %c0_18] : memref<1x128xf32, #tpu.memory_space<vmem>>, vector<1x128xf32>
    %34 = vector.shape_cast %33 : vector<1x128xf32> to vector<128xf32>
    %35 = vector.shape_cast %34 : vector<128xf32> to vector<1x128xf32>
    %36 = vector.broadcast %35 : vector<1x128xf32> to vector<16x128xf32>
    %37 = arith.addf %32, %36 : vector<16x128xf32>
    %38 = arith.addf %37, %5 : vector<16x128xf32>
    %39 = arith.truncf %38 : vector<16x128xf32> to vector<16x128xbf16>
    %c0_19 = arith.constant 0 : index
    %c0_20 = arith.constant 0 : index
    %40 = vector.load %arg7[%c0_19, %c0_20] : memref<128x128xbf16, #tpu.memory_space<vmem>>, vector<128x128xbf16>
    %cst_21 = arith.constant dense<0.000000e+00> : vector<16x128xf32>
    %41 = tpu.matmul %39, %40, %cst_21 {dimension_numbers = #tpu.dot_dimension_numbers<[1], [0], [0], [1], [0, 0, 1, 1], [], []>} : vector<16x128xbf16>, vector<128x128xbf16>, vector<16x128xf32> -> vector<16x128xf32>
    %c0_22 = arith.constant 0 : index
    %c0_23 = arith.constant 0 : index
    %42 = vector.load %arg8[%c0_22, %c0_23] : memref<1x128xf32, #tpu.memory_space<vmem>>, vector<1x128xf32>
    %43 = vector.shape_cast %42 : vector<1x128xf32> to vector<128xf32>
    %44 = vector.shape_cast %43 : vector<128xf32> to vector<1x128xf32>
    %45 = vector.broadcast %44 : vector<1x128xf32> to vector<16x128xf32>
    %46 = arith.addf %41, %45 : vector<16x128xf32>
    %47 = arith.truncf %38 : vector<16x128xf32> to vector<16x128xbf16>
    %c0_24 = arith.constant 0 : index
    %c0_25 = arith.constant 0 : index
    %48 = vector.load %arg9[%c0_24, %c0_25] : memref<128x128xbf16, #tpu.memory_space<vmem>>, vector<128x128xbf16>
    %cst_26 = arith.constant dense<0.000000e+00> : vector<16x128xf32>
    %49 = tpu.matmul %47, %48, %cst_26 {dimension_numbers = #tpu.dot_dimension_numbers<[1], [0], [0], [1], [0, 0, 1, 1], [], []>} : vector<16x128xbf16>, vector<128x128xbf16>, vector<16x128xf32> -> vector<16x128xf32>
    %c0_27 = arith.constant 0 : index
    %c0_28 = arith.constant 0 : index
    %50 = vector.load %arg10[%c0_27, %c0_28] : memref<1x128xf32, #tpu.memory_space<vmem>>, vector<1x128xf32>
    %51 = vector.shape_cast %50 : vector<1x128xf32> to vector<128xf32>
    %52 = vector.shape_cast %51 : vector<128xf32> to vector<1x128xf32>
    %53 = vector.broadcast %52 : vector<1x128xf32> to vector<16x128xf32>
    %54 = arith.addf %49, %53 : vector<16x128xf32>
    %55 = arith.truncf %37 : vector<16x128xf32> to vector<16x128xbf16>
    %c0_29 = arith.constant 0 : index
    %c0_30 = arith.constant 0 : index
    %56 = vector.load %arg11[%c0_29, %c0_30] : memref<128x128xbf16, #tpu.memory_space<vmem>>, vector<128x128xbf16>
    %cst_31 = arith.constant dense<0.000000e+00> : vector<16x128xf32>
    %57 = tpu.matmul %55, %56, %cst_31 {dimension_numbers = #tpu.dot_dimension_numbers<[1], [0], [0], [1], [0, 0, 1, 1], [], []>} : vector<16x128xbf16>, vector<128x128xbf16>, vector<16x128xf32> -> vector<16x128xf32>
    %c0_32 = arith.constant 0 : index
    %c0_33 = arith.constant 0 : index
    %58 = vector.load %arg12[%c0_32, %c0_33] : memref<1x128xf32, #tpu.memory_space<vmem>>, vector<1x128xf32>
    %59 = vector.shape_cast %58 : vector<1x128xf32> to vector<128xf32>
    %60 = vector.shape_cast %59 : vector<128xf32> to vector<1x128xf32>
    %61 = vector.broadcast %60 : vector<1x128xf32> to vector<16x128xf32>
    %62 = arith.addf %57, %61 : vector<16x128xf32>
    %cst_34 = arith.constant 0.176776692 : f32
    %63 = vector.broadcast %cst_34 : f32 to vector<16x128xf32>
    %64 = arith.mulf %46, %63 : vector<16x128xf32>
    %65 = vector.extract_strided_slice %64 {offsets = [0, 0], sizes = [16, 32], strides = [1, 1]} : vector<16x128xf32> to vector<16x32xf32>
    %66 = arith.truncf %65 : vector<16x32xf32> to vector<16x32xbf16>
    %67 = vector.extract_strided_slice %54 {offsets = [0, 0], sizes = [16, 32], strides = [1, 1]} : vector<16x128xf32> to vector<16x32xf32>
    %68 = arith.truncf %67 : vector<16x32xf32> to vector<16x32xbf16>
    %69 = vector.extract_strided_slice %62 {offsets = [0, 0], sizes = [16, 32], strides = [1, 1]} : vector<16x128xf32> to vector<16x32xf32>
    %70 = arith.truncf %69 : vector<16x32xf32> to vector<16x32xbf16>
    %cst_35 = arith.constant dense<0.000000e+00> : vector<16x16xf32>
    %71 = tpu.matmul %66, %68, %cst_35 {dimension_numbers = #tpu.dot_dimension_numbers<[1], [1], [0], [0], [0, 0, 1, 0], [], []>} : vector<16x32xbf16>, vector<16x32xbf16>, vector<16x16xf32> -> vector<16x16xf32>
    %cst_36 = arith.constant dense<0xFF800000> : vector<16xf32>
    %72 = vector.multi_reduction <maximumf>, %71, %cst_36 [1] : vector<16x16xf32> to vector<16xf32>
    %73 = vector.shape_cast %72 : vector<16xf32> to vector<16x1xf32>
    %74 = vector.broadcast %73 : vector<16x1xf32> to vector<16x16xf32>
    %75 = arith.subf %71, %74 : vector<16x16xf32>
    %76 = math.exp %75 : vector<16x16xf32>
    %cst_37 = arith.constant dense<0.000000e+00> : vector<16xf32>
    %77 = vector.multi_reduction <add>, %76, %cst_37 [1] : vector<16x16xf32> to vector<16xf32>
    %78 = vector.shape_cast %77 : vector<16xf32> to vector<16x1xf32>
    %79 = tpu.reciprocal %78 {approx = true} : vector<16x1xf32> -> vector<16x1xf32>
    %80 = vector.broadcast %79 : vector<16x1xf32> to vector<16x16xf32>
    %81 = arith.mulf %76, %80 : vector<16x16xf32>
    %82 = arith.truncf %81 : vector<16x16xf32> to vector<16x16xbf16>
    %cst_38 = arith.constant dense<0.000000e+00> : vector<16x32xf32>
    %83 = tpu.matmul %82, %70, %cst_38 {dimension_numbers = #tpu.dot_dimension_numbers<[1], [0], [0], [1], [0, 0, 1, 1], [], []>} : vector<16x16xbf16>, vector<16x32xbf16>, vector<16x32xf32> -> vector<16x32xf32>
    %c0_39 = arith.constant 0 : index
    %c0_40 = arith.constant 0 : index
    %84 = vector.load %arg32[%c0_39, %c0_40] : memref<16x128xf32, #tpu.memory_space<vmem>>, vector<16x32xf32>
    tpu.vector_store %arg32[%c0_39, %c0_40], %83 {strides = array<i32>} : memref<16x128xf32, #tpu.memory_space<vmem>>, vector<16x32xf32>,
    %85 = vector.extract_strided_slice %64 {offsets = [0, 32], sizes = [16, 32], strides = [1, 1]} : vector<16x128xf32> to vector<16x32xf32>
    %86 = arith.truncf %85 : vector<16x32xf32> to vector<16x32xbf16>
    %87 = vector.extract_strided_slice %54 {offsets = [0, 32], sizes = [16, 32], strides = [1, 1]} : vector<16x128xf32> to vector<16x32xf32>
    %88 = arith.truncf %87 : vector<16x32xf32> to vector<16x32xbf16>
    %89 = vector.extract_strided_slice %62 {offsets = [0, 32], sizes = [16, 32], strides = [1, 1]} : vector<16x128xf32> to vector<16x32xf32>
    %90 = arith.truncf %89 : vector<16x32xf32> to vector<16x32xbf16>
    %cst_41 = arith.constant dense<0.000000e+00> : vector<16x16xf32>
    %91 = tpu.matmul %86, %88, %cst_41 {dimension_numbers = #tpu.dot_dimension_numbers<[1], [1], [0], [0], [0, 0, 1, 0], [], []>} : vector<16x32xbf16>, vector<16x32xbf16>, vector<16x16xf32> -> vector<16x16xf32>
    %cst_42 = arith.constant dense<0xFF800000> : vector<16xf32>
    %92 = vector.multi_reduction <maximumf>, %91, %cst_42 [1] : vector<16x16xf32> to vector<16xf32>
    %93 = vector.shape_cast %92 : vector<16xf32> to vector<16x1xf32>
    %94 = vector.broadcast %93 : vector<16x1xf32> to vector<16x16xf32>
    %95 = arith.subf %91, %94 : vector<16x16xf32>
    %96 = math.exp %95 : vector<16x16xf32>
    %cst_43 = arith.constant dense<0.000000e+00> : vector<16xf32>
    %97 = vector.multi_reduction <add>, %96, %cst_43 [1] : vector<16x16xf32> to vector<16xf32>
    %98 = vector.shape_cast %97 : vector<16xf32> to vector<16x1xf32>
    %99 = tpu.reciprocal %98 {approx = true} : vector<16x1xf32> -> vector<16x1xf32>
    %100 = vector.broadcast %99 : vector<16x1xf32> to vector<16x16xf32>
    %101 = arith.mulf %96, %100 : vector<16x16xf32>
    %102 = arith.truncf %101 : vector<16x16xf32> to vector<16x16xbf16>
    %cst_44 = arith.constant dense<0.000000e+00> : vector<16x32xf32>
    %103 = tpu.matmul %102, %90, %cst_44 {dimension_numbers = #tpu.dot_dimension_numbers<[1], [0], [0], [1], [0, 0, 1, 1], [], []>} : vector<16x16xbf16>, vector<16x32xbf16>, vector<16x32xf32> -> vector<16x32xf32>
    %c0_45 = arith.constant 0 : index
    %c32 = arith.constant 32 : index
    %104 = vector.load %arg32[%c0_45, %c32] : memref<16x128xf32, #tpu.memory_space<vmem>>, vector<16x32xf32>
    tpu.vector_store %arg32[%c0_45, %c32], %103 {strides = array<i32>} : memref<16x128xf32, #tpu.memory_space<vmem>>, vector<16x32xf32>,
    %105 = vector.extract_strided_slice %64 {offsets = [0, 64], sizes = [16, 32], strides = [1, 1]} : vector<16x128xf32> to vector<16x32xf32>
    %106 = arith.truncf %105 : vector<16x32xf32> to vector<16x32xbf16>
    %107 = vector.extract_strided_slice %54 {offsets = [0, 64], sizes = [16, 32], strides = [1, 1]} : vector<16x128xf32> to vector<16x32xf32>
    %108 = arith.truncf %107 : vector<16x32xf32> to vector<16x32xbf16>
    %109 = vector.extract_strided_slice %62 {offsets = [0, 64], sizes = [16, 32], strides = [1, 1]} : vector<16x128xf32> to vector<16x32xf32>
    %110 = arith.truncf %109 : vector<16x32xf32> to vector<16x32xbf16>
    %cst_46 = arith.constant dense<0.000000e+00> : vector<16x16xf32>
    %111 = tpu.matmul %106, %108, %cst_46 {dimension_numbers = #tpu.dot_dimension_numbers<[1], [1], [0], [0], [0, 0, 1, 0], [], []>} : vector<16x32xbf16>, vector<16x32xbf16>, vector<16x16xf32> -> vector<16x16xf32>
    %cst_47 = arith.constant dense<0xFF800000> : vector<16xf32>
    %112 = vector.multi_reduction <maximumf>, %111, %cst_47 [1] : vector<16x16xf32> to vector<16xf32>
    %113 = vector.shape_cast %112 : vector<16xf32> to vector<16x1xf32>
    %114 = vector.broadcast %113 : vector<16x1xf32> to vector<16x16xf32>
    %115 = arith.subf %111, %114 : vector<16x16xf32>
    %116 = math.exp %115 : vector<16x16xf32>
    %cst_48 = arith.constant dense<0.000000e+00> : vector<16xf32>
    %117 = vector.multi_reduction <add>, %116, %cst_48 [1] : vector<16x16xf32> to vector<16xf32>
    %118 = vector.shape_cast %117 : vector<16xf32> to vector<16x1xf32>
    %119 = tpu.reciprocal %118 {approx = true} : vector<16x1xf32> -> vector<16x1xf32>
    %120 = vector.broadcast %119 : vector<16x1xf32> to vector<16x16xf32>
    %121 = arith.mulf %116, %120 : vector<16x16xf32>
    %122 = arith.truncf %121 : vector<16x16xf32> to vector<16x16xbf16>
    %cst_49 = arith.constant dense<0.000000e+00> : vector<16x32xf32>
    %123 = tpu.matmul %122, %110, %cst_49 {dimension_numbers = #tpu.dot_dimension_numbers<[1], [0], [0], [1], [0, 0, 1, 1], [], []>} : vector<16x16xbf16>, vector<16x32xbf16>, vector<16x32xf32> -> vector<16x32xf32>
    %c0_50 = arith.constant 0 : index
    %c64 = arith.constant 64 : index
    %124 = vector.load %arg32[%c0_50, %c64] : memref<16x128xf32, #tpu.memory_space<vmem>>, vector<16x32xf32>
    tpu.vector_store %arg32[%c0_50, %c64], %123 {strides = array<i32>} : memref<16x128xf32, #tpu.memory_space<vmem>>, vector<16x32xf32>,
    %125 = vector.extract_strided_slice %64 {offsets = [0, 96], sizes = [16, 32], strides = [1, 1]} : vector<16x128xf32> to vector<16x32xf32>
    %126 = arith.truncf %125 : vector<16x32xf32> to vector<16x32xbf16>
    %127 = vector.extract_strided_slice %54 {offsets = [0, 96], sizes = [16, 32], strides = [1, 1]} : vector<16x128xf32> to vector<16x32xf32>
    %128 = arith.truncf %127 : vector<16x32xf32> to vector<16x32xbf16>
    %129 = vector.extract_strided_slice %62 {offsets = [0, 96], sizes = [16, 32], strides = [1, 1]} : vector<16x128xf32> to vector<16x32xf32>
    %130 = arith.truncf %129 : vector<16x32xf32> to vector<16x32xbf16>
    %cst_51 = arith.constant dense<0.000000e+00> : vector<16x16xf32>
    %131 = tpu.matmul %126, %128, %cst_51 {dimension_numbers = #tpu.dot_dimension_numbers<[1], [1], [0], [0], [0, 0, 1, 0], [], []>} : vector<16x32xbf16>, vector<16x32xbf16>, vector<16x16xf32> -> vector<16x16xf32>
    %cst_52 = arith.constant dense<0xFF800000> : vector<16xf32>
    %132 = vector.multi_reduction <maximumf>, %131, %cst_52 [1] : vector<16x16xf32> to vector<16xf32>
    %133 = vector.shape_cast %132 : vector<16xf32> to vector<16x1xf32>
    %134 = vector.broadcast %133 : vector<16x1xf32> to vector<16x16xf32>
    %135 = arith.subf %131, %134 : vector<16x16xf32>
    %136 = math.exp %135 : vector<16x16xf32>
    %cst_53 = arith.constant dense<0.000000e+00> : vector<16xf32>
    %137 = vector.multi_reduction <add>, %136, %cst_53 [1] : vector<16x16xf32> to vector<16xf32>
    %138 = vector.shape_cast %137 : vector<16xf32> to vector<16x1xf32>
    %139 = tpu.reciprocal %138 {approx = true} : vector<16x1xf32> -> vector<16x1xf32>
    %140 = vector.broadcast %139 : vector<16x1xf32> to vector<16x16xf32>
    %141 = arith.mulf %136, %140 : vector<16x16xf32>
    %142 = arith.truncf %141 : vector<16x16xf32> to vector<16x16xbf16>
    %cst_54 = arith.constant dense<0.000000e+00> : vector<16x32xf32>
    %143 = tpu.matmul %142, %130, %cst_54 {dimension_numbers = #tpu.dot_dimension_numbers<[1], [0], [0], [1], [0, 0, 1, 1], [], []>} : vector<16x16xbf16>, vector<16x32xbf16>, vector<16x32xf32> -> vector<16x32xf32>
    %c0_55 = arith.constant 0 : index
    %c96 = arith.constant 96 : index
    %144 = vector.load %arg32[%c0_55, %c96] : memref<16x128xf32, #tpu.memory_space<vmem>>, vector<16x32xf32>
    tpu.vector_store %arg32[%c0_55, %c96], %143 {strides = array<i32>} : memref<16x128xf32, #tpu.memory_space<vmem>>, vector<16x32xf32>,
    %c0_56 = arith.constant 0 : index
    %c0_57 = arith.constant 0 : index
    %145 = vector.load %arg32[%c0_56, %c0_57] : memref<16x128xf32, #tpu.memory_space<vmem>>, vector<16x128xf32>
    %146 = arith.truncf %145 : vector<16x128xf32> to vector<16x128xbf16>
    %c0_58 = arith.constant 0 : index
    %c0_59 = arith.constant 0 : index
    %147 = vector.load %arg13[%c0_58, %c0_59] : memref<128x128xbf16, #tpu.memory_space<vmem>>, vector<128x128xbf16>
    %cst_60 = arith.constant dense<0.000000e+00> : vector<16x128xf32>
    %148 = tpu.matmul %146, %147, %cst_60 {dimension_numbers = #tpu.dot_dimension_numbers<[1], [0], [0], [1], [0, 0, 1, 1], [], []>} : vector<16x128xbf16>, vector<128x128xbf16>, vector<16x128xf32> -> vector<16x128xf32>
    %c0_61 = arith.constant 0 : index
    %c0_62 = arith.constant 0 : index
    %149 = vector.load %arg14[%c0_61, %c0_62] : memref<1x128xf32, #tpu.memory_space<vmem>>, vector<1x128xf32>
    %150 = vector.shape_cast %149 : vector<1x128xf32> to vector<128xf32>
    %151 = vector.shape_cast %150 : vector<128xf32> to vector<1x128xf32>
    %152 = vector.broadcast %151 : vector<1x128xf32> to vector<16x128xf32>
    %153 = arith.addf %148, %152 : vector<16x128xf32>
    %154 = arith.addf %1, %153 : vector<16x128xf32>
    %cst_63 = arith.constant dense<0.000000e+00> : vector<16xf32>
    %155 = vector.multi_reduction <add>, %154, %cst_63 [1] : vector<16x128xf32> to vector<16xf32>
    %156 = vector.shape_cast %155 : vector<16xf32> to vector<16x1xf32>
    %cst_64 = arith.constant 1.280000e+02 : f32
    %157 = vector.broadcast %cst_64 : f32 to vector<16x1xf32>
    %158 = arith.divf %156, %157 : vector<16x1xf32>
    %159 = vector.broadcast %158 : vector<16x1xf32> to vector<16x128xf32>
    %160 = arith.subf %154, %159 : vector<16x128xf32>
    %161 = vector.broadcast %158 : vector<16x1xf32> to vector<16x128xf32>
    %162 = arith.subf %154, %161 : vector<16x128xf32>
    %163 = arith.mulf %160, %162 : vector<16x128xf32>
    %cst_65 = arith.constant dense<0.000000e+00> : vector<16xf32>
    %164 = vector.multi_reduction <add>, %163, %cst_65 [1] : vector<16x128xf32> to vector<16xf32>
    %165 = vector.shape_cast %164 : vector<16xf32> to vector<16x1xf32>
    %cst_66 = arith.constant 1.280000e+02 : f32
    %166 = vector.broadcast %cst_66 : f32 to vector<16x1xf32>
    %167 = arith.divf %165, %166 : vector<16x1xf32>
    %168 = vector.broadcast %158 : vector<16x1xf32> to vector<16x128xf32>
    %169 = arith.subf %154, %168 : vector<16x128xf32>
    %cst_67 = arith.constant 9.99999974E-6 : f32
    %170 = vector.broadcast %cst_67 : f32 to vector<16x1xf32>
    %171 = arith.addf %167, %170 : vector<16x1xf32>
    %172 = math.rsqrt %171 : vector<16x1xf32>
    %173 = vector.broadcast %172 : vector<16x1xf32> to vector<16x128xf32>
    %174 = arith.mulf %169, %173 : vector<16x128xf32>
    %c0_68 = arith.constant 0 : index
    %c0_69 = arith.constant 0 : index
    %175 = vector.load %arg15[%c0_68, %c0_69] : memref<1x128xf32, #tpu.memory_space<vmem>>, vector<1x128xf32>
    %176 = vector.shape_cast %175 : vector<1x128xf32> to vector<128xf32>
    %177 = vector.shape_cast %176 : vector<128xf32> to vector<1x128xf32>
    %178 = vector.broadcast %177 : vector<1x128xf32> to vector<16x128xf32>
    %179 = arith.mulf %174, %178 : vector<16x128xf32>
    %c0_70 = arith.constant 0 : index
    %c0_71 = arith.constant 0 : index
    %180 = vector.load %arg16[%c0_70, %c0_71] : memref<1x128xf32, #tpu.memory_space<vmem>>, vector<1x128xf32>
    %181 = vector.shape_cast %180 : vector<1x128xf32> to vector<128xf32>
    %182 = vector.shape_cast %181 : vector<128xf32> to vector<1x128xf32>
    %183 = vector.broadcast %182 : vector<1x128xf32> to vector<16x128xf32>
    %184 = arith.addf %179, %183 : vector<16x128xf32>
    %cst_72 = arith.constant dense<0.000000e+00> : vector<32xf32>
    %185 = vector.multi_reduction <add>, %3, %cst_72 [1] : vector<32x128xf32> to vector<32xf32>
    %186 = vector.shape_cast %185 : vector<32xf32> to vector<32x1xf32>
    %cst_73 = arith.constant 1.280000e+02 : f32
    %187 = vector.broadcast %cst_73 : f32 to vector<32x1xf32>
    %188 = arith.divf %186, %187 : vector<32x1xf32>
    %189 = vector.broadcast %188 : vector<32x1xf32> to vector<32x128xf32>
    %190 = arith.subf %3, %189 : vector<32x128xf32>
    %191 = vector.broadcast %188 : vector<32x1xf32> to vector<32x128xf32>
    %192 = arith.subf %3, %191 : vector<32x128xf32>
    %193 = arith.mulf %190, %192 : vector<32x128xf32>
    %cst_74 = arith.constant dense<0.000000e+00> : vector<32xf32>
    %194 = vector.multi_reduction <add>, %193, %cst_74 [1] : vector<32x128xf32> to vector<32xf32>
    %195 = vector.shape_cast %194 : vector<32xf32> to vector<32x1xf32>
    %cst_75 = arith.constant 1.280000e+02 : f32
    %196 = vector.broadcast %cst_75 : f32 to vector<32x1xf32>
    %197 = arith.divf %195, %196 : vector<32x1xf32>
    %198 = vector.broadcast %188 : vector<32x1xf32> to vector<32x128xf32>
    %199 = arith.subf %3, %198 : vector<32x128xf32>
    %cst_76 = arith.constant 9.99999974E-6 : f32
    %200 = vector.broadcast %cst_76 : f32 to vector<32x1xf32>
    %201 = arith.addf %197, %200 : vector<32x1xf32>
    %202 = math.rsqrt %201 : vector<32x1xf32>
    %203 = vector.broadcast %202 : vector<32x1xf32> to vector<32x128xf32>
    %204 = arith.mulf %199, %203 : vector<32x128xf32>
    %c0_77 = arith.constant 0 : index
    %c0_78 = arith.constant 0 : index
    %205 = vector.load %arg15[%c0_77, %c0_78] : memref<1x128xf32, #tpu.memory_space<vmem>>, vector<1x128xf32>
    %206 = vector.shape_cast %205 : vector<1x128xf32> to vector<128xf32>
    %207 = vector.shape_cast %206 : vector<128xf32> to vector<1x128xf32>
    %208 = vector.broadcast %207 : vector<1x128xf32> to vector<32x128xf32>
    %209 = arith.mulf %204, %208 : vector<32x128xf32>
    %c0_79 = arith.constant 0 : index
    %c0_80 = arith.constant 0 : index
    %210 = vector.load %arg16[%c0_79, %c0_80] : memref<1x128xf32, #tpu.memory_space<vmem>>, vector<1x128xf32>
    %211 = vector.shape_cast %210 : vector<1x128xf32> to vector<128xf32>
    %212 = vector.shape_cast %211 : vector<128xf32> to vector<1x128xf32>
    %213 = vector.broadcast %212 : vector<1x128xf32> to vector<32x128xf32>
    %214 = arith.addf %209, %213 : vector<32x128xf32>
    %215 = arith.addf %184, %5 : vector<16x128xf32>
    %216 = arith.addf %214, %7 : vector<32x128xf32>
    %217 = arith.truncf %215 : vector<16x128xf32> to vector<16x128xbf16>
    %c0_81 = arith.constant 0 : index
    %c0_82 = arith.constant 0 : index
    %218 = vector.load %arg17[%c0_81, %c0_82] : memref<128x128xbf16, #tpu.memory_space<vmem>>, vector<128x128xbf16>
    %cst_83 = arith.constant dense<0.000000e+00> : vector<16x128xf32>
    %219 = tpu.matmul %217, %218, %cst_83 {dimension_numbers = #tpu.dot_dimension_numbers<[1], [0], [0], [1], [0, 0, 1, 1], [], []>} : vector<16x128xbf16>, vector<128x128xbf16>, vector<16x128xf32> -> vector<16x128xf32>
    %c0_84 = arith.constant 0 : index
    %c0_85 = arith.constant 0 : index
    %220 = vector.load %arg18[%c0_84, %c0_85] : memref<1x128xf32, #tpu.memory_space<vmem>>, vector<1x128xf32>
    %221 = vector.shape_cast %220 : vector<1x128xf32> to vector<128xf32>
    %222 = vector.shape_cast %221 : vector<128xf32> to vector<1x128xf32>
    %223 = vector.broadcast %222 : vector<1x128xf32> to vector<16x128xf32>
    %224 = arith.addf %219, %223 : vector<16x128xf32>
    %225 = arith.truncf %216 : vector<32x128xf32> to vector<32x128xbf16>
    %c0_86 = arith.constant 0 : index
    %c0_87 = arith.constant 0 : index
    %226 = vector.load %arg19[%c0_86, %c0_87] : memref<128x128xbf16, #tpu.memory_space<vmem>>, vector<128x128xbf16>
    %cst_88 = arith.constant dense<0.000000e+00> : vector<32x128xf32>
    %227 = tpu.matmul %225, %226, %cst_88 {dimension_numbers = #tpu.dot_dimension_numbers<[1], [0], [0], [1], [0, 0, 1, 1], [], []>} : vector<32x128xbf16>, vector<128x128xbf16>, vector<32x128xf32> -> vector<32x128xf32>
    %c0_89 = arith.constant 0 : index
    %c0_90 = arith.constant 0 : index
    %228 = vector.load %arg20[%c0_89, %c0_90] : memref<1x128xf32, #tpu.memory_space<vmem>>, vector<1x128xf32>
    %229 = vector.shape_cast %228 : vector<1x128xf32> to vector<128xf32>
    %230 = vector.shape_cast %229 : vector<128xf32> to vector<1x128xf32>
    %231 = vector.broadcast %230 : vector<1x128xf32> to vector<32x128xf32>
    %232 = arith.addf %227, %231 : vector<32x128xf32>
    %233 = arith.truncf %214 : vector<32x128xf32> to vector<32x128xbf16>
    %c0_91 = arith.constant 0 : index
    %c0_92 = arith.constant 0 : index
    %234 = vector.load %arg21[%c0_91, %c0_92] : memref<128x128xbf16, #tpu.memory_space<vmem>>, vector<128x128xbf16>
    %cst_93 = arith.constant dense<0.000000e+00> : vector<32x128xf32>
    %235 = tpu.matmul %233, %234, %cst_93 {dimension_numbers = #tpu.dot_dimension_numbers<[1], [0], [0], [1], [0, 0, 1, 1], [], []>} : vector<32x128xbf16>, vector<128x128xbf16>, vector<32x128xf32> -> vector<32x128xf32>
    %c0_94 = arith.constant 0 : index
    %c0_95 = arith.constant 0 : index
    %236 = vector.load %arg22[%c0_94, %c0_95] : memref<1x128xf32, #tpu.memory_space<vmem>>, vector<1x128xf32>
    %237 = vector.shape_cast %236 : vector<1x128xf32> to vector<128xf32>
    %238 = vector.shape_cast %237 : vector<128xf32> to vector<1x128xf32>
    %239 = vector.broadcast %238 : vector<1x128xf32> to vector<32x128xf32>
    %240 = arith.addf %235, %239 : vector<32x128xf32>
    %cst_96 = arith.constant 0.176776692 : f32
    %241 = vector.broadcast %cst_96 : f32 to vector<16x128xf32>
    %242 = arith.mulf %224, %241 : vector<16x128xf32>
    %243 = vector.extract_strided_slice %242 {offsets = [0, 0], sizes = [16, 32], strides = [1, 1]} : vector<16x128xf32> to vector<16x32xf32>
    %244 = arith.truncf %243 : vector<16x32xf32> to vector<16x32xbf16>
    %245 = vector.extract_strided_slice %232 {offsets = [0, 0], sizes = [32, 32], strides = [1, 1]} : vector<32x128xf32> to vector<32x32xf32>
    %246 = arith.truncf %245 : vector<32x32xf32> to vector<32x32xbf16>
    %247 = vector.extract_strided_slice %240 {offsets = [0, 0], sizes = [32, 32], strides = [1, 1]} : vector<32x128xf32> to vector<32x32xf32>
    %248 = arith.truncf %247 : vector<32x32xf32> to vector<32x32xbf16>
    %cst_97 = arith.constant dense<0.000000e+00> : vector<16x32xf32>
    %249 = tpu.matmul %244, %246, %cst_97 {dimension_numbers = #tpu.dot_dimension_numbers<[1], [1], [0], [0], [0, 0, 1, 0], [], []>} : vector<16x32xbf16>, vector<32x32xbf16>, vector<16x32xf32> -> vector<16x32xf32>
    %cst_98 = arith.constant dense<0xFF800000> : vector<16xf32>
    %250 = vector.multi_reduction <maximumf>, %249, %cst_98 [1] : vector<16x32xf32> to vector<16xf32>
    %251 = vector.shape_cast %250 : vector<16xf32> to vector<16x1xf32>
    %252 = vector.broadcast %251 : vector<16x1xf32> to vector<16x32xf32>
    %253 = arith.subf %249, %252 : vector<16x32xf32>
    %254 = math.exp %253 : vector<16x32xf32>
    %cst_99 = arith.constant dense<0.000000e+00> : vector<16xf32>
    %255 = vector.multi_reduction <add>, %254, %cst_99 [1] : vector<16x32xf32> to vector<16xf32>
    %256 = vector.shape_cast %255 : vector<16xf32> to vector<16x1xf32>
    %257 = tpu.reciprocal %256 {approx = true} : vector<16x1xf32> -> vector<16x1xf32>
    %258 = vector.broadcast %257 : vector<16x1xf32> to vector<16x32xf32>
    %259 = arith.mulf %254, %258 : vector<16x32xf32>
    %260 = arith.truncf %259 : vector<16x32xf32> to vector<16x32xbf16>
    %cst_100 = arith.constant dense<0.000000e+00> : vector<16x32xf32>
    %261 = tpu.matmul %260, %248, %cst_100 {dimension_numbers = #tpu.dot_dimension_numbers<[1], [0], [0], [1], [0, 0, 1, 1], [], []>} : vector<16x32xbf16>, vector<32x32xbf16>, vector<16x32xf32> -> vector<16x32xf32>
    %c0_101 = arith.constant 0 : index
    %c0_102 = arith.constant 0 : index
    %262 = vector.load %arg32[%c0_101, %c0_102] : memref<16x128xf32, #tpu.memory_space<vmem>>, vector<16x32xf32>
    tpu.vector_store %arg32[%c0_101, %c0_102], %261 {strides = array<i32>} : memref<16x128xf32, #tpu.memory_space<vmem>>, vector<16x32xf32>,
    %263 = vector.extract_strided_slice %242 {offsets = [0, 32], sizes = [16, 32], strides = [1, 1]} : vector<16x128xf32> to vector<16x32xf32>
    %264 = arith.truncf %263 : vector<16x32xf32> to vector<16x32xbf16>
    %265 = vector.extract_strided_slice %232 {offsets = [0, 32], sizes = [32, 32], strides = [1, 1]} : vector<32x128xf32> to vector<32x32xf32>
    %266 = arith.truncf %265 : vector<32x32xf32> to vector<32x32xbf16>
    %267 = vector.extract_strided_slice %240 {offsets = [0, 32], sizes = [32, 32], strides = [1, 1]} : vector<32x128xf32> to vector<32x32xf32>
    %268 = arith.truncf %267 : vector<32x32xf32> to vector<32x32xbf16>
    %cst_103 = arith.constant dense<0.000000e+00> : vector<16x32xf32>
    %269 = tpu.matmul %264, %266, %cst_103 {dimension_numbers = #tpu.dot_dimension_numbers<[1], [1], [0], [0], [0, 0, 1, 0], [], []>} : vector<16x32xbf16>, vector<32x32xbf16>, vector<16x32xf32> -> vector<16x32xf32>
    %cst_104 = arith.constant dense<0xFF800000> : vector<16xf32>
    %270 = vector.multi_reduction <maximumf>, %269, %cst_104 [1] : vector<16x32xf32> to vector<16xf32>
    %271 = vector.shape_cast %270 : vector<16xf32> to vector<16x1xf32>
    %272 = vector.broadcast %271 : vector<16x1xf32> to vector<16x32xf32>
    %273 = arith.subf %269, %272 : vector<16x32xf32>
    %274 = math.exp %273 : vector<16x32xf32>
    %cst_105 = arith.constant dense<0.000000e+00> : vector<16xf32>
    %275 = vector.multi_reduction <add>, %274, %cst_105 [1] : vector<16x32xf32> to vector<16xf32>
    %276 = vector.shape_cast %275 : vector<16xf32> to vector<16x1xf32>
    %277 = tpu.reciprocal %276 {approx = true} : vector<16x1xf32> -> vector<16x1xf32>
    %278 = vector.broadcast %277 : vector<16x1xf32> to vector<16x32xf32>
    %279 = arith.mulf %274, %278 : vector<16x32xf32>
    %280 = arith.truncf %279 : vector<16x32xf32> to vector<16x32xbf16>
    %cst_106 = arith.constant dense<0.000000e+00> : vector<16x32xf32>
    %281 = tpu.matmul %280, %268, %cst_106 {dimension_numbers = #tpu.dot_dimension_numbers<[1], [0], [0], [1], [0, 0, 1, 1], [], []>} : vector<16x32xbf16>, vector<32x32xbf16>, vector<16x32xf32> -> vector<16x32xf32>
    %c0_107 = arith.constant 0 : index
    %c32_108 = arith.constant 32 : index
    %282 = vector.load %arg32[%c0_107, %c32_108] : memref<16x128xf32, #tpu.memory_space<vmem>>, vector<16x32xf32>
    tpu.vector_store %arg32[%c0_107, %c32_108], %281 {strides = array<i32>} : memref<16x128xf32, #tpu.memory_space<vmem>>, vector<16x32xf32>,
    %283 = vector.extract_strided_slice %242 {offsets = [0, 64], sizes = [16, 32], strides = [1, 1]} : vector<16x128xf32> to vector<16x32xf32>
    %284 = arith.truncf %283 : vector<16x32xf32> to vector<16x32xbf16>
    %285 = vector.extract_strided_slice %232 {offsets = [0, 64], sizes = [32, 32], strides = [1, 1]} : vector<32x128xf32> to vector<32x32xf32>
    %286 = arith.truncf %285 : vector<32x32xf32> to vector<32x32xbf16>
    %287 = vector.extract_strided_slice %240 {offsets = [0, 64], sizes = [32, 32], strides = [1, 1]} : vector<32x128xf32> to vector<32x32xf32>
    %288 = arith.truncf %287 : vector<32x32xf32> to vector<32x32xbf16>
    %cst_109 = arith.constant dense<0.000000e+00> : vector<16x32xf32>
    %289 = tpu.matmul %284, %286, %cst_109 {dimension_numbers = #tpu.dot_dimension_numbers<[1], [1], [0], [0], [0, 0, 1, 0], [], []>} : vector<16x32xbf16>, vector<32x32xbf16>, vector<16x32xf32> -> vector<16x32xf32>
    %cst_110 = arith.constant dense<0xFF800000> : vector<16xf32>
    %290 = vector.multi_reduction <maximumf>, %289, %cst_110 [1] : vector<16x32xf32> to vector<16xf32>
    %291 = vector.shape_cast %290 : vector<16xf32> to vector<16x1xf32>
    %292 = vector.broadcast %291 : vector<16x1xf32> to vector<16x32xf32>
    %293 = arith.subf %289, %292 : vector<16x32xf32>
    %294 = math.exp %293 : vector<16x32xf32>
    %cst_111 = arith.constant dense<0.000000e+00> : vector<16xf32>
    %295 = vector.multi_reduction <add>, %294, %cst_111 [1] : vector<16x32xf32> to vector<16xf32>
    %296 = vector.shape_cast %295 : vector<16xf32> to vector<16x1xf32>
    %297 = tpu.reciprocal %296 {approx = true} : vector<16x1xf32> -> vector<16x1xf32>
    %298 = vector.broadcast %297 : vector<16x1xf32> to vector<16x32xf32>
    %299 = arith.mulf %294, %298 : vector<16x32xf32>
    %300 = arith.truncf %299 : vector<16x32xf32> to vector<16x32xbf16>
    %cst_112 = arith.constant dense<0.000000e+00> : vector<16x32xf32>
    %301 = tpu.matmul %300, %288, %cst_112 {dimension_numbers = #tpu.dot_dimension_numbers<[1], [0], [0], [1], [0, 0, 1, 1], [], []>} : vector<16x32xbf16>, vector<32x32xbf16>, vector<16x32xf32> -> vector<16x32xf32>
    %c0_113 = arith.constant 0 : index
    %c64_114 = arith.constant 64 : index
    %302 = vector.load %arg32[%c0_113, %c64_114] : memref<16x128xf32, #tpu.memory_space<vmem>>, vector<16x32xf32>
    tpu.vector_store %arg32[%c0_113, %c64_114], %301 {strides = array<i32>} : memref<16x128xf32, #tpu.memory_space<vmem>>, vector<16x32xf32>,
    %303 = vector.extract_strided_slice %242 {offsets = [0, 96], sizes = [16, 32], strides = [1, 1]} : vector<16x128xf32> to vector<16x32xf32>
    %304 = arith.truncf %303 : vector<16x32xf32> to vector<16x32xbf16>
    %305 = vector.extract_strided_slice %232 {offsets = [0, 96], sizes = [32, 32], strides = [1, 1]} : vector<32x128xf32> to vector<32x32xf32>
    %306 = arith.truncf %305 : vector<32x32xf32> to vector<32x32xbf16>
    %307 = vector.extract_strided_slice %240 {offsets = [0, 96], sizes = [32, 32], strides = [1, 1]} : vector<32x128xf32> to vector<32x32xf32>
    %308 = arith.truncf %307 : vector<32x32xf32> to vector<32x32xbf16>
    %cst_115 = arith.constant dense<0.000000e+00> : vector<16x32xf32>
    %309 = tpu.matmul %304, %306, %cst_115 {dimension_numbers = #tpu.dot_dimension_numbers<[1], [1], [0], [0], [0, 0, 1, 0], [], []>} : vector<16x32xbf16>, vector<32x32xbf16>, vector<16x32xf32> -> vector<16x32xf32>
    %cst_116 = arith.constant dense<0xFF800000> : vector<16xf32>
    %310 = vector.multi_reduction <maximumf>, %309, %cst_116 [1] : vector<16x32xf32> to vector<16xf32>
    %311 = vector.shape_cast %310 : vector<16xf32> to vector<16x1xf32>
    %312 = vector.broadcast %311 : vector<16x1xf32> to vector<16x32xf32>
    %313 = arith.subf %309, %312 : vector<16x32xf32>
    %314 = math.exp %313 : vector<16x32xf32>
    %cst_117 = arith.constant dense<0.000000e+00> : vector<16xf32>
    %315 = vector.multi_reduction <add>, %314, %cst_117 [1] : vector<16x32xf32> to vector<16xf32>
    %316 = vector.shape_cast %315 : vector<16xf32> to vector<16x1xf32>
    %317 = tpu.reciprocal %316 {approx = true} : vector<16x1xf32> -> vector<16x1xf32>
    %318 = vector.broadcast %317 : vector<16x1xf32> to vector<16x32xf32>
    %319 = arith.mulf %314, %318 : vector<16x32xf32>
    %320 = arith.truncf %319 : vector<16x32xf32> to vector<16x32xbf16>
    %cst_118 = arith.constant dense<0.000000e+00> : vector<16x32xf32>
    %321 = tpu.matmul %320, %308, %cst_118 {dimension_numbers = #tpu.dot_dimension_numbers<[1], [0], [0], [1], [0, 0, 1, 1], [], []>} : vector<16x32xbf16>, vector<32x32xbf16>, vector<16x32xf32> -> vector<16x32xf32>
    %c0_119 = arith.constant 0 : index
    %c96_120 = arith.constant 96 : index
    %322 = vector.load %arg32[%c0_119, %c96_120] : memref<16x128xf32, #tpu.memory_space<vmem>>, vector<16x32xf32>
    tpu.vector_store %arg32[%c0_119, %c96_120], %321 {strides = array<i32>} : memref<16x128xf32, #tpu.memory_space<vmem>>, vector<16x32xf32>,
    %c0_121 = arith.constant 0 : index
    %c0_122 = arith.constant 0 : index
    %323 = vector.load %arg32[%c0_121, %c0_122] : memref<16x128xf32, #tpu.memory_space<vmem>>, vector<16x128xf32>
    %324 = arith.truncf %323 : vector<16x128xf32> to vector<16x128xbf16>
    %c0_123 = arith.constant 0 : index
    %c0_124 = arith.constant 0 : index
    %325 = vector.load %arg23[%c0_123, %c0_124] : memref<128x128xbf16, #tpu.memory_space<vmem>>, vector<128x128xbf16>
    %cst_125 = arith.constant dense<0.000000e+00> : vector<16x128xf32>
    %326 = tpu.matmul %324, %325, %cst_125 {dimension_numbers = #tpu.dot_dimension_numbers<[1], [0], [0], [1], [0, 0, 1, 1], [], []>} : vector<16x128xbf16>, vector<128x128xbf16>, vector<16x128xf32> -> vector<16x128xf32>
    %c0_126 = arith.constant 0 : index
    %c0_127 = arith.constant 0 : index
    %327 = vector.load %arg24[%c0_126, %c0_127] : memref<1x128xf32, #tpu.memory_space<vmem>>, vector<1x128xf32>
    %328 = vector.shape_cast %327 : vector<1x128xf32> to vector<128xf32>
    %329 = vector.shape_cast %328 : vector<128xf32> to vector<1x128xf32>
    %330 = vector.broadcast %329 : vector<1x128xf32> to vector<16x128xf32>
    %331 = arith.addf %326, %330 : vector<16x128xf32>
    %332 = arith.addf %154, %331 : vector<16x128xf32>
    %cst_128 = arith.constant dense<0.000000e+00> : vector<16xf32>
    %333 = vector.multi_reduction <add>, %332, %cst_128 [1] : vector<16x128xf32> to vector<16xf32>
    %334 = vector.shape_cast %333 : vector<16xf32> to vector<16x1xf32>
    %cst_129 = arith.constant 1.280000e+02 : f32
    %335 = vector.broadcast %cst_129 : f32 to vector<16x1xf32>
    %336 = arith.divf %334, %335 : vector<16x1xf32>
    %337 = vector.broadcast %336 : vector<16x1xf32> to vector<16x128xf32>
    %338 = arith.subf %332, %337 : vector<16x128xf32>
    %339 = vector.broadcast %336 : vector<16x1xf32> to vector<16x128xf32>
    %340 = arith.subf %332, %339 : vector<16x128xf32>
    %341 = arith.mulf %338, %340 : vector<16x128xf32>
    %cst_130 = arith.constant dense<0.000000e+00> : vector<16xf32>
    %342 = vector.multi_reduction <add>, %341, %cst_130 [1] : vector<16x128xf32> to vector<16xf32>
    %343 = vector.shape_cast %342 : vector<16xf32> to vector<16x1xf32>
    %cst_131 = arith.constant 1.280000e+02 : f32
    %344 = vector.broadcast %cst_131 : f32 to vector<16x1xf32>
    %345 = arith.divf %343, %344 : vector<16x1xf32>
    %346 = vector.broadcast %336 : vector<16x1xf32> to vector<16x128xf32>
    %347 = arith.subf %332, %346 : vector<16x128xf32>
    %cst_132 = arith.constant 9.99999974E-6 : f32
    %348 = vector.broadcast %cst_132 : f32 to vector<16x1xf32>
    %349 = arith.addf %345, %348 : vector<16x1xf32>
    %350 = math.rsqrt %349 : vector<16x1xf32>
    %351 = vector.broadcast %350 : vector<16x1xf32> to vector<16x128xf32>
    %352 = arith.mulf %347, %351 : vector<16x128xf32>
    %c0_133 = arith.constant 0 : index
    %c0_134 = arith.constant 0 : index
    %353 = vector.load %arg25[%c0_133, %c0_134] : memref<1x128xf32, #tpu.memory_space<vmem>>, vector<1x128xf32>
    %354 = vector.shape_cast %353 : vector<1x128xf32> to vector<128xf32>
    %355 = vector.shape_cast %354 : vector<128xf32> to vector<1x128xf32>
    %356 = vector.broadcast %355 : vector<1x128xf32> to vector<16x128xf32>
    %357 = arith.mulf %352, %356 : vector<16x128xf32>
    %c0_135 = arith.constant 0 : index
    %c0_136 = arith.constant 0 : index
    %358 = vector.load %arg26[%c0_135, %c0_136] : memref<1x128xf32, #tpu.memory_space<vmem>>, vector<1x128xf32>
    %359 = vector.shape_cast %358 : vector<1x128xf32> to vector<128xf32>
    %360 = vector.shape_cast %359 : vector<128xf32> to vector<1x128xf32>
    %361 = vector.broadcast %360 : vector<1x128xf32> to vector<16x128xf32>
    %362 = arith.addf %357, %361 : vector<16x128xf32>
    %363 = arith.truncf %362 : vector<16x128xf32> to vector<16x128xbf16>
    %c0_137 = arith.constant 0 : index
    %c0_138 = arith.constant 0 : index
    %364 = vector.load %arg27[%c0_137, %c0_138] : memref<128x256xbf16, #tpu.memory_space<vmem>>, vector<128x256xbf16>
    %cst_139 = arith.constant dense<0.000000e+00> : vector<16x256xf32>
    %365 = tpu.matmul %363, %364, %cst_139 {dimension_numbers = #tpu.dot_dimension_numbers<[1], [0], [0], [1], [0, 0, 1, 1], [], []>} : vector<16x128xbf16>, vector<128x256xbf16>, vector<16x256xf32> -> vector<16x256xf32>
    %c0_140 = arith.constant 0 : index
    %c0_141 = arith.constant 0 : index
    %366 = vector.load %arg28[%c0_140, %c0_141] : memref<1x256xf32, #tpu.memory_space<vmem>>, vector<1x256xf32>
    %367 = vector.shape_cast %366 : vector<1x256xf32> to vector<256xf32>
    %368 = vector.shape_cast %367 : vector<256xf32> to vector<1x256xf32>
    %369 = vector.broadcast %368 : vector<1x256xf32> to vector<16x256xf32>
    %370 = arith.addf %365, %369 : vector<16x256xf32>
    %cst_142 = arith.constant 5.000000e-01 : f32
    %371 = vector.broadcast %cst_142 : f32 to vector<16x256xf32>
    %372 = arith.mulf %371, %370 : vector<16x256xf32>
    %cst_143 = arith.constant 0.707106769 : f32
    %373 = vector.broadcast %cst_143 : f32 to vector<16x256xf32>
    %374 = arith.mulf %370, %373 : vector<16x256xf32>
    %375 = math.erf %374 : vector<16x256xf32>
    %cst_144 = arith.constant 1.000000e+00 : f32
    %376 = vector.broadcast %cst_144 : f32 to vector<16x256xf32>
    %377 = arith.addf %376, %375 : vector<16x256xf32>
    %378 = arith.mulf %372, %377 : vector<16x256xf32>
    %379 = arith.truncf %378 : vector<16x256xf32> to vector<16x256xbf16>
    %c0_145 = arith.constant 0 : index
    %c0_146 = arith.constant 0 : index
    %380 = vector.load %arg29[%c0_145, %c0_146] : memref<256x128xbf16, #tpu.memory_space<vmem>>, vector<256x128xbf16>
    %cst_147 = arith.constant dense<0.000000e+00> : vector<16x128xf32>
    %381 = tpu.matmul %379, %380, %cst_147 {dimension_numbers = #tpu.dot_dimension_numbers<[1], [0], [0], [1], [0, 0, 1, 1], [], []>} : vector<16x256xbf16>, vector<256x128xbf16>, vector<16x128xf32> -> vector<16x128xf32>
    %c0_148 = arith.constant 0 : index
    %c0_149 = arith.constant 0 : index
    %382 = vector.load %arg30[%c0_148, %c0_149] : memref<1x128xf32, #tpu.memory_space<vmem>>, vector<1x128xf32>
    %383 = vector.shape_cast %382 : vector<1x128xf32> to vector<128xf32>
    %384 = vector.shape_cast %383 : vector<128xf32> to vector<1x128xf32>
    %385 = vector.broadcast %384 : vector<1x128xf32> to vector<16x128xf32>
    %386 = arith.addf %381, %385 : vector<16x128xf32>
    %387 = arith.addf %332, %386 : vector<16x128xf32>
    %c0_150 = arith.constant 0 : index
    %c0_151 = arith.constant 0 : index
    %c0_152 = arith.constant 0 : index
    %388 = vector.load %arg31[%c0_150, %c0_151, %c0_152] : memref<1x16x128xf32, #tpu.memory_space<vmem>>, vector<1x16x128xf32>
    %389 = vector.shape_cast %388 : vector<1x16x128xf32> to vector<16x128xf32>
    %390 = vector.shape_cast %387 : vector<16x128xf32> to vector<1x16x128xf32>
    tpu.vector_store %arg31[%c0_150, %c0_151, %c0_152], %390 {strides = array<i32>} : memref<1x16x128xf32, #tpu.memory_space<vmem>>, vector<1x16x128xf32>,
    return
  }
  func.func @transform_0(%arg0: i32) -> (i32, i32, i32) {
    %c0_i32 = arith.constant 0 : i32
    %c0_i32_0 = arith.constant 0 : i32
    %c0_i32_1 = arith.constant 0 : i32
    return %arg0, %c0_i32, %c0_i32_0 : i32, i32, i32
  }
  func.func @transform_1(%arg0: i32) -> (i32, i32, i32) {
    %c0_i32 = arith.constant 0 : i32
    %c0_i32_0 = arith.constant 0 : i32
    %c0_i32_1 = arith.constant 0 : i32
    return %arg0, %c0_i32, %c0_i32_0 : i32, i32, i32
  }
  func.func @transform_2(%arg0: i32) -> (i32, i32, i32) {
    %c0_i32 = arith.constant 0 : i32
    %c0_i32_0 = arith.constant 0 : i32
    %c0_i32_1 = arith.constant 0 : i32
    return %arg0, %c0_i32, %c0_i32_0 : i32, i32, i32
  }
  func.func @transform_3(%arg0: i32) -> (i32, i32, i32) {
    %c0_i32 = arith.constant 0 : i32
    %c0_i32_0 = arith.constant 0 : i32
    %c0_i32_1 = arith.constant 0 : i32
    return %arg0, %c0_i32, %c0_i32_0 : i32, i32, i32
  }
  func.func @transform_4(%arg0: i32) -> (i32, i32) {
    %c0_i32 = arith.constant 0 : i32
    %c0_i32_0 = arith.constant 0 : i32
    %c0_i32_1 = arith.constant 0 : i32
    return %c0_i32, %c0_i32_0 : i32, i32
  }
  func.func @transform_5(%arg0: i32) -> (i32, i32) {
    %c0_i32 = arith.constant 0 : i32
    %c0_i32_0 = arith.constant 0 : i32
    %c0_i32_1 = arith.constant 0 : i32
    return %c0_i32, %c0_i32_0 : i32, i32
  }
  func.func @transform_6(%arg0: i32) -> (i32, i32) {
    %c0_i32 = arith.constant 0 : i32
    %c0_i32_0 = arith.constant 0 : i32
    %c0_i32_1 = arith.constant 0 : i32
    return %c0_i32, %c0_i32_0 : i32, i32
  }
  func.func @transform_7(%arg0: i32) -> (i32, i32) {
    %c0_i32 = arith.constant 0 : i32
    %c0_i32_0 = arith.constant 0 : i32
    %c0_i32_1 = arith.constant 0 : i32
    return %c0_i32, %c0_i32_0 : i32, i32
  }
  func.func @transform_8(%arg0: i32) -> (i32, i32) {
    %c0_i32 = arith.constant 0 : i32
    %c0_i32_0 = arith.constant 0 : i32
    %c0_i32_1 = arith.constant 0 : i32
    return %c0_i32, %c0_i32_0 : i32, i32
  }
  func.func @transform_9(%arg0: i32) -> (i32, i32) {
    %c0_i32 = arith.constant 0 : i32
    %c0_i32_0 = arith.constant 0 : i32
    %c0_i32_1 = arith.constant 0 : i32
    return %c0_i32, %c0_i32_0 : i32, i32
  }
  func.func @transform_10(%arg0: i32) -> (i32, i32) {
    %c0_i32 = arith.constant 0 : i32
    %c0_i32_0 = arith.constant 0 : i32
    %c0_i32_1 = arith.constant 0 : i32
    return %c0_i32, %c0_i32_0 : i32, i32
  }
  func.func @transform_11(%arg0: i32) -> (i32, i32) {
    %c0_i32 = arith.constant 0 : i32
    %c0_i32_0 = arith.constant 0 : i32
    %c0_i32_1 = arith.constant 0 : i32
    return %c0_i32, %c0_i32_0 : i32, i32
  }
  func.func @transform_12(%arg0: i32) -> (i32, i32) {
    %c0_i32 = arith.constant 0 : i32
    %c0_i32_0 = arith.constant 0 : i32
    %c0_i32_1 = arith.constant 0 : i32
    return %c0_i32, %c0_i32_0 : i32, i32
  }
  func.func @transform_13(%arg0: i32) -> (i32, i32) {
    %c0_i32 = arith.constant 0 : i32
    %c0_i32_0 = arith.constant 0 : i32
    %c0_i32_1 = arith.constant 0 : i32
    return %c0_i32, %c0_i32_0 : i32, i32
  }
  func.func @transform_14(%arg0: i32) -> (i32, i32) {
    %c0_i32 = arith.constant 0 : i32
    %c0_i32_0 = arith.constant 0 : i32
    %c0_i32_1 = arith.constant 0 : i32
    return %c0_i32, %c0_i32_0 : i32, i32
  }
  func.func @transform_15(%arg0: i32) -> (i32, i32) {
    %c0_i32 = arith.constant 0 : i32
    %c0_i32_0 = arith.constant 0 : i32
    %c0_i32_1 = arith.constant 0 : i32
    return %c0_i32, %c0_i32_0 : i32, i32
  }
  func.func @transform_16(%arg0: i32) -> (i32, i32) {
    %c0_i32 = arith.constant 0 : i32
    %c0_i32_0 = arith.constant 0 : i32
    %c0_i32_1 = arith.constant 0 : i32
    return %c0_i32, %c0_i32_0 : i32, i32
  }
  func.func @transform_17(%arg0: i32) -> (i32, i32) {
    %c0_i32 = arith.constant 0 : i32
    %c0_i32_0 = arith.constant 0 : i32
    %c0_i32_1 = arith.constant 0 : i32
    return %c0_i32, %c0_i32_0 : i32, i32
  }
  func.func @transform_18(%arg0: i32) -> (i32, i32) {
    %c0_i32 = arith.constant 0 : i32
    %c0_i32_0 = arith.constant 0 : i32
    %c0_i32_1 = arith.constant 0 : i32
    return %c0_i32, %c0_i32_0 : i32, i32
  }
  func.func @transform_19(%arg0: i32) -> (i32, i32) {
    %c0_i32 = arith.constant 0 : i32
    %c0_i32_0 = arith.constant 0 : i32
    %c0_i32_1 = arith.constant 0 : i32
    return %c0_i32, %c0_i32_0 : i32, i32
  }
  func.func @transform_20(%arg0: i32) -> (i32, i32) {
    %c0_i32 = arith.constant 0 : i32
    %c0_i32_0 = arith.constant 0 : i32
    %c0_i32_1 = arith.constant 0 : i32
    return %c0_i32, %c0_i32_0 : i32, i32
  }
  func.func @transform_21(%arg0: i32) -> (i32, i32) {
    %c0_i32 = arith.constant 0 : i32
    %c0_i32_0 = arith.constant 0 : i32
    %c0_i32_1 = arith.constant 0 : i32
    return %c0_i32, %c0_i32_0 : i32, i32
  }
  func.func @transform_22(%arg0: i32) -> (i32, i32) {
    %c0_i32 = arith.constant 0 : i32
    %c0_i32_0 = arith.constant 0 : i32
    %c0_i32_1 = arith.constant 0 : i32
    return %c0_i32, %c0_i32_0 : i32, i32
  }
  func.func @transform_23(%arg0: i32) -> (i32, i32) {
    %c0_i32 = arith.constant 0 : i32
    %c0_i32_0 = arith.constant 0 : i32
    %c0_i32_1 = arith.constant 0 : i32
    return %c0_i32, %c0_i32_0 : i32, i32
  }
  func.func @transform_24(%arg0: i32) -> (i32, i32) {
    %c0_i32 = arith.constant 0 : i32
    %c0_i32_0 = arith.constant 0 : i32
    %c0_i32_1 = arith.constant 0 : i32
    return %c0_i32, %c0_i32_0 : i32, i32
  }
  func.func @transform_25(%arg0: i32) -> (i32, i32) {
    %c0_i32 = arith.constant 0 : i32
    %c0_i32_0 = arith.constant 0 : i32
    %c0_i32_1 = arith.constant 0 : i32
    return %c0_i32, %c0_i32_0 : i32, i32
  }
  func.func @transform_26(%arg0: i32) -> (i32, i32) {
    %c0_i32 = arith.constant 0 : i32
    %c0_i32_0 = arith.constant 0 : i32
    %c0_i32_1 = arith.constant 0 : i32
    return %c0_i32, %c0_i32_0 : i32, i32
  }
  func.func @transform_27(%arg0: i32) -> (i32, i32) {
    %c0_i32 = arith.constant 0 : i32
    %c0_i32_0 = arith.constant 0 : i32
    %c0_i32_1 = arith.constant 0 : i32
    return %c0_i32, %c0_i32_0 : i32, i32
  }
  func.func @transform_28(%arg0: i32) -> (i32, i32) {
    %c0_i32 = arith.constant 0 : i32
    %c0_i32_0 = arith.constant 0 : i32
    %c0_i32_1 = arith.constant 0 : i32
    return %c0_i32, %c0_i32_0 : i32, i32
  }
  func.func @transform_29(%arg0: i32) -> (i32, i32) {
    %c0_i32 = arith.constant 0 : i32
    %c0_i32_0 = arith.constant 0 : i32
    %c0_i32_1 = arith.constant 0 : i32
    return %c0_i32, %c0_i32_0 : i32, i32
  }
  func.func @transform_30(%arg0: i32) -> (i32, i32, i32) {
    %c0_i32 = arith.constant 0 : i32
    %c0_i32_0 = arith.constant 0 : i32
    %c0_i32_1 = arith.constant 0 : i32
    return %arg0, %c0_i32, %c0_i32_0 : i32, i32, i32
  }
}

</mosaic_0001>

<llo_original>
// kernel: tpu_custom_call.1
$region0: #{tpu_custom_call.1}
  #allocation0 [shape = 'u32[]', space=smem, size = 0x4, offset = 0x4, fixed_abs, tag = 'smem constant byte address 0x4 - core index']
  #allocation1 [shape = 'u32[144,128]{1,0:T(1,128)}', space=vmem, size = 0x12000, scoped, tag = 'internal scratch']
  #allocation2 [shape = 'f32[16,128]{1,0:T(8,128)}', space=vmem, size = 0x2000, scoped, tag = 'scratch operand']
  %s0 = inlined_call_operand.smem [shape: u32[31], index: -1, kind: input, shape index: {}]
  %s1 = sld [smem:[%s0]]
  %s2 = scalar_lea.smem %s0, 1
  %s3 = sld [smem:[%s2]]
  %s4 = scalar_lea.smem %s0, 2
  %s5 = sld [smem:[%s4]]
  %s6 = scalar_lea.smem %s0, 3
  %s7 = sld [smem:[%s6]]
  %s8 = scalar_lea.smem %s0, 4
  %s9 = sld [smem:[%s8]]
  %s10 = scalar_lea.smem %s0, 5
  %s11 = sld [smem:[%s10]]
  %s12 = scalar_lea.smem %s0, 6
  %s13 = sld [smem:[%s12]]
  %s14 = scalar_lea.smem %s0, 7
  %s15 = sld [smem:[%s14]]
  %s16 = scalar_lea.smem %s0, 8
  %s17 = sld [smem:[%s16]]
  %s18 = scalar_lea.smem %s0, 9
  %s19 = sld [smem:[%s18]]
  %s20 = scalar_lea.smem %s0, 10
  %s21 = sld [smem:[%s20]]
  %s22 = scalar_lea.smem %s0, 11
  %s23 = sld [smem:[%s22]]
  %s24 = scalar_lea.smem %s0, 12
  %s25 = sld [smem:[%s24]]
  %s26 = scalar_lea.smem %s0, 13
  %s27 = sld [smem:[%s26]]
  %s28 = scalar_lea.smem %s0, 14
  %s29 = sld [smem:[%s28]]
  %s30 = scalar_lea.smem %s0, 15
  %s31 = sld [smem:[%s30]]
  %s32 = scalar_lea.smem %s0, 16
  %s33 = sld [smem:[%s32]]
  %s34 = scalar_lea.smem %s0, 17
  %s35 = sld [smem:[%s34]]
  %s36 = scalar_lea.smem %s0, 18
  %s37 = sld [smem:[%s36]]
  %s38 = scalar_lea.smem %s0, 19
  %s39 = sld [smem:[%s38]]
  %s40 = scalar_lea.smem %s0, 20
  %s41 = sld [smem:[%s40]]
  %s42 = scalar_lea.smem %s0, 21
  %s43 = sld [smem:[%s42]]
  %s44 = scalar_lea.smem %s0, 22
  %s45 = sld [smem:[%s44]]
  %s46 = scalar_lea.smem %s0, 23
  %s47 = sld [smem:[%s46]]
  %s48 = scalar_lea.smem %s0, 24
  %s49 = sld [smem:[%s48]]
  %s50 = scalar_lea.smem %s0, 25
  %s51 = sld [smem:[%s50]]
  %s52 = scalar_lea.smem %s0, 26
  %s53 = sld [smem:[%s52]]
  %s54 = scalar_lea.smem %s0, 27
  %s55 = sld [smem:[%s54]]
  %s56 = scalar_lea.smem %s0, 28
  %s57 = sld [smem:[%s56]]
  %s58 = scalar_lea.smem %s0, 29
  %s59 = sld [smem:[%s58]]
  %s60 = scalar_lea.smem %s0, 30
  %s61 = sld [smem:[%s60]]
  %s62 = sld [smem:[#allocation0]]
  $region209: #{tpu_custom_call.1} parent=0
    _
  %s64 = ssub.s32 1, %s62
  %s65 = scalar_select 0, %s64, %s62
  $region1: #{tpu_custom_call.1} parent=0
    #allocation3 [shape = 'u8[16384]{0}', space=vmem, size = 0x4000, scoped, tag = 'input window, operand 0']
    #allocation4 [shape = 's32[2]{0}', space=sflag, size = 0x8, scoped, tag = 'scoped memory for tpu_custom_call.1']
    #allocation5 [shape = 's32[2]{0}', space=sflag, size = 0x8, scoped, tag = 'scoped memory for tpu_custom_call.1']
    #allocation6 [shape = 'u8[32768]{0}', space=vmem, size = 0x8000, scoped, tag = 'input window, operand 1']
    #allocation7 [shape = 's32[2]{0}', space=sflag, size = 0x8, scoped, tag = 'scoped memory for tpu_custom_call.1']
    #allocation8 [shape = 'u8[16384]{0}', space=vmem, size = 0x4000, scoped, tag = 'input window, operand 2']
    #allocation9 [shape = 'u8[32768]{0}', space=vmem, size = 0x8000, scoped, tag = 'input window, operand 3']
    #allocation10 [shape = 's32[2]{0}', space=sflag, size = 0x8, scoped, tag = 'scoped memory for tpu_custom_call.1']
    #allocation11 [shape = 'u8[32768]{0}', space=vmem, size = 0x8000, scoped, tag = 'input window, operand 6, single buffered']
    #allocation12 [shape = 'u8[32768]{0}', space=vmem, size = 0x8000, scoped, tag = 'input window, operand 8, single buffered']
    #allocation13 [shape = 's32[1]{0}', space=sflag, size = 0x4, scoped, tag = 'scoped memory for tpu_custom_call.1']
    #allocation14 [shape = 'u8[32768]{0}', space=vmem, size = 0x8000, scoped, tag = 'input window, operand 10, single buffered']
    #allocation15 [shape = 'u8[32768]{0}', space=vmem, size = 0x8000, scoped, tag = 'input window, operand 12, single buffered']
    #allocation16 [shape = 's32[1]{0}', space=sflag, size = 0x4, scoped, tag = 'scoped memory for tpu_custom_call.1']
    #allocation17 [shape = 'u8[32768]{0}', space=vmem, size = 0x8000, scoped, tag = 'input window, operand 16, single buffered']
    #allocation18 [shape = 'u8[32768]{0}', space=vmem, size = 0x8000, scoped, tag = 'input window, operand 18, single buffered']
    #allocation19 [shape = 's32[1]{0}', space=sflag, size = 0x4, scoped, tag = 'scoped memory for tpu_custom_call.1']
    #allocation20 [shape = 'u8[32768]{0}', space=vmem, size = 0x8000, scoped, tag = 'input window, operand 20, single buffered']
    #allocation21 [shape = 'u8[32768]{0}', space=vmem, size = 0x8000, scoped, tag = 'input window, operand 22, single buffered']
    #allocation22 [shape = 's32[1]{0}', space=sflag, size = 0x4, scoped, tag = 'scoped memory for tpu_custom_call.1']
    #allocation23 [shape = 'u8[65536]{0}', space=vmem, size = 0x10000, scoped, tag = 'input window, operand 26, single buffered']
    #allocation24 [shape = 'u8[65536]{0}', space=vmem, size = 0x10000, scoped, tag = 'input window, operand 28, single buffered']
    #allocation25 [shape = 's32[1]{0}', space=sflag, size = 0x4, scoped, tag = 'scoped memory for tpu_custom_call.1']
    #allocation26 [shape = 'u8[16384]{0}', space=vmem, size = 0x4000, scoped, tag = 'output window, operand 0']
    %66 = vsyncpa [#allocation4], 0
    %s67 = scalar_lea.sflag [#allocation4], 1
    %68 = vsyncpa %s67, 0
    %69 = vsyncpa [#allocation7], 0
    %s70 = scalar_lea.sflag [#allocation7], 1
    %71 = vsyncpa %s70, 0
    %72 = vsyncpa [#allocation10], 0
    %s73 = scalar_lea.sflag [#allocation10], 1
    %74 = vsyncpa %s73, 0
    %75 = vsyncpa [#allocation13], 0
    %76 = vsyncpa [#allocation16], 0
    %77 = vsyncpa [#allocation19], 0
    %78 = vsyncpa [#allocation22], 0
    %79 = vsyncpa [#allocation25], 0
    %80 = vsyncpa [#allocation5], 0
    %s81 = scalar_lea.sflag [#allocation5], 1
    %82 = vsyncpa %s81, 0
    loop: start=0, step=1, limit=4
    $region2: #{tpu_custom_call.1} parent=1 // loop_pre_header
      _
    $region3: #{tpu_custom_call.1} parent=1 // loop_header
      %s84 = sphi 0, %s88
      %p85 = scmp.ge.s32.totalorder %s84, 4
      %s94 = sphi 0, %s96
      %s97 = sphi 0, %s94
      %s98 = sphi 0, %s97
      %s114 = sphi 0, %s98
      %s120 = sphi 0, %s122
      %s123 = sphi 0, %s120
      %s124 = sphi 0, %s123
      %s140 = sphi 0, %s124
      %s146 = sphi 0, %s148
      %s149 = sphi 0, %s146
      %s150 = sphi 0, %s149
      %s166 = sphi 0, %s150
      %s172 = sphi 0, %s174
      %s175 = sphi 0, %s172
      %s176 = sphi 0, %s175
      %s192 = sphi 0, %s176
      %s196 = sphi 0, %s196
      %s198 = sphi 0, %s196
      %s199 = sphi 0, %s198
      %s213 = sphi 0, %s199
      %s217 = sphi 0, %s217
      %s219 = sphi 0, %s217
      %s220 = sphi 0, %s219
      %s234 = sphi 0, %s220
      %s238 = sphi 0, %s238
      %s240 = sphi 0, %s238
      %s241 = sphi 0, %s240
      %s255 = sphi 0, %s241
      %s259 = sphi 0, %s259
      %s261 = sphi 0, %s259
      %s262 = sphi 0, %s261
      %s276 = sphi 0, %s262
      %s280 = sphi 0, %s280
      %s282 = sphi 0, %s280
      %s283 = sphi 0, %s282
      %s297 = sphi 0, %s283
      %s301 = sphi 0, %s301
      %s303 = sphi 0, %s301
      %s304 = sphi 0, %s303
      %s318 = sphi 0, %s304
      %s322 = sphi 0, %s322
      %s324 = sphi 0, %s322
      %s325 = sphi 0, %s324
      %s339 = sphi 0, %s325
      %s343 = sphi 0, %s343
      %s345 = sphi 0, %s343
      %s346 = sphi 0, %s345
      %s360 = sphi 0, %s346
      %s364 = sphi 0, %s364
      %s366 = sphi 0, %s364
      %s367 = sphi 0, %s366
      %s381 = sphi 0, %s367
      %s385 = sphi 0, %s385
      %s387 = sphi 0, %s385
      %s388 = sphi 0, %s387
      %s402 = sphi 0, %s388
      %s406 = sphi 0, %s406
      %s408 = sphi 0, %s406
      %s409 = sphi 0, %s408
      %s423 = sphi 0, %s409
      %s427 = sphi 0, %s427
      %s429 = sphi 0, %s427
      %s430 = sphi 0, %s429
      %s444 = sphi 0, %s430
      %s448 = sphi 0, %s448
      %s450 = sphi 0, %s448
      %s451 = sphi 0, %s450
      %s465 = sphi 0, %s451
      %s469 = sphi 0, %s469
      %s471 = sphi 0, %s469
      %s472 = sphi 0, %s471
      %s486 = sphi 0, %s472
      %s490 = sphi 0, %s490
      %s492 = sphi 0, %s490
      %s493 = sphi 0, %s492
      %s507 = sphi 0, %s493
      %s511 = sphi 0, %s511
      %s513 = sphi 0, %s511
      %s514 = sphi 0, %s513
      %s528 = sphi 0, %s514
      %s532 = sphi 0, %s532
      %s534 = sphi 0, %s532
      %s535 = sphi 0, %s534
      %s549 = sphi 0, %s535
      %s553 = sphi 0, %s553
      %s555 = sphi 0, %s553
      %s556 = sphi 0, %s555
      %s570 = sphi 0, %s556
      %s574 = sphi 0, %s574
      %s576 = sphi 0, %s574
      %s577 = sphi 0, %s576
      %s591 = sphi 0, %s577
      %s595 = sphi 0, %s595
      %s597 = sphi 0, %s595
      %s598 = sphi 0, %s597
      %s612 = sphi 0, %s598
      %s616 = sphi 0, %s616
      %s618 = sphi 0, %s616
      %s619 = sphi 0, %s618
      %s633 = sphi 0, %s619
      %s637 = sphi 0, %s637
      %s639 = sphi 0, %s637
      %s640 = sphi 0, %s639
      %s654 = sphi 0, %s640
      %s658 = sphi 0, %s658
      %s660 = sphi 0, %s658
      %s661 = sphi 0, %s660
      %s675 = sphi 0, %s661
      %s679 = sphi 0, %s679
      %s681 = sphi 0, %s679
      %s682 = sphi 0, %s681
      %s696 = sphi 0, %s682
      %s700 = sphi 0, %s700
      %s702 = sphi 0, %s700
      %s703 = sphi 0, %s702
      %s717 = sphi 0, %s703
      %s721 = sphi 0, %s721
      %s723 = sphi 0, %s721
      %s724 = sphi 0, %s723
      %s738 = sphi 0, %s724
      %s744 = sphi 0, %s746
      %s747 = sphi 0, %s744
      %s748 = sphi 0, %s747
      %s764 = sphi 0, %s748
    $region4: #{tpu_custom_call.1} parent=1 // loop_header_branch
      %87 = sbr.rel (%p85) target = $region8
    $region5: #{tpu_custom_call.1} parent=1 // loop_body
      %s89 = ssub.s32 %s84, 1
      %s90 = ssub.s32 %s84, 2
      %s91 = sadd.s32 %s84, 1
      %s92 = ssub.s32 %s84, %s91
      %p93 = scmp.eq.s32.totalorder %s92, 0
      %s95 = sadd.s32 %s94, 1
      %s96 = scalar_select %p93, %s94, %s95
      %p99 = pneg %p93
      %p100 = scmp.eq.s32.totalorder %s84, 1
      %p101 = por %p99, %p100
      %p102 = scmp.ne.s32.totalorder %s94, %s97
      %p103 = scmp.eq.s32.totalorder %s84, 0
      %p104 = por %p102, %p103
      %p105 = scmp.ne.s32.totalorder %s94, %s97
      %p106 = scmp.eq.s32.totalorder %s89, 1
      %p107 = por %p105, %p106
      %p108 = scmp.ne.s32.totalorder %s97, %s98
      %p109 = scmp.eq.s32.totalorder %s89, 0
      %p110 = por %p108, %p109
      %p111 = scmp.ne.s32.totalorder %s97, %s98
      %p112 = scmp.eq.s32.totalorder %s90, 1
      %p113 = por %p111, %p112
      %p115 = scmp.ne.s32.totalorder %s98, %s114
      %p116 = scmp.eq.s32.totalorder %s90, 0
      %p117 = por %p115, %p116
      %s118 = ssub.s32 %s84, %s91
      %p119 = scmp.eq.s32.totalorder %s118, 0
      %s121 = sadd.s32 %s120, 1
      %s122 = scalar_select %p119, %s120, %s121
      %p125 = pneg %p119
      %p126 = scmp.eq.s32.totalorder %s84, 1
      %p127 = por %p125, %p126
      %p128 = scmp.ne.s32.totalorder %s120, %s123
      %p129 = scmp.eq.s32.totalorder %s84, 0
      %p130 = por %p128, %p129
      %p131 = scmp.ne.s32.totalorder %s120, %s123
      %p132 = scmp.eq.s32.totalorder %s89, 1
      %p133 = por %p131, %p132
      %p134 = scmp.ne.s32.totalorder %s123, %s124
      %p135 = scmp.eq.s32.totalorder %s89, 0
      %p136 = por %p134, %p135
      %p137 = scmp.ne.s32.totalorder %s123, %s124
      %p138 = scmp.eq.s32.totalorder %s90, 1
      %p139 = por %p137, %p138
      %p141 = scmp.ne.s32.totalorder %s124, %s140
      %p142 = scmp.eq.s32.totalorder %s90, 0
      %p143 = por %p141, %p142
      %s144 = ssub.s32 %s84, %s91
      %p145 = scmp.eq.s32.totalorder %s144, 0
      %s147 = sadd.s32 %s146, 1
      %s148 = scalar_select %p145, %s146, %s147
      %p151 = pneg %p145
      %p152 = scmp.eq.s32.totalorder %s84, 1
      %p153 = por %p151, %p152
      %p154 = scmp.ne.s32.totalorder %s146, %s149
      %p155 = scmp.eq.s32.totalorder %s84, 0
      %p156 = por %p154, %p155
      %p157 = scmp.ne.s32.totalorder %s146, %s149
      %p158 = scmp.eq.s32.totalorder %s89, 1
      %p159 = por %p157, %p158
      %p160 = scmp.ne.s32.totalorder %s149, %s150
      %p161 = scmp.eq.s32.totalorder %s89, 0
      %p162 = por %p160, %p161
      %p163 = scmp.ne.s32.totalorder %s149, %s150
      %p164 = scmp.eq.s32.totalorder %s90, 1
      %p165 = por %p163, %p164
      %p167 = scmp.ne.s32.totalorder %s150, %s166
      %p168 = scmp.eq.s32.totalorder %s90, 0
      %p169 = por %p167, %p168
      %s170 = ssub.s32 %s84, %s91
      %p171 = scmp.eq.s32.totalorder %s170, 0
      %s173 = sadd.s32 %s172, 1
      %s174 = scalar_select %p171, %s172, %s173
      %p177 = pneg %p171
      %p178 = scmp.eq.s32.totalorder %s84, 1
      %p179 = por %p177, %p178
      %p180 = scmp.ne.s32.totalorder %s172, %s175
      %p181 = scmp.eq.s32.totalorder %s84, 0
      %p182 = por %p180, %p181
      %p183 = scmp.ne.s32.totalorder %s172, %s175
      %p184 = scmp.eq.s32.totalorder %s89, 1
      %p185 = por %p183, %p184
      %p186 = scmp.ne.s32.totalorder %s175, %s176
      %p187 = scmp.eq.s32.totalorder %s89, 0
      %p188 = por %p186, %p187
      %p189 = scmp.ne.s32.totalorder %s175, %s176
      %p190 = scmp.eq.s32.totalorder %s90, 1
      %p191 = por %p189, %p190
      %p193 = scmp.ne.s32.totalorder %s176, %s192
      %p194 = scmp.eq.s32.totalorder %s90, 0
      %p195 = por %p193, %p194
      %s197 = sadd.s32 %s196, 1
      %p200 = scmp.eq.s32.totalorder %s84, 1
      %p201 = scmp.ne.s32.totalorder %s196, %s198
      %p202 = scmp.eq.s32.totalorder %s84, 0
      %p203 = por %p201, %p202
      %p204 = scmp.ne.s32.totalorder %s196, %s198
      %p205 = scmp.eq.s32.totalorder %s89, 1
      %p206 = por %p204, %p205
      %p207 = scmp.ne.s32.totalorder %s198, %s199
      %p208 = scmp.eq.s32.totalorder %s89, 0
      %p209 = por %p207, %p208
      %p210 = scmp.ne.s32.totalorder %s198, %s199
      %p211 = scmp.eq.s32.totalorder %s90, 1
      %p212 = por %p210, %p211
      %p214 = scmp.ne.s32.totalorder %s199, %s213
      %p215 = scmp.eq.s32.totalorder %s90, 0
      %p216 = por %p214, %p215
      %s218 = sadd.s32 %s217, 1
      %p221 = scmp.eq.s32.totalorder %s84, 1
      %p222 = scmp.ne.s32.totalorder %s217, %s219
      %p223 = scmp.eq.s32.totalorder %s84, 0
      %p224 = por %p222, %p223
      %p225 = scmp.ne.s32.totalorder %s217, %s219
      %p226 = scmp.eq.s32.totalorder %s89, 1
      %p227 = por %p225, %p226
      %p228 = scmp.ne.s32.totalorder %s219, %s220
      %p229 = scmp.eq.s32.totalorder %s89, 0
      %p230 = por %p228, %p229
      %p231 = scmp.ne.s32.totalorder %s219, %s220
      %p232 = scmp.eq.s32.totalorder %s90, 1
      %p233 = por %p231, %p232
      %p235 = scmp.ne.s32.totalorder %s220, %s234
      %p236 = scmp.eq.s32.totalorder %s90, 0
      %p237 = por %p235, %p236
      %s239 = sadd.s32 %s238, 1
      %p242 = scmp.eq.s32.totalorder %s84, 1
      %p243 = scmp.ne.s32.totalorder %s238, %s240
      %p244 = scmp.eq.s32.totalorder %s84, 0
      %p245 = por %p243, %p244
      %p246 = scmp.ne.s32.totalorder %s238, %s240
      %p247 = scmp.eq.s32.totalorder %s89, 1
      %p248 = por %p246, %p247
      %p249 = scmp.ne.s32.totalorder %s240, %s241
      %p250 = scmp.eq.s32.totalorder %s89, 0
      %p251 = por %p249, %p250
      %p252 = scmp.ne.s32.totalorder %s240, %s241
      %p253 = scmp.eq.s32.totalorder %s90, 1
      %p254 = por %p252, %p253
      %p256 = scmp.ne.s32.totalorder %s241, %s255
      %p257 = scmp.eq.s32.totalorder %s90, 0
      %p258 = por %p256, %p257
      %s260 = sadd.s32 %s259, 1
      %p263 = scmp.eq.s32.totalorder %s84, 1
      %p264 = scmp.ne.s32.totalorder %s259, %s261
      %p265 = scmp.eq.s32.totalorder %s84, 0
      %p266 = por %p264, %p265
      %p267 = scmp.ne.s32.totalorder %s259, %s261
      %p268 = scmp.eq.s32.totalorder %s89, 1
      %p269 = por %p267, %p268
      %p270 = scmp.ne.s32.totalorder %s261, %s262
      %p271 = scmp.eq.s32.totalorder %s89, 0
      %p272 = por %p270, %p271
      %p273 = scmp.ne.s32.totalorder %s261, %s262
      %p274 = scmp.eq.s32.totalorder %s90, 1
      %p275 = por %p273, %p274
      %p277 = scmp.ne.s32.totalorder %s262, %s276
      %p278 = scmp.eq.s32.totalorder %s90, 0
      %p279 = por %p277, %p278
      %s281 = sadd.s32 %s280, 1
      %p284 = scmp.eq.s32.totalorder %s84, 1
      %p285 = scmp.ne.s32.totalorder %s280, %s282
      %p286 = scmp.eq.s32.totalorder %s84, 0
      %p287 = por %p285, %p286
      %p288 = scmp.ne.s32.totalorder %s280, %s282
      %p289 = scmp.eq.s32.totalorder %s89, 1
      %p290 = por %p288, %p289
      %p291 = scmp.ne.s32.totalorder %s282, %s283
      %p292 = scmp.eq.s32.totalorder %s89, 0
      %p293 = por %p291, %p292
      %p294 = scmp.ne.s32.totalorder %s282, %s283
      %p295 = scmp.eq.s32.totalorder %s90, 1
      %p296 = por %p294, %p295
      %p298 = scmp.ne.s32.totalorder %s283, %s297
      %p299 = scmp.eq.s32.totalorder %s90, 0
      %p300 = por %p298, %p299
      %s302 = sadd.s32 %s301, 1
      %p305 = scmp.eq.s32.totalorder %s84, 1
      %p306 = scmp.ne.s32.totalorder %s301, %s303
      %p307 = scmp.eq.s32.totalorder %s84, 0
      %p308 = por %p306, %p307
      %p309 = scmp.ne.s32.totalorder %s301, %s303
      %p310 = scmp.eq.s32.totalorder %s89, 1
      %p311 = por %p309, %p310
      %p312 = scmp.ne.s32.totalorder %s303, %s304
      %p313 = scmp.eq.s32.totalorder %s89, 0
      %p314 = por %p312, %p313
      %p315 = scmp.ne.s32.totalorder %s303, %s304
      %p316 = scmp.eq.s32.totalorder %s90, 1
      %p317 = por %p315, %p316
      %p319 = scmp.ne.s32.totalorder %s304, %s318
      %p320 = scmp.eq.s32.totalorder %s90, 0
      %p321 = por %p319, %p320
      %s323 = sadd.s32 %s322, 1
      %p326 = scmp.eq.s32.totalorder %s84, 1
      %p327 = scmp.ne.s32.totalorder %s322, %s324
      %p328 = scmp.eq.s32.totalorder %s84, 0
      %p329 = por %p327, %p328
      %p330 = scmp.ne.s32.totalorder %s322, %s324
      %p331 = scmp.eq.s32.totalorder %s89, 1
      %p332 = por %p330, %p331
      %p333 = scmp.ne.s32.totalorder %s324, %s325
      %p334 = scmp.eq.s32.totalorder %s89, 0
      %p335 = por %p333, %p334
      %p336 = scmp.ne.s32.totalorder %s324, %s325
      %p337 = scmp.eq.s32.totalorder %s90, 1
      %p338 = por %p336, %p337
      %p340 = scmp.ne.s32.totalorder %s325, %s339
      %p341 = scmp.eq.s32.totalorder %s90, 0
      %p342 = por %p340, %p341
      %s344 = sadd.s32 %s343, 1
      %p347 = scmp.eq.s32.totalorder %s84, 1
      %p348 = scmp.ne.s32.totalorder %s343, %s345
      %p349 = scmp.eq.s32.totalorder %s84, 0
      %p350 = por %p348, %p349
      %p351 = scmp.ne.s32.totalorder %s343, %s345
      %p352 = scmp.eq.s32.totalorder %s89, 1
      %p353 = por %p351, %p352
      %p354 = scmp.ne.s32.totalorder %s345, %s346
      %p355 = scmp.eq.s32.totalorder %s89, 0
      %p356 = por %p354, %p355
      %p357 = scmp.ne.s32.totalorder %s345, %s346
      %p358 = scmp.eq.s32.totalorder %s90, 1
      %p359 = por %p357, %p358
      %p361 = scmp.ne.s32.totalorder %s346, %s360
      %p362 = scmp.eq.s32.totalorder %s90, 0
      %p363 = por %p361, %p362
      %s365 = sadd.s32 %s364, 1
      %p368 = scmp.eq.s32.totalorder %s84, 1
      %p369 = scmp.ne.s32.totalorder %s364, %s366
      %p370 = scmp.eq.s32.totalorder %s84, 0
      %p371 = por %p369, %p370
      %p372 = scmp.ne.s32.totalorder %s364, %s366
      %p373 = scmp.eq.s32.totalorder %s89, 1
      %p374 = por %p372, %p373
      %p375 = scmp.ne.s32.totalorder %s366, %s367
      %p376 = scmp.eq.s32.totalorder %s89, 0
      %p377 = por %p375, %p376
      %p378 = scmp.ne.s32.totalorder %s366, %s367
      %p379 = scmp.eq.s32.totalorder %s90, 1
      %p380 = por %p378, %p379
      %p382 = scmp.ne.s32.totalorder %s367, %s381
      %p383 = scmp.eq.s32.totalorder %s90, 0
      %p384 = por %p382, %p383
      %s386 = sadd.s32 %s385, 1
      %p389 = scmp.eq.s32.totalorder %s84, 1
      %p390 = scmp.ne.s32.totalorder %s385, %s387
      %p391 = scmp.eq.s32.totalorder %s84, 0
      %p392 = por %p390, %p391
      %p393 = scmp.ne.s32.totalorder %s385, %s387
      %p394 = scmp.eq.s32.totalorder %s89, 1
      %p395 = por %p393, %p394
      %p396 = scmp.ne.s32.totalorder %s387, %s388
      %p397 = scmp.eq.s32.totalorder %s89, 0
      %p398 = por %p396, %p397
      %p399 = scmp.ne.s32.totalorder %s387, %s388
      %p400 = scmp.eq.s32.totalorder %s90, 1
      %p401 = por %p399, %p400
      %p403 = scmp.ne.s32.totalorder %s388, %s402
      %p404 = scmp.eq.s32.totalorder %s90, 0
      %p405 = por %p403, %p404
      %s407 = sadd.s32 %s406, 1
      %p410 = scmp.eq.s32.totalorder %s84, 1
      %p411 = scmp.ne.s32.totalorder %s406, %s408
      %p412 = scmp.eq.s32.totalorder %s84, 0
      %p413 = por %p411, %p412
      %p414 = scmp.ne.s32.totalorder %s406, %s408
      %p415 = scmp.eq.s32.totalorder %s89, 1
      %p416 = por %p414, %p415
      %p417 = scmp.ne.s32.totalorder %s408, %s409
      %p418 = scmp.eq.s32.totalorder %s89, 0
      %p419 = por %p417, %p418
      %p420 = scmp.ne.s32.totalorder %s408, %s409
      %p421 = scmp.eq.s32.totalorder %s90, 1
      %p422 = por %p420, %p421
      %p424 = scmp.ne.s32.totalorder %s409, %s423
      %p425 = scmp.eq.s32.totalorder %s90, 0
      %p426 = por %p424, %p425
      %s428 = sadd.s32 %s427, 1
      %p431 = scmp.eq.s32.totalorder %s84, 1
      %p432 = scmp.ne.s32.totalorder %s427, %s429
      %p433 = scmp.eq.s32.totalorder %s84, 0
      %p434 = por %p432, %p433
      %p435 = scmp.ne.s32.totalorder %s427, %s429
      %p436 = scmp.eq.s32.totalorder %s89, 1
      %p437 = por %p435, %p436
      %p438 = scmp.ne.s32.totalorder %s429, %s430
      %p439 = scmp.eq.s32.totalorder %s89, 0
      %p440 = por %p438, %p439
      %p441 = scmp.ne.s32.totalorder %s429, %s430
      %p442 = scmp.eq.s32.totalorder %s90, 1
      %p443 = por %p441, %p442
      %p445 = scmp.ne.s32.totalorder %s430, %s444
      %p446 = scmp.eq.s32.totalorder %s90, 0
      %p447 = por %p445, %p446
      %s449 = sadd.s32 %s448, 1
      %p452 = scmp.eq.s32.totalorder %s84, 1
      %p453 = scmp.ne.s32.totalorder %s448, %s450
      %p454 = scmp.eq.s32.totalorder %s84, 0
      %p455 = por %p453, %p454
      %p456 = scmp.ne.s32.totalorder %s448, %s450
      %p457 = scmp.eq.s32.totalorder %s89, 1
      %p458 = por %p456, %p457
      %p459 = scmp.ne.s32.totalorder %s450, %s451
      %p460 = scmp.eq.s32.totalorder %s89, 0
      %p461 = por %p459, %p460
      %p462 = scmp.ne.s32.totalorder %s450, %s451
      %p463 = scmp.eq.s32.totalorder %s90, 1
      %p464 = por %p462, %p463
      %p466 = scmp.ne.s32.totalorder %s451, %s465
      %p467 = scmp.eq.s32.totalorder %s90, 0
      %p468 = por %p466, %p467
      %s470 = sadd.s32 %s469, 1
      %p473 = scmp.eq.s32.totalorder %s84, 1
      %p474 = scmp.ne.s32.totalorder %s469, %s471
      %p475 = scmp.eq.s32.totalorder %s84, 0
      %p476 = por %p474, %p475
      %p477 = scmp.ne.s32.totalorder %s469, %s471
      %p478 = scmp.eq.s32.totalorder %s89, 1
      %p479 = por %p477, %p478
      %p480 = scmp.ne.s32.totalorder %s471, %s472
      %p481 = scmp.eq.s32.totalorder %s89, 0
      %p482 = por %p480, %p481
      %p483 = scmp.ne.s32.totalorder %s471, %s472
      %p484 = scmp.eq.s32.totalorder %s90, 1
      %p485 = por %p483, %p484
      %p487 = scmp.ne.s32.totalorder %s472, %s486
      %p488 = scmp.eq.s32.totalorder %s90, 0
      %p489 = por %p487, %p488
      %s491 = sadd.s32 %s490, 1
      %p494 = scmp.eq.s32.totalorder %s84, 1
      %p495 = scmp.ne.s32.totalorder %s490, %s492
      %p496 = scmp.eq.s32.totalorder %s84, 0
      %p497 = por %p495, %p496
      %p498 = scmp.ne.s32.totalorder %s490, %s492
      %p499 = scmp.eq.s32.totalorder %s89, 1
      %p500 = por %p498, %p499
      %p501 = scmp.ne.s32.totalorder %s492, %s493
      %p502 = scmp.eq.s32.totalorder %s89, 0
      %p503 = por %p501, %p502
      %p504 = scmp.ne.s32.totalorder %s492, %s493
      %p505 = scmp.eq.s32.totalorder %s90, 1
      %p506 = por %p504, %p505
      %p508 = scmp.ne.s32.totalorder %s493, %s507
      %p509 = scmp.eq.s32.totalorder %s90, 0
      %p510 = por %p508, %p509
      %s512 = sadd.s32 %s511, 1
      %p515 = scmp.eq.s32.totalorder %s84, 1
      %p516 = scmp.ne.s32.totalorder %s511, %s513
      %p517 = scmp.eq.s32.totalorder %s84, 0
      %p518 = por %p516, %p517
      %p519 = scmp.ne.s32.totalorder %s511, %s513
      %p520 = scmp.eq.s32.totalorder %s89, 1
      %p521 = por %p519, %p520
      %p522 = scmp.ne.s32.totalorder %s513, %s514
      %p523 = scmp.eq.s32.totalorder %s89, 0
      %p524 = por %p522, %p523
      %p525 = scmp.ne.s32.totalorder %s513, %s514
      %p526 = scmp.eq.s32.totalorder %s90, 1
      %p527 = por %p525, %p526
      %p529 = scmp.ne.s32.totalorder %s514, %s528
      %p530 = scmp.eq.s32.totalorder %s90, 0
      %p531 = por %p529, %p530
      %s533 = sadd.s32 %s532, 1
      %p536 = scmp.eq.s32.totalorder %s84, 1
      %p537 = scmp.ne.s32.totalorder %s532, %s534
      %p538 = scmp.eq.s32.totalorder %s84, 0
      %p539 = por %p537, %p538
      %p540 = scmp.ne.s32.totalorder %s532, %s534
      %p541 = scmp.eq.s32.totalorder %s89, 1
      %p542 = por %p540, %p541
      %p543 = scmp.ne.s32.totalorder %s534, %s535
      %p544 = scmp.eq.s32.totalorder %s89, 0
      %p545 = por %p543, %p544
      %p546 = scmp.ne.s32.totalorder %s534, %s535
      %p547 = scmp.eq.s32.totalorder %s90, 1
      %p548 = por %p546, %p547
      %p550 = scmp.ne.s32.totalorder %s535, %s549
      %p551 = scmp.eq.s32.totalorder %s90, 0
      %p552 = por %p550, %p551
      %s554 = sadd.s32 %s553, 1
      %p557 = scmp.eq.s32.totalorder %s84, 1
      %p558 = scmp.ne.s32.totalorder %s553, %s555
      %p559 = scmp.eq.s32.totalorder %s84, 0
      %p560 = por %p558, %p559
      %p561 = scmp.ne.s32.totalorder %s553, %s555
      %p562 = scmp.eq.s32.totalorder %s89, 1
      %p563 = por %p561, %p562
      %p564 = scmp.ne.s32.totalorder %s555, %s556
      %p565 = scmp.eq.s32.totalorder %s89, 0
      %p566 = por %p564, %p565
      %p567 = scmp.ne.s32.totalorder %s555, %s556
      %p568 = scmp.eq.s32.totalorder %s90, 1
      %p569 = por %p567, %p568
      %p571 = scmp.ne.s32.totalorder %s556, %s570
      %p572 = scmp.eq.s32.totalorder %s90, 0
      %p573 = por %p571, %p572
      %s575 = sadd.s32 %s574, 1
      %p578 = scmp.eq.s32.totalorder %s84, 1
      %p579 = scmp.ne.s32.totalorder %s574, %s576
      %p580 = scmp.eq.s32.totalorder %s84, 0
      %p581 = por %p579, %p580
      %p582 = scmp.ne.s32.totalorder %s574, %s576
      %p583 = scmp.eq.s32.totalorder %s89, 1
      %p584 = por %p582, %p583
      %p585 = scmp.ne.s32.totalorder %s576, %s577
      %p586 = scmp.eq.s32.totalorder %s89, 0
      %p587 = por %p585, %p586
      %p588 = scmp.ne.s32.totalorder %s576, %s577
      %p589 = scmp.eq.s32.totalorder %s90, 1
      %p590 = por %p588, %p589
      %p592 = scmp.ne.s32.totalorder %s577, %s591
      %p593 = scmp.eq.s32.totalorder %s90, 0
      %p594 = por %p592, %p593
      %s596 = sadd.s32 %s595, 1
      %p599 = scmp.eq.s32.totalorder %s84, 1
      %p600 = scmp.ne.s32.totalorder %s595, %s597
      %p601 = scmp.eq.s32.totalorder %s84, 0
      %p602 = por %p600, %p601
      %p603 = scmp.ne.s32.totalorder %s595, %s597
      %p604 = scmp.eq.s32.totalorder %s89, 1
      %p605 = por %p603, %p604
      %p606 = scmp.ne.s32.totalorder %s597, %s598
      %p607 = scmp.eq.s32.totalorder %s89, 0
      %p608 = por %p606, %p607
      %p609 = scmp.ne.s32.totalorder %s597, %s598
      %p610 = scmp.eq.s32.totalorder %s90, 1
      %p611 = por %p609, %p610
      %p613 = scmp.ne.s32.totalorder %s598, %s612
      %p614 = scmp.eq.s32.totalorder %s90, 0
      %p615 = por %p613, %p614
      %s617 = sadd.s32 %s616, 1
      %p620 = scmp.eq.s32.totalorder %s84, 1
      %p621 = scmp.ne.s32.totalorder %s616, %s618
      %p622 = scmp.eq.s32.totalorder %s84, 0
      %p623 = por %p621, %p622
      %p624 = scmp.ne.s32.totalorder %s616, %s618
      %p625 = scmp.eq.s32.totalorder %s89, 1
      %p626 = por %p624, %p625
      %p627 = scmp.ne.s32.totalorder %s618, %s619
      %p628 = scmp.eq.s32.totalorder %s89, 0
      %p629 = por %p627, %p628
      %p630 = scmp.ne.s32.totalorder %s618, %s619
      %p631 = scmp.eq.s32.totalorder %s90, 1
      %p632 = por %p630, %p631
      %p634 = scmp.ne.s32.totalorder %s619, %s633
      %p635 = scmp.eq.s32.totalorder %s90, 0
      %p636 = por %p634, %p635
      %s638 = sadd.s32 %s637, 1
      %p641 = scmp.eq.s32.totalorder %s84, 1
      %p642 = scmp.ne.s32.totalorder %s637, %s639
      %p643 = scmp.eq.s32.totalorder %s84, 0
      %p644 = por %p642, %p643
      %p645 = scmp.ne.s32.totalorder %s637, %s639
      %p646 = scmp.eq.s32.totalorder %s89, 1
      %p647 = por %p645, %p646
      %p648 = scmp.ne.s32.totalorder %s639, %s640
      %p649 = scmp.eq.s32.totalorder %s89, 0
      %p650 = por %p648, %p649
      %p651 = scmp.ne.s32.totalorder %s639, %s640
      %p652 = scmp.eq.s32.totalorder %s90, 1
      %p653 = por %p651, %p652
      %p655 = scmp.ne.s32.totalorder %s640, %s654
      %p656 = scmp.eq.s32.totalorder %s90, 0
      %p657 = por %p655, %p656
      %s659 = sadd.s32 %s658, 1
      %p662 = scmp.eq.s32.totalorder %s84, 1
      %p663 = scmp.ne.s32.totalorder %s658, %s660
      %p664 = scmp.eq.s32.totalorder %s84, 0
      %p665 = por %p663, %p664
      %p666 = scmp.ne.s32.totalorder %s658, %s660
      %p667 = scmp.eq.s32.totalorder %s89, 1
      %p668 = por %p666, %p667
      %p669 = scmp.ne.s32.totalorder %s660, %s661
      %p670 = scmp.eq.s32.totalorder %s89, 0
      %p671 = por %p669, %p670
      %p672 = scmp.ne.s32.totalorder %s660, %s661
      %p673 = scmp.eq.s32.totalorder %s90, 1
      %p674 = por %p672, %p673
      %p676 = scmp.ne.s32.totalorder %s661, %s675
      %p677 = scmp.eq.s32.totalorder %s90, 0
      %p678 = por %p676, %p677
      %s680 = sadd.s32 %s679, 1
      %p683 = scmp.eq.s32.totalorder %s84, 1
      %p684 = scmp.ne.s32.totalorder %s679, %s681
      %p685 = scmp.eq.s32.totalorder %s84, 0
      %p686 = por %p684, %p685
      %p687 = scmp.ne.s32.totalorder %s679, %s681
      %p688 = scmp.eq.s32.totalorder %s89, 1
      %p689 = por %p687, %p688
      %p690 = scmp.ne.s32.totalorder %s681, %s682
      %p691 = scmp.eq.s32.totalorder %s89, 0
      %p692 = por %p690, %p691
      %p693 = scmp.ne.s32.totalorder %s681, %s682
      %p694 = scmp.eq.s32.totalorder %s90, 1
      %p695 = por %p693, %p694
      %p697 = scmp.ne.s32.totalorder %s682, %s696
      %p698 = scmp.eq.s32.totalorder %s90, 0
      %p699 = por %p697, %p698
      %s701 = sadd.s32 %s700, 1
      %p704 = scmp.eq.s32.totalorder %s84, 1
      %p705 = scmp.ne.s32.totalorder %s700, %s702
      %p706 = scmp.eq.s32.totalorder %s84, 0
      %p707 = por %p705, %p706
      %p708 = scmp.ne.s32.totalorder %s700, %s702
      %p709 = scmp.eq.s32.totalorder %s89, 1
      %p710 = por %p708, %p709
      %p711 = scmp.ne.s32.totalorder %s702, %s703
      %p712 = scmp.eq.s32.totalorder %s89, 0
      %p713 = por %p711, %p712
      %p714 = scmp.ne.s32.totalorder %s702, %s703
      %p715 = scmp.eq.s32.totalorder %s90, 1
      %p716 = por %p714, %p715
      %p718 = scmp.ne.s32.totalorder %s703, %s717
      %p719 = scmp.eq.s32.totalorder %s90, 0
      %p720 = por %p718, %p719
      %s722 = sadd.s32 %s721, 1
      %p725 = scmp.eq.s32.totalorder %s84, 1
      %p726 = scmp.ne.s32.totalorder %s721, %s723
      %p727 = scmp.eq.s32.totalorder %s84, 0
      %p728 = por %p726, %p727
      %p729 = scmp.ne.s32.totalorder %s721, %s723
      %p730 = scmp.eq.s32.totalorder %s89, 1
      %p731 = por %p729, %p730
      %p732 = scmp.ne.s32.totalorder %s723, %s724
      %p733 = scmp.eq.s32.totalorder %s89, 0
      %p734 = por %p732, %p733
      %p735 = scmp.ne.s32.totalorder %s723, %s724
      %p736 = scmp.eq.s32.totalorder %s90, 1
      %p737 = por %p735, %p736
      %p739 = scmp.ne.s32.totalorder %s724, %s738
      %p740 = scmp.eq.s32.totalorder %s90, 0
      %p741 = por %p739, %p740
      %s742 = ssub.s32 %s84, %s91
      %p743 = scmp.eq.s32.totalorder %s742, 0
      %s745 = sadd.s32 %s744, 1
      %s746 = scalar_select %p743, %s744, %s745
      %p749 = pneg %p743
      %p750 = scmp.eq.s32.totalorder %s84, 1
      %p751 = por %p749, %p750
      %p752 = scmp.ne.s32.totalorder %s744, %s747
      %p753 = scmp.eq.s32.totalorder %s84, 0
      %p754 = por %p752, %p753
      %p755 = scmp.ne.s32.totalorder %s744, %s747
      %p756 = scmp.eq.s32.totalorder %s89, 1
      %p757 = por %p755, %p756
      %p758 = scmp.ne.s32.totalorder %s747, %s748
      %p759 = scmp.eq.s32.totalorder %s89, 0
      %p760 = por %p758, %p759
      %p761 = scmp.ne.s32.totalorder %s747, %s748
      %p762 = scmp.eq.s32.totalorder %s90, 1
      %p763 = por %p761, %p762
      %p765 = scmp.ne.s32.totalorder %s748, %s764
      %p766 = scmp.eq.s32.totalorder %s90, 0
      %p767 = por %p765, %p766
      %p768 = scmp.le.s32.totalorder 1, %s84
      %p769 = scmp.lt.s32.totalorder %s84, 3
      %p770 = pnand %p768, %p769
      %p771 = pneg %p770
      // Predicated region
      $region9: #{tpu_custom_call.1} parent=5 // pred_check
        _
      $region10: #{tpu_custom_call.1} parent=5 // pred_check_branch
        %773 = sbr.rel (%p770) target = $region12
      $region11: #{tpu_custom_call.1} parent=5 // pred_region
        %s774 = ssub.s32 %s84, 1
        // Predicated region
        $region13: #{tpu_custom_call.1} parent=11 // pred_check
          %p775 = pneg %p209
        $region14: #{tpu_custom_call.1} parent=11 // pred_check_branch
          %777 = sbr.rel (%p775) target = $region16
        $region15: #{tpu_custom_call.1} parent=11 // pred_region
          _
        $region16: #{tpu_custom_call.1} parent=11 // pred_fallthru
          _
        // Predicated region
        $region17: #{tpu_custom_call.1} parent=11 // pred_check
          %p778 = pneg %p230
        $region18: #{tpu_custom_call.1} parent=11 // pred_check_branch
          %780 = sbr.rel (%p778) target = $region20
        $region19: #{tpu_custom_call.1} parent=11 // pred_region
          _
        $region20: #{tpu_custom_call.1} parent=11 // pred_fallthru
          _
        // Predicated region
        $region21: #{tpu_custom_call.1} parent=11 // pred_check
          %p781 = pneg %p251
        $region22: #{tpu_custom_call.1} parent=11 // pred_check_branch
          %783 = sbr.rel (%p781) target = $region24
        $region23: #{tpu_custom_call.1} parent=11 // pred_region
          %s785 = ssub.s32 1024, 1024
          %786 = vsyncadd [#allocation10], %s785
          %s787 = sshll.u32 [#allocation11], 4
          %s788 = int_to_ptr.vmem [resolvable:$true] %s787
          %793 = dma.hbm_to_vmem [thread:$0]  %s13, 1024, %s788, [#allocation10], 64, 64, 4
        $region24: #{tpu_custom_call.1} parent=11 // pred_fallthru
          _
        // Predicated region
        $region25: #{tpu_custom_call.1} parent=11 // pred_check
          %p794 = pneg %p272
        $region26: #{tpu_custom_call.1} parent=11 // pred_check_branch
          %796 = sbr.rel (%p794) target = $region28
        $region27: #{tpu_custom_call.1} parent=11 // pred_region
          _
        $region28: #{tpu_custom_call.1} parent=11 // pred_fallthru
          _
        // Predicated region
        $region29: #{tpu_custom_call.1} parent=11 // pred_check
          %p797 = pneg %p293
        $region30: #{tpu_custom_call.1} parent=11 // pred_check_branch
          %799 = sbr.rel (%p797) target = $region32
        $region31: #{tpu_custom_call.1} parent=11 // pred_region
          %s801 = ssub.s32 1024, 1024
          %802 = vsyncadd [#allocation13], %s801
          %s803 = sshll.u32 [#allocation12], 4
          %s804 = int_to_ptr.vmem [resolvable:$true] %s803
          %809 = dma.hbm_to_vmem [thread:$0]  %s17, 1024, %s804, [#allocation13], 64, 64, 4
        $region32: #{tpu_custom_call.1} parent=11 // pred_fallthru
          _
        // Predicated region
        $region33: #{tpu_custom_call.1} parent=11 // pred_check
          %p810 = pneg %p314
        $region34: #{tpu_custom_call.1} parent=11 // pred_check_branch
          %812 = sbr.rel (%p810) target = $region36
        $region35: #{tpu_custom_call.1} parent=11 // pred_region
          _
        $region36: #{tpu_custom_call.1} parent=11 // pred_fallthru
          _
        // Predicated region
        $region37: #{tpu_custom_call.1} parent=11 // pred_check
          %p813 = pneg %p335
        $region38: #{tpu_custom_call.1} parent=11 // pred_check_branch
          %815 = sbr.rel (%p813) target = $region40
        $region39: #{tpu_custom_call.1} parent=11 // pred_region
          %s817 = ssub.s32 1024, 1024
          %818 = vsyncadd [#allocation13], %s817
          %s819 = sshll.u32 [#allocation14], 4
          %s820 = int_to_ptr.vmem [resolvable:$true] %s819
          %825 = dma.hbm_to_vmem [thread:$0]  %s21, 1024, %s820, [#allocation13], 64, 64, 4
        $region40: #{tpu_custom_call.1} parent=11 // pred_fallthru
          _
        // Predicated region
        $region41: #{tpu_custom_call.1} parent=11 // pred_check
          %p826 = pneg %p356
        $region42: #{tpu_custom_call.1} parent=11 // pred_check_branch
          %828 = sbr.rel (%p826) target = $region44
        $region43: #{tpu_custom_call.1} parent=11 // pred_region
          _
        $region44: #{tpu_custom_call.1} parent=11 // pred_fallthru
          _
        // Predicated region
        $region45: #{tpu_custom_call.1} parent=11 // pred_check
          %p829 = pneg %p377
        $region46: #{tpu_custom_call.1} parent=11 // pred_check_branch
          %831 = sbr.rel (%p829) target = $region48
        $region47: #{tpu_custom_call.1} parent=11 // pred_region
          %s833 = ssub.s32 1024, 1024
          %834 = vsyncadd [#allocation16], %s833
          %s835 = sshll.u32 [#allocation15], 4
          %s836 = int_to_ptr.vmem [resolvable:$true] %s835
          %841 = dma.hbm_to_vmem [thread:$0]  %s25, 1024, %s836, [#allocation16], 64, 64, 4
        $region48: #{tpu_custom_call.1} parent=11 // pred_fallthru
          _
        // Predicated region
        $region49: #{tpu_custom_call.1} parent=11 // pred_check
          %p842 = pneg %p398
        $region50: #{tpu_custom_call.1} parent=11 // pred_check_branch
          %844 = sbr.rel (%p842) target = $region52
        $region51: #{tpu_custom_call.1} parent=11 // pred_region
          _
        $region52: #{tpu_custom_call.1} parent=11 // pred_fallthru
          _
        // Predicated region
        $region53: #{tpu_custom_call.1} parent=11 // pred_check
          %p845 = pneg %p419
        $region54: #{tpu_custom_call.1} parent=11 // pred_check_branch
          %847 = sbr.rel (%p845) target = $region56
        $region55: #{tpu_custom_call.1} parent=11 // pred_region
          _
        $region56: #{tpu_custom_call.1} parent=11 // pred_fallthru
          _
        // Predicated region
        $region57: #{tpu_custom_call.1} parent=11 // pred_check
          %p848 = pneg %p440
        $region58: #{tpu_custom_call.1} parent=11 // pred_check_branch
          %850 = sbr.rel (%p848) target = $region60
        $region59: #{tpu_custom_call.1} parent=11 // pred_region
          _
        $region60: #{tpu_custom_call.1} parent=11 // pred_fallthru
          _
        // Predicated region
        $region61: #{tpu_custom_call.1} parent=11 // pred_check
          %p851 = pneg %p461
        $region62: #{tpu_custom_call.1} parent=11 // pred_check_branch
          %853 = sbr.rel (%p851) target = $region64
        $region63: #{tpu_custom_call.1} parent=11 // pred_region
          %s855 = ssub.s32 1024, 1024
          %856 = vsyncadd [#allocation16], %s855
          %s857 = sshll.u32 [#allocation17], 4
          %s858 = int_to_ptr.vmem [resolvable:$true] %s857
          %863 = dma.hbm_to_vmem [thread:$0]  %s33, 1024, %s858, [#allocation16], 64, 64, 4
        $region64: #{tpu_custom_call.1} parent=11 // pred_fallthru
          _
        // Predicated region
        $region65: #{tpu_custom_call.1} parent=11 // pred_check
          %p864 = pneg %p482
        $region66: #{tpu_custom_call.1} parent=11 // pred_check_branch
          %866 = sbr.rel (%p864) target = $region68
        $region67: #{tpu_custom_call.1} parent=11 // pred_region
          _
        $region68: #{tpu_custom_call.1} parent=11 // pred_fallthru
          _
        // Predicated region
        $region69: #{tpu_custom_call.1} parent=11 // pred_check
          %p867 = pneg %p503
        $region70: #{tpu_custom_call.1} parent=11 // pred_check_branch
          %869 = sbr.rel (%p867) target = $region72
        $region71: #{tpu_custom_call.1} parent=11 // pred_region
          %s871 = ssub.s32 1024, 1024
          %872 = vsyncadd [#allocation19], %s871
          %s873 = sshll.u32 [#allocation18], 4
          %s874 = int_to_ptr.vmem [resolvable:$true] %s873
          %879 = dma.hbm_to_vmem [thread:$0]  %s37, 1024, %s874, [#allocation19], 64, 64, 4
        $region72: #{tpu_custom_call.1} parent=11 // pred_fallthru
          _
        // Predicated region
        $region73: #{tpu_custom_call.1} parent=11 // pred_check
          %p880 = pneg %p524
        $region74: #{tpu_custom_call.1} parent=11 // pred_check_branch
          %882 = sbr.rel (%p880) target = $region76
        $region75: #{tpu_custom_call.1} parent=11 // pred_region
          _
        $region76: #{tpu_custom_call.1} parent=11 // pred_fallthru
          _
        // Predicated region
        $region77: #{tpu_custom_call.1} parent=11 // pred_check
          %p883 = pneg %p545
        $region78: #{tpu_custom_call.1} parent=11 // pred_check_branch
          %885 = sbr.rel (%p883) target = $region80
        $region79: #{tpu_custom_call.1} parent=11 // pred_region
          %s887 = ssub.s32 1024, 1024
          %888 = vsyncadd [#allocation19], %s887
          %s889 = sshll.u32 [#allocation20], 4
          %s890 = int_to_ptr.vmem [resolvable:$true] %s889
          %895 = dma.hbm_to_vmem [thread:$0]  %s41, 1024, %s890, [#allocation19], 64, 64, 4
        $region80: #{tpu_custom_call.1} parent=11 // pred_fallthru
          _
        // Predicated region
        $region81: #{tpu_custom_call.1} parent=11 // pred_check
          %p896 = pneg %p566
        $region82: #{tpu_custom_call.1} parent=11 // pred_check_branch
          %898 = sbr.rel (%p896) target = $region84
        $region83: #{tpu_custom_call.1} parent=11 // pred_region
          _
        $region84: #{tpu_custom_call.1} parent=11 // pred_fallthru
          _
        // Predicated region
        $region85: #{tpu_custom_call.1} parent=11 // pred_check
          %p899 = pneg %p587
        $region86: #{tpu_custom_call.1} parent=11 // pred_check_branch
          %901 = sbr.rel (%p899) target = $region88
        $region87: #{tpu_custom_call.1} parent=11 // pred_region
          %s903 = ssub.s32 1024, 1024
          %904 = vsyncadd [#allocation22], %s903
          %s905 = sshll.u32 [#allocation21], 4
          %s906 = int_to_ptr.vmem [resolvable:$true] %s905
          %911 = dma.hbm_to_vmem [thread:$0]  %s45, 1024, %s906, [#allocation22], 64, 64, 4
        $region88: #{tpu_custom_call.1} parent=11 // pred_fallthru
          _
        // Predicated region
        $region89: #{tpu_custom_call.1} parent=11 // pred_check
          %p912 = pneg %p608
        $region90: #{tpu_custom_call.1} parent=11 // pred_check_branch
          %914 = sbr.rel (%p912) target = $region92
        $region91: #{tpu_custom_call.1} parent=11 // pred_region
          _
        $region92: #{tpu_custom_call.1} parent=11 // pred_fallthru
          _
        // Predicated region
        $region93: #{tpu_custom_call.1} parent=11 // pred_check
          %p915 = pneg %p629
        $region94: #{tpu_custom_call.1} parent=11 // pred_check_branch
          %917 = sbr.rel (%p915) target = $region96
        $region95: #{tpu_custom_call.1} parent=11 // pred_region
          _
        $region96: #{tpu_custom_call.1} parent=11 // pred_fallthru
          _
        // Predicated region
        $region97: #{tpu_custom_call.1} parent=11 // pred_check
          %p918 = pneg %p650
        $region98: #{tpu_custom_call.1} parent=11 // pred_check_branch
          %920 = sbr.rel (%p918) target = $region100
        $region99: #{tpu_custom_call.1} parent=11 // pred_region
          _
        $region100: #{tpu_custom_call.1} parent=11 // pred_fallthru
          _
        // Predicated region
        $region101: #{tpu_custom_call.1} parent=11 // pred_check
          %p921 = pneg %p671
        $region102: #{tpu_custom_call.1} parent=11 // pred_check_branch
          %923 = sbr.rel (%p921) target = $region104
        $region103: #{tpu_custom_call.1} parent=11 // pred_region
          %s925 = ssub.s32 2048, 2048
          %926 = vsyncadd [#allocation22], %s925
          %s927 = sshll.u32 [#allocation23], 4
          %s928 = int_to_ptr.vmem [resolvable:$true] %s927
          %933 = dma.hbm_to_vmem [thread:$0]  %s53, 2048, %s928, [#allocation22], 128, 128, 8
        $region104: #{tpu_custom_call.1} parent=11 // pred_fallthru
          _
        // Predicated region
        $region105: #{tpu_custom_call.1} parent=11 // pred_check
          %p934 = pneg %p692
        $region106: #{tpu_custom_call.1} parent=11 // pred_check_branch
          %936 = sbr.rel (%p934) target = $region108
        $region107: #{tpu_custom_call.1} parent=11 // pred_region
          _
        $region108: #{tpu_custom_call.1} parent=11 // pred_fallthru
          _
        // Predicated region
        $region109: #{tpu_custom_call.1} parent=11 // pred_check
          %p937 = pneg %p713
        $region110: #{tpu_custom_call.1} parent=11 // pred_check_branch
          %939 = sbr.rel (%p937) target = $region112
        $region111: #{tpu_custom_call.1} parent=11 // pred_region
          %s941 = ssub.s32 2048, 2048
          %942 = vsyncadd [#allocation25], %s941
          %s943 = sshll.u32 [#allocation24], 4
          %s944 = int_to_ptr.vmem [resolvable:$true] %s943
          %949 = dma.hbm_to_vmem [thread:$0]  %s57, 2048, %s944, [#allocation25], 64, 64, 4
        $region112: #{tpu_custom_call.1} parent=11 // pred_fallthru
          _
        // Predicated region
        $region113: #{tpu_custom_call.1} parent=11 // pred_check
          %p950 = pneg %p734
        $region114: #{tpu_custom_call.1} parent=11 // pred_check_branch
          %952 = sbr.rel (%p950) target = $region116
        $region115: #{tpu_custom_call.1} parent=11 // pred_region
          _
        $region116: #{tpu_custom_call.1} parent=11 // pred_fallthru
          _
      $region12: #{tpu_custom_call.1} parent=5 // pred_fallthru
        _
      %p953 = scmp.lt.s32.totalorder %s84, 2
      // Predicated region
      $region117: #{tpu_custom_call.1} parent=5 // pred_check
        %p954 = pneg %p953
      $region118: #{tpu_custom_call.1} parent=5 // pred_check_branch
        %956 = sbr.rel (%p954) target = $region120
      $region119: #{tpu_custom_call.1} parent=5 // pred_region
        // Predicated region
        $region121: #{tpu_custom_call.1} parent=119 // pred_check
          %p957 = pneg %p104
        $region122: #{tpu_custom_call.1} parent=119 // pred_check_branch
          %959 = sbr.rel (%p957) target = $region124
        $region123: #{tpu_custom_call.1} parent=119 // pred_region
          %s960 = sand.u32 %s94, 1
          %s961 = scalar_lea.sflag [#allocation4], %s960
          %s962 = sand.u32 %s94, 1
          %s963 = smul.addr %s962, 16
          %s964 = scalar_lea.vmem [#allocation3], %s963
          %s966 = ssub.s32 256, 256
          %967 = vsyncadd %s961, %s966
          %s968 = smul.addr %s84, 2
          %s969 = smul.addr %s968, 128
          %s970 = scalar_lea.hbm %s1, %s969
          %s971 = sshll.u32 %s964, 4
          %s972 = int_to_ptr.vmem [resolvable:$true] %s971
          %977 = dma.hbm_to_vmem [thread:$0]  %s970, 256, %s972, %s961, 128, 128, 8
        $region124: #{tpu_custom_call.1} parent=119 // pred_fallthru
          _
        // Predicated region
        $region125: #{tpu_custom_call.1} parent=119 // pred_check
          %p978 = pneg %p130
        $region126: #{tpu_custom_call.1} parent=119 // pred_check_branch
          %980 = sbr.rel (%p978) target = $region128
        $region127: #{tpu_custom_call.1} parent=119 // pred_region
          %s981 = sand.u32 %s84, 1
          %s982 = scalar_lea.sflag [#allocation7], %s981
          %s983 = sand.u32 %s120, 1
          %s984 = smul.addr %s983, 32
          %s985 = scalar_lea.vmem [#allocation6], %s984
          %s987 = ssub.s32 512, 512
          %988 = vsyncadd %s982, %s987
          %s989 = smul.addr %s84, 4
          %s990 = smul.addr %s989, 128
          %s991 = scalar_lea.hbm %s3, %s990
          %s992 = sshll.u32 %s985, 4
          %s993 = int_to_ptr.vmem [resolvable:$true] %s992
          %998 = dma.hbm_to_vmem [thread:$0]  %s991, 512, %s993, %s982, 128, 128, 8
        $region128: #{tpu_custom_call.1} parent=119 // pred_fallthru
          _
        // Predicated region
        $region129: #{tpu_custom_call.1} parent=119 // pred_check
          %p999 = pneg %p156
        $region130: #{tpu_custom_call.1} parent=119 // pred_check_branch
          %1001 = sbr.rel (%p999) target = $region132
        $region131: #{tpu_custom_call.1} parent=119 // pred_region
          %s1002 = sand.u32 %s84, 1
          %s1003 = scalar_lea.sflag [#allocation7], %s1002
          %s1004 = sand.u32 %s146, 1
          %s1005 = smul.addr %s1004, 16
          %s1006 = scalar_lea.vmem [#allocation8], %s1005
          %s1008 = ssub.s32 256, 256
          %1009 = vsyncadd %s1003, %s1008
          %s1010 = smul.addr %s84, 2
          %s1011 = smul.addr %s1010, 128
          %s1012 = scalar_lea.hbm %s5, %s1011
          %s1013 = sshll.u32 %s1006, 4
          %s1014 = int_to_ptr.vmem [resolvable:$true] %s1013
          %1019 = dma.hbm_to_vmem [thread:$0]  %s1012, 256, %s1014, %s1003, 128, 128, 8
        $region132: #{tpu_custom_call.1} parent=119 // pred_fallthru
          _
        // Predicated region
        $region133: #{tpu_custom_call.1} parent=119 // pred_check
          %p1020 = pneg %p182
        $region134: #{tpu_custom_call.1} parent=119 // pred_check_branch
          %1022 = sbr.rel (%p1020) target = $region136
        $region135: #{tpu_custom_call.1} parent=119 // pred_region
          %s1023 = sand.u32 %s84, 1
          %s1024 = scalar_lea.sflag [#allocation10], %s1023
          %s1025 = sand.u32 %s172, 1
          %s1026 = smul.addr %s1025, 32
          %s1027 = scalar_lea.vmem [#allocation9], %s1026
          %s1029 = ssub.s32 512, 512
          %1030 = vsyncadd %s1024, %s1029
          %s1031 = smul.addr %s84, 4
          %s1032 = smul.addr %s1031, 128
          %s1033 = scalar_lea.hbm %s7, %s1032
          %s1034 = sshll.u32 %s1027, 4
          %s1035 = int_to_ptr.vmem [resolvable:$true] %s1034
          %1040 = dma.hbm_to_vmem [thread:$0]  %s1033, 512, %s1035, %s1024, 128, 128, 8
        $region136: #{tpu_custom_call.1} parent=119 // pred_fallthru
          _
      $region120: #{tpu_custom_call.1} parent=5 // pred_fallthru
        _
      %p1041 = scmp.le.s32.totalorder 1, %s84
      %p1042 = scmp.lt.s32.totalorder %s84, 3
      %p1043 = pnand %p1041, %p1042
      %p1044 = pneg %p1043
      // Predicated region
      $region137: #{tpu_custom_call.1} parent=5 // pred_check
        _
      $region138: #{tpu_custom_call.1} parent=5 // pred_check_branch
        %1046 = sbr.rel (%p1043) target = $region140
      $region139: #{tpu_custom_call.1} parent=5 // pred_region
        %s1047 = ssub.s32 %s84, 1
        %s1048 = sand.u32 %s97, 1
        %s1049 = scalar_lea.sflag [#allocation4], %s1048
        %s1050 = sand.u32 %s97, 1
        %s1051 = smul.addr %s1050, 16
        %s1052 = scalar_lea.vmem [#allocation3], %s1051
        // Predicated region
        $region141: #{tpu_custom_call.1} parent=139 // pred_check
          %p1053 = pneg %p110
        $region142: #{tpu_custom_call.1} parent=139 // pred_check_branch
          %1055 = sbr.rel (%p1053) target = $region144
        $region143: #{tpu_custom_call.1} parent=139 // pred_region
          %1056 = dma.done %s1049, 256
        $region144: #{tpu_custom_call.1} parent=139 // pred_fallthru
          _
        %s1057 = sand.u32 %s89, 1
        %s1058 = scalar_lea.sflag [#allocation7], %s1057
        %s1059 = sand.u32 %s123, 1
        %s1060 = smul.addr %s1059, 32
        %s1061 = scalar_lea.vmem [#allocation6], %s1060
        // Predicated region
        $region145: #{tpu_custom_call.1} parent=139 // pred_check
          %p1062 = pneg %p136
        $region146: #{tpu_custom_call.1} parent=139 // pred_check_branch
          %1064 = sbr.rel (%p1062) target = $region148
        $region147: #{tpu_custom_call.1} parent=139 // pred_region
          %1065 = dma.done %s1058, 512
        $region148: #{tpu_custom_call.1} parent=139 // pred_fallthru
          _
        %s1066 = sand.u32 %s89, 1
        %s1067 = scalar_lea.sflag [#allocation7], %s1066
        %s1068 = sand.u32 %s149, 1
        %s1069 = smul.addr %s1068, 16
        %s1070 = scalar_lea.vmem [#allocation8], %s1069
        // Predicated region
        $region149: #{tpu_custom_call.1} parent=139 // pred_check
          %p1071 = pneg %p162
        $region150: #{tpu_custom_call.1} parent=139 // pred_check_branch
          %1073 = sbr.rel (%p1071) target = $region152
        $region151: #{tpu_custom_call.1} parent=139 // pred_region
          %1074 = dma.done %s1067, 256
        $region152: #{tpu_custom_call.1} parent=139 // pred_fallthru
          _
        %s1075 = sand.u32 %s89, 1
        %s1076 = scalar_lea.sflag [#allocation10], %s1075
        %s1077 = sand.u32 %s175, 1
        %s1078 = smul.addr %s1077, 32
        %s1079 = scalar_lea.vmem [#allocation9], %s1078
        // Predicated region
        $region153: #{tpu_custom_call.1} parent=139 // pred_check
          %p1080 = pneg %p188
        $region154: #{tpu_custom_call.1} parent=139 // pred_check_branch
          %1082 = sbr.rel (%p1080) target = $region156
        $region155: #{tpu_custom_call.1} parent=139 // pred_region
          %1083 = dma.done %s1076, 512
        $region156: #{tpu_custom_call.1} parent=139 // pred_fallthru
          _
        // Predicated region
        $region157: #{tpu_custom_call.1} parent=139 // pred_check
          %p1084 = pneg %p251
        $region158: #{tpu_custom_call.1} parent=139 // pred_check_branch
          %1086 = sbr.rel (%p1084) target = $region160
        $region159: #{tpu_custom_call.1} parent=139 // pred_region
          %1087 = dma.done [#allocation10], 1024
        $region160: #{tpu_custom_call.1} parent=139 // pred_fallthru
          _
        // Predicated region
        $region161: #{tpu_custom_call.1} parent=139 // pred_check
          %p1088 = pneg %p293
        $region162: #{tpu_custom_call.1} parent=139 // pred_check_branch
          %1090 = sbr.rel (%p1088) target = $region164
        $region163: #{tpu_custom_call.1} parent=139 // pred_region
          %1091 = dma.done [#allocation13], 1024
        $region164: #{tpu_custom_call.1} parent=139 // pred_fallthru
          _
        // Predicated region
        $region165: #{tpu_custom_call.1} parent=139 // pred_check
          %p1092 = pneg %p335
        $region166: #{tpu_custom_call.1} parent=139 // pred_check_branch
          %1094 = sbr.rel (%p1092) target = $region168
        $region167: #{tpu_custom_call.1} parent=139 // pred_region
          %1095 = dma.done [#allocation13], 1024
        $region168: #{tpu_custom_call.1} parent=139 // pred_fallthru
          _
        // Predicated region
        $region169: #{tpu_custom_call.1} parent=139 // pred_check
          %p1096 = pneg %p377
        $region170: #{tpu_custom_call.1} parent=139 // pred_check_branch
          %1098 = sbr.rel (%p1096) target = $region172
        $region171: #{tpu_custom_call.1} parent=139 // pred_region
          %1099 = dma.done [#allocation16], 1024
        $region172: #{tpu_custom_call.1} parent=139 // pred_fallthru
          _
        // Predicated region
        $region173: #{tpu_custom_call.1} parent=139 // pred_check
          %p1100 = pneg %p461
        $region174: #{tpu_custom_call.1} parent=139 // pred_check_branch
          %1102 = sbr.rel (%p1100) target = $region176
        $region175: #{tpu_custom_call.1} parent=139 // pred_region
          %1103 = dma.done [#allocation16], 1024
        $region176: #{tpu_custom_call.1} parent=139 // pred_fallthru
          _
        // Predicated region
        $region177: #{tpu_custom_call.1} parent=139 // pred_check
          %p1104 = pneg %p503
        $region178: #{tpu_custom_call.1} parent=139 // pred_check_branch
          %1106 = sbr.rel (%p1104) target = $region180
        $region179: #{tpu_custom_call.1} parent=139 // pred_region
          %1107 = dma.done [#allocation19], 1024
        $region180: #{tpu_custom_call.1} parent=139 // pred_fallthru
          _
        // Predicated region
        $region181: #{tpu_custom_call.1} parent=139 // pred_check
          %p1108 = pneg %p545
        $region182: #{tpu_custom_call.1} parent=139 // pred_check_branch
          %1110 = sbr.rel (%p1108) target = $region184
        $region183: #{tpu_custom_call.1} parent=139 // pred_region
          %1111 = dma.done [#allocation19], 1024
        $region184: #{tpu_custom_call.1} parent=139 // pred_fallthru
          _
        // Predicated region
        $region185: #{tpu_custom_call.1} parent=139 // pred_check
          %p1112 = pneg %p587
        $region186: #{tpu_custom_call.1} parent=139 // pred_check_branch
          %1114 = sbr.rel (%p1112) target = $region188
        $region187: #{tpu_custom_call.1} parent=139 // pred_region
          %1115 = dma.done [#allocation22], 1024
        $region188: #{tpu_custom_call.1} parent=139 // pred_fallthru
          _
        // Predicated region
        $region189: #{tpu_custom_call.1} parent=139 // pred_check
          %p1116 = pneg %p671
        $region190: #{tpu_custom_call.1} parent=139 // pred_check_branch
          %1118 = sbr.rel (%p1116) target = $region192
        $region191: #{tpu_custom_call.1} parent=139 // pred_region
          %1119 = dma.done [#allocation22], 2048
        $region192: #{tpu_custom_call.1} parent=139 // pred_fallthru
          _
        // Predicated region
        $region193: #{tpu_custom_call.1} parent=139 // pred_check
          %p1120 = pneg %p713
        $region194: #{tpu_custom_call.1} parent=139 // pred_check_branch
          %1122 = sbr.rel (%p1120) target = $region196
        $region195: #{tpu_custom_call.1} parent=139 // pred_region
          %1123 = dma.done [#allocation25], 2048
        $region196: #{tpu_custom_call.1} parent=139 // pred_fallthru
          _
        %s1124 = sand.u32 %s97, 1
        %s1125 = scalar_lea.sflag [#allocation4], %s1124
        %s1126 = sand.u32 %s97, 1
        %s1127 = smul.addr %s1126, 16
        %s1128 = scalar_lea.vmem [#allocation3], %s1127
        %p1129 = pneg %p110
        %p1130 = pneg %p107
        %s1131 = sand.u32 %s89, 1
        %s1132 = scalar_lea.sflag [#allocation7], %s1131
        %s1133 = sand.u32 %s123, 1
        %s1134 = smul.addr %s1133, 32
        %s1135 = scalar_lea.vmem [#allocation6], %s1134
        %p1136 = pneg %p136
        %p1137 = pneg %p133
        %s1138 = sand.u32 %s89, 1
        %s1139 = scalar_lea.sflag [#allocation7], %s1138
        %s1140 = sand.u32 %s149, 1
        %s1141 = smul.addr %s1140, 16
        %s1142 = scalar_lea.vmem [#allocation8], %s1141
        %p1143 = pneg %p162
        %p1144 = pneg %p159
        %s1145 = sand.u32 %s89, 1
        %s1146 = scalar_lea.sflag [#allocation10], %s1145
        %s1147 = sand.u32 %s175, 1
        %s1148 = smul.addr %s1147, 32
        %s1149 = scalar_lea.vmem [#allocation9], %s1148
        %p1150 = pneg %p188
        %p1151 = pneg %p185
        %p1152 = pneg %p209
        %p1153 = pneg %p206
        %p1154 = pneg %p230
        %p1155 = pneg %p227
        %p1156 = pneg %p251
        %p1157 = pneg %p248
        %p1158 = pneg %p272
        %p1159 = pneg %p269
        %p1160 = pneg %p293
        %p1161 = pneg %p290
        %p1162 = pneg %p314
        %p1163 = pneg %p311
        %p1164 = pneg %p335
        %p1165 = pneg %p332
        %p1166 = pneg %p356
        %p1167 = pneg %p353
        %p1168 = pneg %p377
        %p1169 = pneg %p374
        %p1170 = pneg %p398
        %p1171 = pneg %p395
        %p1172 = pneg %p419
        %p1173 = pneg %p416
        %p1174 = pneg %p440
        %p1175 = pneg %p437
        %p1176 = pneg %p461
        %p1177 = pneg %p458
        %p1178 = pneg %p482
        %p1179 = pneg %p479
        %p1180 = pneg %p503
        %p1181 = pneg %p500
        %p1182 = pneg %p524
        %p1183 = pneg %p521
        %p1184 = pneg %p545
        %p1185 = pneg %p542
        %p1186 = pneg %p566
        %p1187 = pneg %p563
        %p1188 = pneg %p587
        %p1189 = pneg %p584
        %p1190 = pneg %p608
        %p1191 = pneg %p605
        %p1192 = pneg %p629
        %p1193 = pneg %p626
        %p1194 = pneg %p650
        %p1195 = pneg %p647
        %p1196 = pneg %p671
        %p1197 = pneg %p668
        %p1198 = pneg %p692
        %p1199 = pneg %p689
        %p1200 = pneg %p713
        %p1201 = pneg %p710
        %p1202 = pneg %p734
        %p1203 = pneg %p731
        %p1204 = pneg %p760
        %p1205 = pneg %p757
        %s1206 = sand.u32 %s747, 1
        %s1207 = scalar_lea.sflag [#allocation5], %s1206
        %s1208 = sand.u32 %s747, 1
        %s1209 = smul.addr %s1208, 16
        %s1210 = scalar_lea.vmem [#allocation26], %s1209
        %v1212 = vld [vmem:[%s1052] sm:$0xff]
        %v1213 = vld [vmem:[%s1052 + $0x8] sm:$0xff]
        %v1214 = vld [vmem:[%s1061] sm:$0xff]
        %v1215 = vld [vmem:[%s1061 + $0x8] sm:$0xff]
        %v1216 = vld [vmem:[%s1061 + $0x10] sm:$0xff]
        %v1217 = vld [vmem:[%s1061 + $0x18] sm:$0xff]
        %v1218 = vld [vmem:[%s1070] sm:$0xff]
        %v1219 = vld [vmem:[%s1070 + $0x8] sm:$0xff]
        %v1220 = vld [vmem:[%s1079] sm:$0xff]
        %v1221 = vld [vmem:[%s1079 + $0x8] sm:$0xff]
        %v1222 = vld [vmem:[%s1079 + $0x10] sm:$0xff]
        %v1223 = vld [vmem:[%s1079 + $0x18] sm:$0xff]
        %1224 = vadd.xlane.f32.xlu0 %v1212
        %v1225 = vpop.xlane.xlu0 %1224
        %1226 = vadd.xlane.f32.xlu0 %v1213
        %v1227 = vpop.xlane.xlu0 %1226
        %v1228 = vrcp.pop 128.0
        %v1229 = vmul.f32 %v1225, %v1228
        %v1230 = vmul.f32 %v1227, %v1228
        %v1231 = vsub.f32 %v1212, %v1229
        %v1232 = vsub.f32 %v1213, %v1230
        %v1233 = vmul.f32 %v1231, %v1231
        %v1234 = vmul.f32 %v1232, %v1232
        %1235 = vadd.xlane.f32.xlu0 %v1233
        %v1236 = vpop.xlane.xlu0 %1235
        %1237 = vadd.xlane.f32.xlu0 %v1234
        %v1238 = vpop.xlane.xlu0 %1237
        %v1239 = vmul.f32 %v1236, %v1228
        %v1240 = vmul.f32 %v1238, %v1228
        %v1241 = vadd.f32 %v1239, 1e-05
        %v1242 = vadd.f32 %v1240, 1e-05
        %v1243 = vrsqrt.pop %v1241
        %v1244 = vrsqrt.pop %v1242
        %v1245 = vmul.f32 %v1231, %v1243
        %v1246 = vmul.f32 %v1232, %v1244
        %v1247 = vld [vmem:[%s9] sm:$0x1]
        %v1249 = vlaneseq
        %v1250 = vshrl.u32 %v1249, 7
        %v1251 = vsub.s32 0, %v1250
        %v1252 = vrot.slane %v1247, %v1251
        %v1254 = vmul.f32 %v1245, %v1252
        %v1255 = vmul.f32 %v1246, %v1252
        %v1256 = vld [vmem:[%s11] sm:$0x1]
        %v1258 = vlaneseq
        %v1259 = vshrl.u32 %v1258, 7
        %v1260 = vsub.s32 0, %v1259
        %v1261 = vrot.slane %v1256, %v1260
        %v1263 = vadd.f32 %v1254, %v1261
        %v1264 = vadd.f32 %v1255, %v1261
        %v1265 = vadd.f32 %v1263, %v1218
        %v1266 = vadd.f32 %v1264, %v1219
        %v1267 = vpack.c.bf16 %v1266, %v1265
        %v1268 = vld [vmem:[#allocation11] sm:$0xf]
        %v1269 = vld [vmem:[#allocation11 + $0x4] sm:$0xf]
        %v1270 = vld [vmem:[#allocation11 + $0x8] sm:$0xf]
        %v1271 = vld [vmem:[#allocation11 + $0xc] sm:$0xf]
        %v1272 = vld [vmem:[#allocation11 + $0x10] sm:$0xf]
        %v1273 = vld [vmem:[#allocation11 + $0x14] sm:$0xf]
        %v1274 = vld [vmem:[#allocation11 + $0x18] sm:$0xf]
        %v1275 = vld [vmem:[#allocation11 + $0x1c] sm:$0xf]
        %v1276 = vld [vmem:[#allocation11 + $0x20] sm:$0xf]
        %v1277 = vld [vmem:[#allocation11 + $0x24] sm:$0xf]
        %v1278 = vld [vmem:[#allocation11 + $0x28] sm:$0xf]
        %v1279 = vld [vmem:[#allocation11 + $0x2c] sm:$0xf]
        %v1280 = vld [vmem:[#allocation11 + $0x30] sm:$0xf]
        %v1281 = vld [vmem:[#allocation11 + $0x34] sm:$0xf]
        %v1282 = vld [vmem:[#allocation11 + $0x38] sm:$0xf]
        %v1283 = vld [vmem:[#allocation11 + $0x3c] sm:$0xf]
        %v1284 = vld [vmem:[%s15] sm:$0x1]
        %v1286 = vlaneseq
        %v1287 = vshrl.u32 %v1286, 7
        %v1288 = vsub.s32 0, %v1287
        %v1289 = vrot.slane %v1284, %v1288
        %v1307 = vunpack.c.l.b16 %v1268
        %v1308 = vunpack.c.l.b16 %v1269
        %v1309 = vunpack.c.l.b16 %v1270
        %v1310 = vunpack.c.l.b16 %v1271
        %v1311 = vunpack.c.l.b16 %v1272
        %v1312 = vunpack.c.l.b16 %v1273
        %v1313 = vunpack.c.l.b16 %v1274
        %v1314 = vunpack.c.l.b16 %v1275
        %v1315 = vunpack.c.l.b16 %v1276
        %v1316 = vunpack.c.l.b16 %v1277
        %v1317 = vunpack.c.l.b16 %v1278
        %v1318 = vunpack.c.l.b16 %v1279
        %v1319 = vunpack.c.l.b16 %v1280
        %v1320 = vunpack.c.l.b16 %v1281
        %v1321 = vunpack.c.l.b16 %v1282
        %v1322 = vunpack.c.l.b16 %v1283
        %v1323 = vpack.c.b16 %v1308, %v1307
        %v1324 = vpack.c.b16 %v1310, %v1309
        %v1325 = vpack.c.b16 %v1312, %v1311
        %v1326 = vpack.c.b16 %v1314, %v1313
        %v1327 = vpack.c.b16 %v1316, %v1315
        %v1328 = vpack.c.b16 %v1318, %v1317
        %v1329 = vpack.c.b16 %v1320, %v1319
        %v1330 = vpack.c.b16 %v1322, %v1321
        %1339 = vmatprep.subr.bf16.mxu0 0
        %1340 = vmatpush1.bf16.msra.mxu0 %v1330
        %1341 = vmatprep.subr.bf16.mxu0 0
        %1342 = vmatpush1.bf16.msra.mxu0 %v1329
        %1343 = vmatprep.subr.bf16.mxu0 0
        %1344 = vmatpush1.bf16.msra.mxu0 %v1328
        %1345 = vmatprep.subr.bf16.mxu0 0
        %1346 = vmatpush1.bf16.msra.mxu0 %v1327
        %1347 = vmatprep.subr.bf16.mxu0 0
        %1348 = vmatpush1.bf16.msra.mxu0 %v1326
        %1349 = vmatprep.subr.bf16.mxu0 0
        %1350 = vmatpush1.bf16.msra.mxu0 %v1325
        %1351 = vmatprep.subr.bf16.mxu0 0
        %1352 = vmatpush1.bf16.msra.mxu0 %v1324
        %1353 = vmatprep.subr.bf16.mxu0 0
        %1354 = vmatpush1.bf16.msra.mxu0 %v1323
        %1355 = vmatprep.subr.bf16.mxu0 0
        %1356 = vmatpush2.bf16.msra.mxu0 0
        %1357 = vmatprep.subr.bf16.mxu0 0
        %1358 = vmatpush2.bf16.msra.mxu0 0
        %1359 = vmatprep.subr.bf16.mxu0 0
        %1360 = vmatpush2.bf16.msra.mxu0 0
        %1361 = vmatprep.subr.bf16.mxu0 0
        %1362 = vmatpush2.bf16.msra.mxu0 0
        %1363 = vmatprep.subr.bf16.mxu0 0
        %1364 = vmatpush2.bf16.msra.mxu0 0
        %1365 = vmatprep.subr.bf16.mxu0 0
        %1366 = vmatpush2.bf16.msra.mxu0 0
        %1367 = vmatprep.subr.bf16.mxu0 0
        %1368 = vmatpush2.bf16.msra.mxu0 0
        %1369 = vmatprep.subr.bf16.mxu0 0
        %1370 = vmatpush2.bf16.msra.mxu0 0
        %1371 = vmatprep.mubr.bf16.mxu0 0
        %1372 = vmatmul.mubr.bf16.gmra.mxu0 %v1267
        %v1373 = vpop.f32.mrf.mxu0
        %v1374 = vadd.f32 %v1289, %v1373
        %v1375 = vpop.f32.mrf.mxu0
        %v1376 = vpop.f32.mrf.mxu0
        %v1377 = vadd.f32 %v1289, %v1376
        %v1378 = vpop.f32.mrf.mxu0
        %1379 = vdwg.mxu0
        %v1380 = vld [vmem:[#allocation12] sm:$0xf]
        %v1381 = vld [vmem:[#allocation12 + $0x4] sm:$0xf]
        %v1382 = vld [vmem:[#allocation12 + $0x8] sm:$0xf]
        %v1383 = vld [vmem:[#allocation12 + $0xc] sm:$0xf]
        %v1384 = vld [vmem:[#allocation12 + $0x10] sm:$0xf]
        %v1385 = vld [vmem:[#allocation12 + $0x14] sm:$0xf]
        %v1386 = vld [vmem:[#allocation12 + $0x18] sm:$0xf]
        %v1387 = vld [vmem:[#allocation12 + $0x1c] sm:$0xf]
        %v1388 = vld [vmem:[#allocation12 + $0x20] sm:$0xf]
        %v1389 = vld [vmem:[#allocation12 + $0x24] sm:$0xf]
        %v1390 = vld [vmem:[#allocation12 + $0x28] sm:$0xf]
        %v1391 = vld [vmem:[#allocation12 + $0x2c] sm:$0xf]
        %v1392 = vld [vmem:[#allocation12 + $0x30] sm:$0xf]
        %v1393 = vld [vmem:[#allocation12 + $0x34] sm:$0xf]
        %v1394 = vld [vmem:[#allocation12 + $0x38] sm:$0xf]
        %v1395 = vld [vmem:[#allocation12 + $0x3c] sm:$0xf]
        %v1396 = vld [vmem:[%s19] sm:$0x1]
        %v1398 = vlaneseq
        %v1399 = vshrl.u32 %v1398, 7
        %v1400 = vsub.s32 0, %v1399
        %v1401 = vrot.slane %v1396, %v1400
        %v1419 = vunpack.c.l.b16 %v1380
        %v1420 = vunpack.c.l.b16 %v1381
        %v1421 = vunpack.c.l.b16 %v1382
        %v1422 = vunpack.c.l.b16 %v1383
        %v1423 = vunpack.c.l.b16 %v1384
        %v1424 = vunpack.c.l.b16 %v1385
        %v1425 = vunpack.c.l.b16 %v1386
        %v1426 = vunpack.c.l.b16 %v1387
        %v1427 = vunpack.c.l.b16 %v1388
        %v1428 = vunpack.c.l.b16 %v1389
        %v1429 = vunpack.c.l.b16 %v1390
        %v1430 = vunpack.c.l.b16 %v1391
        %v1431 = vunpack.c.l.b16 %v1392
        %v1432 = vunpack.c.l.b16 %v1393
        %v1433 = vunpack.c.l.b16 %v1394
        %v1434 = vunpack.c.l.b16 %v1395
        %v1435 = vpack.c.b16 %v1420, %v1419
        %v1436 = vpack.c.b16 %v1422, %v1421
        %v1437 = vpack.c.b16 %v1424, %v1423
        %v1438 = vpack.c.b16 %v1426, %v1425
        %v1439 = vpack.c.b16 %v1428, %v1427
        %v1440 = vpack.c.b16 %v1430, %v1429
        %v1441 = vpack.c.b16 %v1432, %v1431
        %v1442 = vpack.c.b16 %v1434, %v1433
        %1451 = vmatprep.subr.bf16.mxu0 0
        %1452 = vmatpush1.bf16.msra.mxu0 %v1442
        %1453 = vmatprep.subr.bf16.mxu0 0
        %1454 = vmatpush1.bf16.msra.mxu0 %v1441
        %1455 = vmatprep.subr.bf16.mxu0 0
        %1456 = vmatpush1.bf16.msra.mxu0 %v1440
        %1457 = vmatprep.subr.bf16.mxu0 0
        %1458 = vmatpush1.bf16.msra.mxu0 %v1439
        %1459 = vmatprep.subr.bf16.mxu0 0
        %1460 = vmatpush1.bf16.msra.mxu0 %v1438
        %1461 = vmatprep.subr.bf16.mxu0 0
        %1462 = vmatpush1.bf16.msra.mxu0 %v1437
        %1463 = vmatprep.subr.bf16.mxu0 0
        %1464 = vmatpush1.bf16.msra.mxu0 %v1436
        %1465 = vmatprep.subr.bf16.mxu0 0
        %1466 = vmatpush1.bf16.msra.mxu0 %v1435
        %1467 = vmatprep.subr.bf16.mxu0 0
        %1468 = vmatpush2.bf16.msra.mxu0 0
        %1469 = vmatprep.subr.bf16.mxu0 0
        %1470 = vmatpush2.bf16.msra.mxu0 0
        %1471 = vmatprep.subr.bf16.mxu0 0
        %1472 = vmatpush2.bf16.msra.mxu0 0
        %1473 = vmatprep.subr.bf16.mxu0 0
        %1474 = vmatpush2.bf16.msra.mxu0 0
        %1475 = vmatprep.subr.bf16.mxu0 0
        %1476 = vmatpush2.bf16.msra.mxu0 0
        %1477 = vmatprep.subr.bf16.mxu0 0
        %1478 = vmatpush2.bf16.msra.mxu0 0
        %1479 = vmatprep.subr.bf16.mxu0 0
        %1480 = vmatpush2.bf16.msra.mxu0 0
        %1481 = vmatprep.subr.bf16.mxu0 0
        %1482 = vmatpush2.bf16.msra.mxu0 0
        %1483 = vmatprep.mubr.bf16.mxu0 0
        %1484 = vmatmul.mubr.bf16.gmra.mxu0 %v1267
        %v1485 = vpop.f32.mrf.mxu0
        %v1486 = vadd.f32 %v1401, %v1485
        %v1487 = vpop.f32.mrf.mxu0
        %v1488 = vpop.f32.mrf.mxu0
        %v1489 = vadd.f32 %v1401, %v1488
        %v1490 = vpop.f32.mrf.mxu0
        %1491 = vdwg.mxu0
        %v1492 = vpack.c.bf16 %v1264, %v1263
        %v1493 = vld [vmem:[#allocation14] sm:$0xf]
        %v1494 = vld [vmem:[#allocation14 + $0x4] sm:$0xf]
        %v1495 = vld [vmem:[#allocation14 + $0x8] sm:$0xf]
        %v1496 = vld [vmem:[#allocation14 + $0xc] sm:$0xf]
        %v1497 = vld [vmem:[#allocation14 + $0x10] sm:$0xf]
        %v1498 = vld [vmem:[#allocation14 + $0x14] sm:$0xf]
        %v1499 = vld [vmem:[#allocation14 + $0x18] sm:$0xf]
        %v1500 = vld [vmem:[#allocation14 + $0x1c] sm:$0xf]
        %v1501 = vld [vmem:[#allocation14 + $0x20] sm:$0xf]
        %v1502 = vld [vmem:[#allocation14 + $0x24] sm:$0xf]
        %v1503 = vld [vmem:[#allocation14 + $0x28] sm:$0xf]
        %v1504 = vld [vmem:[#allocation14 + $0x2c] sm:$0xf]
        %v1505 = vld [vmem:[#allocation14 + $0x30] sm:$0xf]
        %v1506 = vld [vmem:[#allocation14 + $0x34] sm:$0xf]
        %v1507 = vld [vmem:[#allocation14 + $0x38] sm:$0xf]
        %v1508 = vld [vmem:[#allocation14 + $0x3c] sm:$0xf]
        %v1509 = vld [vmem:[%s23] sm:$0x1]
        %v1511 = vlaneseq
        %v1512 = vshrl.u32 %v1511, 7
        %v1513 = vsub.s32 0, %v1512
        %v1514 = vrot.slane %v1509, %v1513
        %v1532 = vunpack.c.l.b16 %v1493
        %v1533 = vunpack.c.l.b16 %v1494
        %v1534 = vunpack.c.l.b16 %v1495
        %v1535 = vunpack.c.l.b16 %v1496
        %v1536 = vunpack.c.l.b16 %v1497
        %v1537 = vunpack.c.l.b16 %v1498
        %v1538 = vunpack.c.l.b16 %v1499
        %v1539 = vunpack.c.l.b16 %v1500
        %v1540 = vunpack.c.l.b16 %v1501
        %v1541 = vunpack.c.l.b16 %v1502
        %v1542 = vunpack.c.l.b16 %v1503
        %v1543 = vunpack.c.l.b16 %v1504
        %v1544 = vunpack.c.l.b16 %v1505
        %v1545 = vunpack.c.l.b16 %v1506
        %v1546 = vunpack.c.l.b16 %v1507
        %v1547 = vunpack.c.l.b16 %v1508
        %v1548 = vpack.c.b16 %v1533, %v1532
        %v1549 = vpack.c.b16 %v1535, %v1534
        %v1550 = vpack.c.b16 %v1537, %v1536
        %v1551 = vpack.c.b16 %v1539, %v1538
        %v1552 = vpack.c.b16 %v1541, %v1540
        %v1553 = vpack.c.b16 %v1543, %v1542
        %v1554 = vpack.c.b16 %v1545, %v1544
        %v1555 = vpack.c.b16 %v1547, %v1546
        %1564 = vmatprep.subr.bf16.mxu0 0
        %1565 = vmatpush1.bf16.msra.mxu0 %v1555
        %1566 = vmatprep.subr.bf16.mxu0 0
        %1567 = vmatpush1.bf16.msra.mxu0 %v1554
        %1568 = vmatprep.subr.bf16.mxu0 0
        %1569 = vmatpush1.bf16.msra.mxu0 %v1553
        %1570 = vmatprep.subr.bf16.mxu0 0
        %1571 = vmatpush1.bf16.msra.mxu0 %v1552
        %1572 = vmatprep.subr.bf16.mxu0 0
        %1573 = vmatpush1.bf16.msra.mxu0 %v1551
        %1574 = vmatprep.subr.bf16.mxu0 0
        %1575 = vmatpush1.bf16.msra.mxu0 %v1550
        %1576 = vmatprep.subr.bf16.mxu0 0
        %1577 = vmatpush1.bf16.msra.mxu0 %v1549
        %1578 = vmatprep.subr.bf16.mxu0 0
        %1579 = vmatpush1.bf16.msra.mxu0 %v1548
        %1580 = vmatprep.subr.bf16.mxu0 0
        %1581 = vmatpush2.bf16.msra.mxu0 0
        %1582 = vmatprep.subr.bf16.mxu0 0
        %1583 = vmatpush2.bf16.msra.mxu0 0
        %1584 = vmatprep.subr.bf16.mxu0 0
        %1585 = vmatpush2.bf16.msra.mxu0 0
        %1586 = vmatprep.subr.bf16.mxu0 0
        %1587 = vmatpush2.bf16.msra.mxu0 0
        %1588 = vmatprep.subr.bf16.mxu0 0
        %1589 = vmatpush2.bf16.msra.mxu0 0
        %1590 = vmatprep.subr.bf16.mxu0 0
        %1591 = vmatpush2.bf16.msra.mxu0 0
        %1592 = vmatprep.subr.bf16.mxu0 0
        %1593 = vmatpush2.bf16.msra.mxu0 0
        %1594 = vmatprep.subr.bf16.mxu0 0
        %1595 = vmatpush2.bf16.msra.mxu0 0
        %1596 = vmatprep.mubr.bf16.mxu0 0
        %1597 = vmatmul.mubr.bf16.gmra.mxu0 %v1492
        %v1598 = vpop.f32.mrf.mxu0
        %v1599 = vadd.f32 %v1514, %v1598
        %v1600 = vpop.f32.mrf.mxu0
        %v1601 = vpop.f32.mrf.mxu0
        %v1602 = vadd.f32 %v1514, %v1601
        %v1603 = vpop.f32.mrf.mxu0
        %1604 = vdwg.mxu0
        %v1605 = vmul.f32 %v1374, 0.17677669
        %v1606 = vmul.f32 %v1377, 0.17677669
        %v1607 = vpack.c.bf16 %v1606, %v1605
        %v1608 = vpack.c.bf16 %v1489, %v1486
        %v1609 = vpack.c.bf16 %v1602, %v1599
        %vm1610 = vcmask 261120
        %v1612 = vsel %vm1610, %v1607, 0
        %v1615 = vsel %vm1610, %v1608, 0
        %1617 = vmatprep.subr.bf16.mxu0 0
        %1618 = vmatpush1.bf16.xpose.msra.mxu0 0
        %1619 = vmatprep.subr.bf16.mxu0 0
        %1620 = vmatpush1.bf16.xpose.msra.mxu0 0
        %1621 = vmatprep.subr.bf16.mxu0 0
        %1622 = vmatpush1.bf16.xpose.msra.mxu0 0
        %1623 = vmatprep.subr.bf16.mxu0 0
        %1624 = vmatpush1.bf16.xpose.msra.mxu0 0
        %1625 = vmatprep.subr.bf16.mxu0 0
        %1626 = vmatpush1.bf16.xpose.msra.mxu0 0
        %1627 = vmatprep.subr.bf16.mxu0 0
        %1628 = vmatpush1.bf16.xpose.msra.mxu0 0
        %1629 = vmatprep.subr.bf16.mxu0 0
        %1630 = vmatpush1.bf16.xpose.msra.mxu0 0
        %1631 = vmatprep.subr.bf16.mxu0 0
        %1632 = vmatpush1.bf16.xpose.msra.mxu0 %v1615
        %1633 = vmatprep.subr.bf16.mxu0 0
        %1634 = vmatpush2.bf16.xpose.msra.mxu0 0
        %1635 = vmatprep.subr.bf16.mxu0 0
        %1636 = vmatpush2.bf16.xpose.msra.mxu0 0
        %1637 = vmatprep.subr.bf16.mxu0 0
        %1638 = vmatpush2.bf16.xpose.msra.mxu0 0
        %1639 = vmatprep.subr.bf16.mxu0 0
        %1640 = vmatpush2.bf16.xpose.msra.mxu0 0
        %1641 = vmatprep.subr.bf16.mxu0 0
        %1642 = vmatpush2.bf16.xpose.msra.mxu0 0
        %1643 = vmatprep.subr.bf16.mxu0 0
        %1644 = vmatpush2.bf16.xpose.msra.mxu0 0
        %1645 = vmatprep.subr.bf16.mxu0 0
        %1646 = vmatpush2.bf16.xpose.msra.mxu0 0
        %1647 = vmatprep.subr.bf16.mxu0 0
        %1648 = vmatpush2.bf16.xpose.msra.mxu0 0
        %1649 = vmatprep.mubr.bf16.mxu0 0
        %1650 = vmatmul.mubr.bf16.gmra.mxu0 %v1612
        %v1651 = vpop.f32.mrf.mxu0
        %v1652 = vadd.f32 0.0, %v1651
        %v1653 = vpop.f32.mrf.mxu0
        %v1654 = vpop.f32.mrf.mxu0
        %v1655 = vadd.f32 0.0, %v1654
        %v1656 = vpop.f32.mrf.mxu0
        %1657 = vdwg.mxu0
        %vm1658 = vcmask 130048
        %v1659 = vsel %vm1658, %v1652, -inf
        %1660 = vmax.xlane.f32.xlu0 %v1659
        %v1661 = vpop.xlane.xlu0 %1660
        %v1662 = vsel %vm1658, %v1655, -inf
        %1663 = vmax.xlane.f32.xlu0 %v1662
        %v1664 = vpop.xlane.xlu0 %1663
        %v1665 = vsub.f32 %v1652, %v1661
        %v1666 = vsub.f32 %v1655, %v1664
        %v1667 = vmul.f32 %v1665, 1.442695
        %v1668 = vpow.pop %v1667
        %v1669 = vmul.f32 %v1666, 1.442695
        %v1670 = vpow.pop %v1669
        %v1671 = vsel %vm1658, %v1668, 0.0
        %1672 = vadd.xlane.f32.xlu0 %v1671
        %v1673 = vpop.xlane.xlu0 %1672
        %v1674 = vsel %vm1658, %v1670, 0.0
        %1675 = vadd.xlane.f32.xlu0 %v1674
        %v1676 = vpop.xlane.xlu0 %1675
        %v1677 = vrcp.pop %v1673
        %v1678 = vrcp.pop %v1676
        %v1679 = vmul.f32 %v1668, %v1677
        %v1680 = vmul.f32 %v1670, %v1678
        %v1681 = vpack.c.bf16 %v1680, %v1679
        %v1683 = vsel %vm1658, %v1681, 0
        %1685 = vmatprep.subr.bf16.mxu0 0
        %1686 = vmatpush1.bf16.msra.mxu0 0
        %1687 = vmatprep.subr.bf16.mxu0 0
        %1688 = vmatpush1.bf16.msra.mxu0 0
        %1689 = vmatprep.subr.bf16.mxu0 0
        %1690 = vmatpush1.bf16.msra.mxu0 0
        %1691 = vmatprep.subr.bf16.mxu0 0
        %1692 = vmatpush1.bf16.msra.mxu0 0
        %1693 = vmatprep.subr.bf16.mxu0 0
        %1694 = vmatpush1.bf16.msra.mxu0 0
        %1695 = vmatprep.subr.bf16.mxu0 0
        %1696 = vmatpush1.bf16.msra.mxu0 0
        %1697 = vmatprep.subr.bf16.mxu0 0
        %1698 = vmatpush1.bf16.msra.mxu0 0
        %1699 = vmatprep.subr.bf16.mxu0 0
        %1700 = vmatpush1.bf16.msra.mxu0 %v1609
        %1701 = vmatprep.subr.bf16.mxu0 0
        %1702 = vmatpush2.bf16.msra.mxu0 0
        %1703 = vmatprep.subr.bf16.mxu0 0
        %1704 = vmatpush2.bf16.msra.mxu0 0
        %1705 = vmatprep.subr.bf16.mxu0 0
        %1706 = vmatpush2.bf16.msra.mxu0 0
        %1707 = vmatprep.subr.bf16.mxu0 0
        %1708 = vmatpush2.bf16.msra.mxu0 0
        %1709 = vmatprep.subr.bf16.mxu0 0
        %1710 = vmatpush2.bf16.msra.mxu0 0
        %1711 = vmatprep.subr.bf16.mxu0 0
        %1712 = vmatpush2.bf16.msra.mxu0 0
        %1713 = vmatprep.subr.bf16.mxu0 0
        %1714 = vmatpush2.bf16.msra.mxu0 0
        %1715 = vmatprep.subr.bf16.mxu0 0
        %1716 = vmatpush2.bf16.msra.mxu0 0
        %1717 = vmatprep.mubr.bf16.mxu0 0
        %1718 = vmatmul.mubr.bf16.gmra.mxu0 %v1683
        %v1719 = vpop.f32.mrf.mxu0
        %v1720 = vadd.f32 0.0, %v1719
        %v1721 = vpop.f32.mrf.mxu0
        %v1722 = vpop.f32.mrf.mxu0
        %v1723 = vadd.f32 0.0, %v1722
        %v1724 = vpop.f32.mrf.mxu0
        %1725 = vdwg.mxu0
        %1726 = vst.msk [vmem:[#allocation2] sm:$0xff] %vm1610, %v1720
        %1727 = vst.msk [vmem:[#allocation2 + $0x8] sm:$0xff] %vm1610, %v1723
        %1729 = vrot.lane.b32.xlu0 %v1607, 96
        %v1730 = vpop.permute.xlu0 %1729
        %1732 = vrot.lane.b32.xlu0 %v1608, 96
        %v1733 = vpop.permute.xlu0 %1732
        %v1735 = vsel %vm1610, %v1730, 0
        %v1738 = vsel %vm1610, %v1733, 0
        %1740 = vmatprep.subr.bf16.mxu0 0
        %1741 = vmatpush1.bf16.xpose.msra.mxu0 0
        %1742 = vmatprep.subr.bf16.mxu0 0
        %1743 = vmatpush1.bf16.xpose.msra.mxu0 0
        %1744 = vmatprep.subr.bf16.mxu0 0
        %1745 = vmatpush1.bf16.xpose.msra.mxu0 0
        %1746 = vmatprep.subr.bf16.mxu0 0
        %1747 = vmatpush1.bf16.xpose.msra.mxu0 0
        %1748 = vmatprep.subr.bf16.mxu0 0
        %1749 = vmatpush1.bf16.xpose.msra.mxu0 0
        %1750 = vmatprep.subr.bf16.mxu0 0
        %1751 = vmatpush1.bf16.xpose.msra.mxu0 0
        %1752 = vmatprep.subr.bf16.mxu0 0
        %1753 = vmatpush1.bf16.xpose.msra.mxu0 0
        %1754 = vmatprep.subr.bf16.mxu0 0
        %1755 = vmatpush1.bf16.xpose.msra.mxu0 %v1738
        %1756 = vmatprep.subr.bf16.mxu0 0
        %1757 = vmatpush2.bf16.xpose.msra.mxu0 0
        %1758 = vmatprep.subr.bf16.mxu0 0
        %1759 = vmatpush2.bf16.xpose.msra.mxu0 0
        %1760 = vmatprep.subr.bf16.mxu0 0
        %1761 = vmatpush2.bf16.xpose.msra.mxu0 0
        %1762 = vmatprep.subr.bf16.mxu0 0
        %1763 = vmatpush2.bf16.xpose.msra.mxu0 0
        %1764 = vmatprep.subr.bf16.mxu0 0
        %1765 = vmatpush2.bf16.xpose.msra.mxu0 0
        %1766 = vmatprep.subr.bf16.mxu0 0
        %1767 = vmatpush2.bf16.xpose.msra.mxu0 0
        %1768 = vmatprep.subr.bf16.mxu0 0
        %1769 = vmatpush2.bf16.xpose.msra.mxu0 0
        %1770 = vmatprep.subr.bf16.mxu0 0
        %1771 = vmatpush2.bf16.xpose.msra.mxu0 0
        %1772 = vmatprep.mubr.bf16.mxu0 0
        %1773 = vmatmul.mubr.bf16.gmra.mxu0 %v1735
        %v1774 = vpop.f32.mrf.mxu0
        %v1775 = vadd.f32 0.0, %v1774
        %v1776 = vpop.f32.mrf.mxu0
        %v1777 = vpop.f32.mrf.mxu0
        %v1778 = vadd.f32 0.0, %v1777
        %v1779 = vpop.f32.mrf.mxu0
        %1780 = vdwg.mxu0
        %v1781 = vsel %vm1658, %v1775, -inf
        %1782 = vmax.xlane.f32.xlu0 %v1781
        %v1783 = vpop.xlane.xlu0 %1782
        %v1784 = vsel %vm1658, %v1778, -inf
        %1785 = vmax.xlane.f32.xlu0 %v1784
        %v1786 = vpop.xlane.xlu0 %1785
        %v1787 = vsub.f32 %v1775, %v1783
        %v1788 = vsub.f32 %v1778, %v1786
        %v1789 = vmul.f32 %v1787, 1.442695
        %v1790 = vpow.pop %v1789
        %v1791 = vmul.f32 %v1788, 1.442695
        %v1792 = vpow.pop %v1791
        %v1793 = vsel %vm1658, %v1790, 0.0
        %1794 = vadd.xlane.f32.xlu0 %v1793
        %v1795 = vpop.xlane.xlu0 %1794
        %v1796 = vsel %vm1658, %v1792, 0.0
        %1797 = vadd.xlane.f32.xlu0 %v1796
        %v1798 = vpop.xlane.xlu0 %1797
        %v1799 = vrcp.pop %v1795
        %v1800 = vrcp.pop %v1798
        %v1801 = vmul.f32 %v1790, %v1799
        %v1802 = vmul.f32 %v1792, %v1800
        %v1803 = vpack.c.bf16 %v1802, %v1801
        %1805 = vrot.lane.b32.xlu0 %v1609, 96
        %v1806 = vpop.permute.xlu0 %1805
        %v1809 = vsel %vm1658, %v1803, 0
        %1811 = vmatprep.subr.bf16.mxu0 0
        %1812 = vmatpush1.bf16.msra.mxu0 0
        %1813 = vmatprep.subr.bf16.mxu0 0
        %1814 = vmatpush1.bf16.msra.mxu0 0
        %1815 = vmatprep.subr.bf16.mxu0 0
        %1816 = vmatpush1.bf16.msra.mxu0 0
        %1817 = vmatprep.subr.bf16.mxu0 0
        %1818 = vmatpush1.bf16.msra.mxu0 0
        %1819 = vmatprep.subr.bf16.mxu0 0
        %1820 = vmatpush1.bf16.msra.mxu0 0
        %1821 = vmatprep.subr.bf16.mxu0 0
        %1822 = vmatpush1.bf16.msra.mxu0 0
        %1823 = vmatprep.subr.bf16.mxu0 0
        %1824 = vmatpush1.bf16.msra.mxu0 0
        %1825 = vmatprep.subr.bf16.mxu0 0
        %1826 = vmatpush1.bf16.msra.mxu0 %v1806
        %1827 = vmatprep.subr.bf16.mxu0 0
        %1828 = vmatpush2.bf16.msra.mxu0 0
        %1829 = vmatprep.subr.bf16.mxu0 0
        %1830 = vmatpush2.bf16.msra.mxu0 0
        %1831 = vmatprep.subr.bf16.mxu0 0
        %1832 = vmatpush2.bf16.msra.mxu0 0
        %1833 = vmatprep.subr.bf16.mxu0 0
        %1834 = vmatpush2.bf16.msra.mxu0 0
        %1835 = vmatprep.subr.bf16.mxu0 0
        %1836 = vmatpush2.bf16.msra.mxu0 0
        %1837 = vmatprep.subr.bf16.mxu0 0
        %1838 = vmatpush2.bf16.msra.mxu0 0
        %1839 = vmatprep.subr.bf16.mxu0 0
        %1840 = vmatpush2.bf16.msra.mxu0 0
        %1841 = vmatprep.subr.bf16.mxu0 0
        %1842 = vmatpush2.bf16.msra.mxu0 0
        %1843 = vmatprep.mubr.bf16.mxu0 0
        %1844 = vmatmul.mubr.bf16.gmra.mxu0 %v1809
        %v1845 = vpop.f32.mrf.mxu0
        %v1846 = vadd.f32 0.0, %v1845
        %v1847 = vpop.f32.mrf.mxu0
        %v1848 = vpop.f32.mrf.mxu0
        %v1849 = vadd.f32 0.0, %v1848
        %v1850 = vpop.f32.mrf.mxu0
        %1851 = vdwg.mxu0
        %1854 = vrot.lane.b32.xlu0 %v1846, 32
        %v1855 = vpop.permute.xlu0 %1854
        %1856 = vrot.lane.b32.xlu0 %v1849, 32
        %v1857 = vpop.permute.xlu0 %1856
        %vm1860 = vcmask 523520
        %1861 = vst.msk [vmem:[#allocation2] sm:$0xff] %vm1860, %v1855
        %1862 = vst.msk [vmem:[#allocation2 + $0x8] sm:$0xff] %vm1860, %v1857
        %1863 = vrot.lane.b32.xlu0 %v1607, 64
        %v1864 = vpop.permute.xlu0 %1863
        %1865 = vrot.lane.b32.xlu0 %v1608, 64
        %v1866 = vpop.permute.xlu0 %1865
        %v1868 = vsel %vm1610, %v1864, 0
        %v1871 = vsel %vm1610, %v1866, 0
        %1873 = vmatprep.subr.bf16.mxu0 0
        %1874 = vmatpush1.bf16.xpose.msra.mxu0 0
        %1875 = vmatprep.subr.bf16.mxu0 0
        %1876 = vmatpush1.bf16.xpose.msra.mxu0 0
        %1877 = vmatprep.subr.bf16.mxu0 0
        %1878 = vmatpush1.bf16.xpose.msra.mxu0 0
        %1879 = vmatprep.subr.bf16.mxu0 0
        %1880 = vmatpush1.bf16.xpose.msra.mxu0 0
        %1881 = vmatprep.subr.bf16.mxu0 0
        %1882 = vmatpush1.bf16.xpose.msra.mxu0 0
        %1883 = vmatprep.subr.bf16.mxu0 0
        %1884 = vmatpush1.bf16.xpose.msra.mxu0 0
        %1885 = vmatprep.subr.bf16.mxu0 0
        %1886 = vmatpush1.bf16.xpose.msra.mxu0 0
        %1887 = vmatprep.subr.bf16.mxu0 0
        %1888 = vmatpush1.bf16.xpose.msra.mxu0 %v1871
        %1889 = vmatprep.subr.bf16.mxu0 0
        %1890 = vmatpush2.bf16.xpose.msra.mxu0 0
        %1891 = vmatprep.subr.bf16.mxu0 0
        %1892 = vmatpush2.bf16.xpose.msra.mxu0 0
        %1893 = vmatprep.subr.bf16.mxu0 0
        %1894 = vmatpush2.bf16.xpose.msra.mxu0 0
        %1895 = vmatprep.subr.bf16.mxu0 0
        %1896 = vmatpush2.bf16.xpose.msra.mxu0 0
        %1897 = vmatprep.subr.bf16.mxu0 0
        %1898 = vmatpush2.bf16.xpose.msra.mxu0 0
        %1899 = vmatprep.subr.bf16.mxu0 0
        %1900 = vmatpush2.bf16.xpose.msra.mxu0 0
        %1901 = vmatprep.subr.bf16.mxu0 0
        %1902 = vmatpush2.bf16.xpose.msra.mxu0 0
        %1903 = vmatprep.subr.bf16.mxu0 0
        %1904 = vmatpush2.bf16.xpose.msra.mxu0 0
        %1905 = vmatprep.mubr.bf16.mxu0 0
        %1906 = vmatmul.mubr.bf16.gmra.mxu0 %v1868
        %v1907 = vpop.f32.mrf.mxu0
        %v1908 = vadd.f32 0.0, %v1907
        %v1909 = vpop.f32.mrf.mxu0
        %v1910 = vpop.f32.mrf.mxu0
        %v1911 = vadd.f32 0.0, %v1910
        %v1912 = vpop.f32.mrf.mxu0
        %1913 = vdwg.mxu0
        %v1914 = vsel %vm1658, %v1908, -inf
        %1915 = vmax.xlane.f32.xlu0 %v1914
        %v1916 = vpop.xlane.xlu0 %1915
        %v1917 = vsel %vm1658, %v1911, -inf
        %1918 = vmax.xlane.f32.xlu0 %v1917
        %v1919 = vpop.xlane.xlu0 %1918
        %v1920 = vsub.f32 %v1908, %v1916
        %v1921 = vsub.f32 %v1911, %v1919
        %v1922 = vmul.f32 %v1920, 1.442695
        %v1923 = vpow.pop %v1922
        %v1924 = vmul.f32 %v1921, 1.442695
        %v1925 = vpow.pop %v1924
        %v1926 = vsel %vm1658, %v1923, 0.0
        %1927 = vadd.xlane.f32.xlu0 %v1926
        %v1928 = vpop.xlane.xlu0 %1927
        %v1929 = vsel %vm1658, %v1925, 0.0
        %1930 = vadd.xlane.f32.xlu0 %v1929
        %v1931 = vpop.xlane.xlu0 %1930
        %v1932 = vrcp.pop %v1928
        %v1933 = vrcp.pop %v1931
        %v1934 = vmul.f32 %v1923, %v1932
        %v1935 = vmul.f32 %v1925, %v1933
        %v1936 = vpack.c.bf16 %v1935, %v1934
        %1937 = vrot.lane.b32.xlu0 %v1609, 64
        %v1938 = vpop.permute.xlu0 %1937
        %v1941 = vsel %vm1658, %v1936, 0
        %1943 = vmatprep.subr.bf16.mxu0 0
        %1944 = vmatpush1.bf16.msra.mxu0 0
        %1945 = vmatprep.subr.bf16.mxu0 0
        %1946 = vmatpush1.bf16.msra.mxu0 0
        %1947 = vmatprep.subr.bf16.mxu0 0
        %1948 = vmatpush1.bf16.msra.mxu0 0
        %1949 = vmatprep.subr.bf16.mxu0 0
        %1950 = vmatpush1.bf16.msra.mxu0 0
        %1951 = vmatprep.subr.bf16.mxu0 0
        %1952 = vmatpush1.bf16.msra.mxu0 0
        %1953 = vmatprep.subr.bf16.mxu0 0
        %1954 = vmatpush1.bf16.msra.mxu0 0
        %1955 = vmatprep.subr.bf16.mxu0 0
        %1956 = vmatpush1.bf16.msra.mxu0 0
        %1957 = vmatprep.subr.bf16.mxu0 0
        %1958 = vmatpush1.bf16.msra.mxu0 %v1938
        %1959 = vmatprep.subr.bf16.mxu0 0
        %1960 = vmatpush2.bf16.msra.mxu0 0
        %1961 = vmatprep.subr.bf16.mxu0 0
        %1962 = vmatpush2.bf16.msra.mxu0 0
        %1963 = vmatprep.subr.bf16.mxu0 0
        %1964 = vmatpush2.bf16.msra.mxu0 0
        %1965 = vmatprep.subr.bf16.mxu0 0
        %1966 = vmatpush2.bf16.msra.mxu0 0
        %1967 = vmatprep.subr.bf16.mxu0 0
        %1968 = vmatpush2.bf16.msra.mxu0 0
        %1969 = vmatprep.subr.bf16.mxu0 0
        %1970 = vmatpush2.bf16.msra.mxu0 0
        %1971 = vmatprep.subr.bf16.mxu0 0
        %1972 = vmatpush2.bf16.msra.mxu0 0
        %1973 = vmatprep.subr.bf16.mxu0 0
        %1974 = vmatpush2.bf16.msra.mxu0 0
        %1975 = vmatprep.mubr.bf16.mxu0 0
        %1976 = vmatmul.mubr.bf16.gmra.mxu0 %v1941
        %v1977 = vpop.f32.mrf.mxu0
        %v1978 = vadd.f32 0.0, %v1977
        %v1979 = vpop.f32.mrf.mxu0
        %v1980 = vpop.f32.mrf.mxu0
        %v1981 = vadd.f32 0.0, %v1980
        %v1982 = vpop.f32.mrf.mxu0
        %1983 = vdwg.mxu0
        %1986 = vrot.lane.b32.xlu0 %v1978, 64
        %v1987 = vpop.permute.xlu0 %1986
        %1988 = vrot.lane.b32.xlu0 %v1981, 64
        %v1989 = vpop.permute.xlu0 %1988
        %vm1992 = vcmask 785920
        %1993 = vst.msk [vmem:[#allocation2] sm:$0xff] %vm1992, %v1987
        %1994 = vst.msk [vmem:[#allocation2 + $0x8] sm:$0xff] %vm1992, %v1989
        %1995 = vrot.lane.b32.xlu0 %v1607, 32
        %v1996 = vpop.permute.xlu0 %1995
        %1997 = vrot.lane.b32.xlu0 %v1608, 32
        %v1998 = vpop.permute.xlu0 %1997
        %v2000 = vsel %vm1610, %v1996, 0
        %v2003 = vsel %vm1610, %v1998, 0
        %2005 = vmatprep.subr.bf16.mxu0 0
        %2006 = vmatpush1.bf16.xpose.msra.mxu0 0
        %2007 = vmatprep.subr.bf16.mxu0 0
        %2008 = vmatpush1.bf16.xpose.msra.mxu0 0
        %2009 = vmatprep.subr.bf16.mxu0 0
        %2010 = vmatpush1.bf16.xpose.msra.mxu0 0
        %2011 = vmatprep.subr.bf16.mxu0 0
        %2012 = vmatpush1.bf16.xpose.msra.mxu0 0
        %2013 = vmatprep.subr.bf16.mxu0 0
        %2014 = vmatpush1.bf16.xpose.msra.mxu0 0
        %2015 = vmatprep.subr.bf16.mxu0 0
        %2016 = vmatpush1.bf16.xpose.msra.mxu0 0
        %2017 = vmatprep.subr.bf16.mxu0 0
        %2018 = vmatpush1.bf16.xpose.msra.mxu0 0
        %2019 = vmatprep.subr.bf16.mxu0 0
        %2020 = vmatpush1.bf16.xpose.msra.mxu0 %v2003
        %2021 = vmatprep.subr.bf16.mxu0 0
        %2022 = vmatpush2.bf16.xpose.msra.mxu0 0
        %2023 = vmatprep.subr.bf16.mxu0 0
        %2024 = vmatpush2.bf16.xpose.msra.mxu0 0
        %2025 = vmatprep.subr.bf16.mxu0 0
        %2026 = vmatpush2.bf16.xpose.msra.mxu0 0
        %2027 = vmatprep.subr.bf16.mxu0 0
        %2028 = vmatpush2.bf16.xpose.msra.mxu0 0
        %2029 = vmatprep.subr.bf16.mxu0 0
        %2030 = vmatpush2.bf16.xpose.msra.mxu0 0
        %2031 = vmatprep.subr.bf16.mxu0 0
        %2032 = vmatpush2.bf16.xpose.msra.mxu0 0
        %2033 = vmatprep.subr.bf16.mxu0 0
        %2034 = vmatpush2.bf16.xpose.msra.mxu0 0
        %2035 = vmatprep.subr.bf16.mxu0 0
        %2036 = vmatpush2.bf16.xpose.msra.mxu0 0
        %2037 = vmatprep.mubr.bf16.mxu0 0
        %2038 = vmatmul.mubr.bf16.gmra.mxu0 %v2000
        %v2039 = vpop.f32.mrf.mxu0
        %v2040 = vadd.f32 0.0, %v2039
        %v2041 = vpop.f32.mrf.mxu0
        %v2042 = vpop.f32.mrf.mxu0
        %v2043 = vadd.f32 0.0, %v2042
        %v2044 = vpop.f32.mrf.mxu0
        %2045 = vdwg.mxu0
        %v2046 = vsel %vm1658, %v2040, -inf
        %2047 = vmax.xlane.f32.xlu0 %v2046
        %v2048 = vpop.xlane.xlu0 %2047
        %v2049 = vsel %vm1658, %v2043, -inf
        %2050 = vmax.xlane.f32.xlu0 %v2049
        %v2051 = vpop.xlane.xlu0 %2050
        %v2052 = vsub.f32 %v2040, %v2048
        %v2053 = vsub.f32 %v2043, %v2051
        %v2054 = vmul.f32 %v2052, 1.442695
        %v2055 = vpow.pop %v2054
        %v2056 = vmul.f32 %v2053, 1.442695
        %v2057 = vpow.pop %v2056
        %v2058 = vsel %vm1658, %v2055, 0.0
        %2059 = vadd.xlane.f32.xlu0 %v2058
        %v2060 = vpop.xlane.xlu0 %2059
        %v2061 = vsel %vm1658, %v2057, 0.0
        %2062 = vadd.xlane.f32.xlu0 %v2061
        %v2063 = vpop.xlane.xlu0 %2062
        %v2064 = vrcp.pop %v2060
        %v2065 = vrcp.pop %v2063
        %v2066 = vmul.f32 %v2055, %v2064
        %v2067 = vmul.f32 %v2057, %v2065
        %v2068 = vpack.c.bf16 %v2067, %v2066
        %2069 = vrot.lane.b32.xlu0 %v1609, 32
        %v2070 = vpop.permute.xlu0 %2069
        %v2073 = vsel %vm1658, %v2068, 0
        %2075 = vmatprep.subr.bf16.mxu0 0
        %2076 = vmatpush1.bf16.msra.mxu0 0
        %2077 = vmatprep.subr.bf16.mxu0 0
        %2078 = vmatpush1.bf16.msra.mxu0 0
        %2079 = vmatprep.subr.bf16.mxu0 0
        %2080 = vmatpush1.bf16.msra.mxu0 0
        %2081 = vmatprep.subr.bf16.mxu0 0
        %2082 = vmatpush1.bf16.msra.mxu0 0
        %2083 = vmatprep.subr.bf16.mxu0 0
        %2084 = vmatpush1.bf16.msra.mxu0 0
        %2085 = vmatprep.subr.bf16.mxu0 0
        %2086 = vmatpush1.bf16.msra.mxu0 0
        %2087 = vmatprep.subr.bf16.mxu0 0
        %2088 = vmatpush1.bf16.msra.mxu0 0
        %2089 = vmatprep.subr.bf16.mxu0 0
        %2090 = vmatpush1.bf16.msra.mxu0 %v2070
        %2091 = vmatprep.subr.bf16.mxu0 0
        %2092 = vmatpush2.bf16.msra.mxu0 0
        %2093 = vmatprep.subr.bf16.mxu0 0
        %2094 = vmatpush2.bf16.msra.mxu0 0
        %2095 = vmatprep.subr.bf16.mxu0 0
        %2096 = vmatpush2.bf16.msra.mxu0 0
        %2097 = vmatprep.subr.bf16.mxu0 0
        %2098 = vmatpush2.bf16.msra.mxu0 0
        %2099 = vmatprep.subr.bf16.mxu0 0
        %2100 = vmatpush2.bf16.msra.mxu0 0
        %2101 = vmatprep.subr.bf16.mxu0 0
        %2102 = vmatpush2.bf16.msra.mxu0 0
        %2103 = vmatprep.subr.bf16.mxu0 0
        %2104 = vmatpush2.bf16.msra.mxu0 0
        %2105 = vmatprep.subr.bf16.mxu0 0
        %2106 = vmatpush2.bf16.msra.mxu0 0
        %2107 = vmatprep.mubr.bf16.mxu0 0
        %2108 = vmatmul.mubr.bf16.gmra.mxu0 %v2073
        %v2109 = vpop.f32.mrf.mxu0
        %v2110 = vadd.f32 0.0, %v2109
        %v2111 = vpop.f32.mrf.mxu0
        %v2112 = vpop.f32.mrf.mxu0
        %v2113 = vadd.f32 0.0, %v2112
        %v2114 = vpop.f32.mrf.mxu0
        %2115 = vdwg.mxu0
        %2118 = vrot.lane.b32.xlu0 %v2110, 96
        %v2119 = vpop.permute.xlu0 %2118
        %2120 = vrot.lane.b32.xlu0 %v2113, 96
        %v2121 = vpop.permute.xlu0 %2120
        %vm2124 = vcmask 1048320
        %2125 = vst.msk [vmem:[#allocation2] sm:$0xff] %vm2124, %v2119
        %2126 = vst.msk [vmem:[#allocation2 + $0x8] sm:$0xff] %vm2124, %v2121
        %v2127 = vld [vmem:[#allocation2] sm:$0xff]
        %v2128 = vld [vmem:[#allocation2 + $0x8] sm:$0xff]
        %v2129 = vpack.c.bf16 %v2128, %v2127
        %v2130 = vld [vmem:[#allocation15] sm:$0xf]
        %v2131 = vld [vmem:[#allocation15 + $0x4] sm:$0xf]
        %v2132 = vld [vmem:[#allocation15 + $0x8] sm:$0xf]
        %v2133 = vld [vmem:[#allocation15 + $0xc] sm:$0xf]
        %v2134 = vld [vmem:[#allocation15 + $0x10] sm:$0xf]
        %v2135 = vld [vmem:[#allocation15 + $0x14] sm:$0xf]
        %v2136 = vld [vmem:[#allocation15 + $0x18] sm:$0xf]
        %v2137 = vld [vmem:[#allocation15 + $0x1c] sm:$0xf]
        %v2138 = vld [vmem:[#allocation15 + $0x20] sm:$0xf]
        %v2139 = vld [vmem:[#allocation15 + $0x24] sm:$0xf]
        %v2140 = vld [vmem:[#allocation15 + $0x28] sm:$0xf]
        %v2141 = vld [vmem:[#allocation15 + $0x2c] sm:$0xf]
        %v2142 = vld [vmem:[#allocation15 + $0x30] sm:$0xf]
        %v2143 = vld [vmem:[#allocation15 + $0x34] sm:$0xf]
        %v2144 = vld [vmem:[#allocation15 + $0x38] sm:$0xf]
        %v2145 = vld [vmem:[#allocation15 + $0x3c] sm:$0xf]
        %v2146 = vld [vmem:[%s27] sm:$0x1]
        %v2148 = vlaneseq
        %v2149 = vshrl.u32 %v2148, 7
        %v2150 = vsub.s32 0, %v2149
        %v2151 = vrot.slane %v2146, %v2150
        %v2169 = vunpack.c.l.b16 %v2130
        %v2170 = vunpack.c.l.b16 %v2131
        %v2171 = vunpack.c.l.b16 %v2132
        %v2172 = vunpack.c.l.b16 %v2133
        %v2173 = vunpack.c.l.b16 %v2134
        %v2174 = vunpack.c.l.b16 %v2135
        %v2175 = vunpack.c.l.b16 %v2136
        %v2176 = vunpack.c.l.b16 %v2137
        %v2177 = vunpack.c.l.b16 %v2138
        %v2178 = vunpack.c.l.b16 %v2139
        %v2179 = vunpack.c.l.b16 %v2140
        %v2180 = vunpack.c.l.b16 %v2141
        %v2181 = vunpack.c.l.b16 %v2142
        %v2182 = vunpack.c.l.b16 %v2143
        %v2183 = vunpack.c.l.b16 %v2144
        %v2184 = vunpack.c.l.b16 %v2145
        %v2185 = vpack.c.b16 %v2170, %v2169
        %v2186 = vpack.c.b16 %v2172, %v2171
        %v2187 = vpack.c.b16 %v2174, %v2173
        %v2188 = vpack.c.b16 %v2176, %v2175
        %v2189 = vpack.c.b16 %v2178, %v2177
        %v2190 = vpack.c.b16 %v2180, %v2179
        %v2191 = vpack.c.b16 %v2182, %v2181
        %v2192 = vpack.c.b16 %v2184, %v2183
        %2201 = vmatprep.subr.bf16.mxu0 0
        %2202 = vmatpush1.bf16.msra.mxu0 %v2192
        %2203 = vmatprep.subr.bf16.mxu0 0
        %2204 = vmatpush1.bf16.msra.mxu0 %v2191
        %2205 = vmatprep.subr.bf16.mxu0 0
        %2206 = vmatpush1.bf16.msra.mxu0 %v2190
        %2207 = vmatprep.subr.bf16.mxu0 0
        %2208 = vmatpush1.bf16.msra.mxu0 %v2189
        %2209 = vmatprep.subr.bf16.mxu0 0
        %2210 = vmatpush1.bf16.msra.mxu0 %v2188
        %2211 = vmatprep.subr.bf16.mxu0 0
        %2212 = vmatpush1.bf16.msra.mxu0 %v2187
        %2213 = vmatprep.subr.bf16.mxu0 0
        %2214 = vmatpush1.bf16.msra.mxu0 %v2186
        %2215 = vmatprep.subr.bf16.mxu0 0
        %2216 = vmatpush1.bf16.msra.mxu0 %v2185
        %2217 = vmatprep.subr.bf16.mxu0 0
        %2218 = vmatpush2.bf16.msra.mxu0 0
        %2219 = vmatprep.subr.bf16.mxu0 0
        %2220 = vmatpush2.bf16.msra.mxu0 0
        %2221 = vmatprep.subr.bf16.mxu0 0
        %2222 = vmatpush2.bf16.msra.mxu0 0
        %2223 = vmatprep.subr.bf16.mxu0 0
        %2224 = vmatpush2.bf16.msra.mxu0 0
        %2225 = vmatprep.subr.bf16.mxu0 0
        %2226 = vmatpush2.bf16.msra.mxu0 0
        %2227 = vmatprep.subr.bf16.mxu0 0
        %2228 = vmatpush2.bf16.msra.mxu0 0
        %2229 = vmatprep.subr.bf16.mxu0 0
        %2230 = vmatpush2.bf16.msra.mxu0 0
        %2231 = vmatprep.subr.bf16.mxu0 0
        %2232 = vmatpush2.bf16.msra.mxu0 0
        %2233 = vmatprep.mubr.bf16.mxu0 0
        %2234 = vmatmul.mubr.bf16.gmra.mxu0 %v2129
        %v2235 = vpop.f32.mrf.mxu0
        %v2236 = vadd.f32 %v2151, %v2235
        %v2237 = vpop.f32.mrf.mxu0
        %v2238 = vpop.f32.mrf.mxu0
        %v2239 = vadd.f32 %v2151, %v2238
        %v2240 = vpop.f32.mrf.mxu0
        %2241 = vdwg.mxu0
        %v2242 = vadd.f32 %v1212, %v2236
        %v2243 = vadd.f32 %v1213, %v2239
        %2244 = vadd.xlane.f32.xlu0 %v2242
        %v2245 = vpop.xlane.xlu0 %2244
        %2246 = vadd.xlane.f32.xlu0 %v2243
        %v2247 = vpop.xlane.xlu0 %2246
        %v2248 = vmul.f32 %v2245, %v1228
        %v2249 = vmul.f32 %v2247, %v1228
        %v2250 = vsub.f32 %v2242, %v2248
        %v2251 = vsub.f32 %v2243, %v2249
        %v2252 = vmul.f32 %v2250, %v2250
        %v2253 = vmul.f32 %v2251, %v2251
        %2254 = vadd.xlane.f32.xlu0 %v2252
        %v2255 = vpop.xlane.xlu0 %2254
        %2256 = vadd.xlane.f32.xlu0 %v2253
        %v2257 = vpop.xlane.xlu0 %2256
        %v2258 = vmul.f32 %v2255, %v1228
        %v2259 = vmul.f32 %v2257, %v1228
        %v2260 = vadd.f32 %v2258, 1e-05
        %v2261 = vadd.f32 %v2259, 1e-05
        %v2262 = vrsqrt.pop %v2260
        %v2263 = vrsqrt.pop %v2261
        %v2264 = vmul.f32 %v2250, %v2262
        %v2265 = vmul.f32 %v2251, %v2263
        %v2266 = vld [vmem:[%s29] sm:$0x1]
        %v2268 = vlaneseq
        %v2269 = vshrl.u32 %v2268, 7
        %v2270 = vsub.s32 0, %v2269
        %v2271 = vrot.slane %v2266, %v2270
        %v2273 = vmul.f32 %v2264, %v2271
        %v2274 = vmul.f32 %v2265, %v2271
        %v2275 = vld [vmem:[%s31] sm:$0x1]
        %v2277 = vlaneseq
        %v2278 = vshrl.u32 %v2277, 7
        %v2279 = vsub.s32 0, %v2278
        %v2280 = vrot.slane %v2275, %v2279
        %v2282 = vadd.f32 %v2273, %v2280
        %v2283 = vadd.f32 %v2274, %v2280
        %2284 = vadd.xlane.f32.xlu0 %v1214
        %v2285 = vpop.xlane.xlu0 %2284
        %2286 = vadd.xlane.f32.xlu0 %v1215
        %v2287 = vpop.xlane.xlu0 %2286
        %2288 = vadd.xlane.f32.xlu0 %v1216
        %v2289 = vpop.xlane.xlu0 %2288
        %2290 = vadd.xlane.f32.xlu0 %v1217
        %v2291 = vpop.xlane.xlu0 %2290
        %v2292 = vmul.f32 %v2285, %v1228
        %v2293 = vmul.f32 %v2287, %v1228
        %v2294 = vmul.f32 %v2289, %v1228
        %v2295 = vmul.f32 %v2291, %v1228
        %v2296 = vsub.f32 %v1214, %v2292
        %v2297 = vsub.f32 %v1215, %v2293
        %v2298 = vsub.f32 %v1216, %v2294
        %v2299 = vsub.f32 %v1217, %v2295
        %v2300 = vmul.f32 %v2296, %v2296
        %v2301 = vmul.f32 %v2297, %v2297
        %v2302 = vmul.f32 %v2298, %v2298
        %v2303 = vmul.f32 %v2299, %v2299
        %2304 = vadd.xlane.f32.xlu0 %v2300
        %v2305 = vpop.xlane.xlu0 %2304
        %2306 = vadd.xlane.f32.xlu0 %v2301
        %v2307 = vpop.xlane.xlu0 %2306
        %2308 = vadd.xlane.f32.xlu0 %v2302
        %v2309 = vpop.xlane.xlu0 %2308
        %2310 = vadd.xlane.f32.xlu0 %v2303
        %v2311 = vpop.xlane.xlu0 %2310
        %v2312 = vmul.f32 %v2305, %v1228
        %v2313 = vmul.f32 %v2307, %v1228
        %v2314 = vmul.f32 %v2309, %v1228
        %v2315 = vmul.f32 %v2311, %v1228
        %v2316 = vadd.f32 %v2312, 1e-05
        %v2317 = vadd.f32 %v2313, 1e-05
        %v2318 = vadd.f32 %v2314, 1e-05
        %v2319 = vadd.f32 %v2315, 1e-05
        %v2320 = vrsqrt.pop %v2316
        %v2321 = vrsqrt.pop %v2317
        %v2322 = vrsqrt.pop %v2318
        %v2323 = vrsqrt.pop %v2319
        %v2324 = vmul.f32 %v2296, %v2320
        %v2325 = vmul.f32 %v2297, %v2321
        %v2326 = vmul.f32 %v2298, %v2322
        %v2327 = vmul.f32 %v2299, %v2323
        %v2328 = vmul.f32 %v2324, %v2271
        %v2329 = vmul.f32 %v2325, %v2271
        %v2330 = vmul.f32 %v2326, %v2271
        %v2331 = vmul.f32 %v2327, %v2271
        %v2332 = vadd.f32 %v2328, %v2280
        %v2333 = vadd.f32 %v2329, %v2280
        %v2334 = vadd.f32 %v2330, %v2280
        %v2335 = vadd.f32 %v2331, %v2280
        %v2336 = vadd.f32 %v2282, %v1218
        %v2337 = vadd.f32 %v2283, %v1219
        %v2338 = vadd.f32 %v2332, %v1220
        %v2339 = vadd.f32 %v2333, %v1221
        %v2340 = vadd.f32 %v2334, %v1222
        %v2341 = vadd.f32 %v2335, %v1223
        %v2342 = vpack.c.bf16 %v2337, %v2336
        %v2343 = vld [vmem:[#allocation17] sm:$0xf]
        %v2344 = vld [vmem:[#allocation17 + $0x4] sm:$0xf]
        %v2345 = vld [vmem:[#allocation17 + $0x8] sm:$0xf]
        %v2346 = vld [vmem:[#allocation17 + $0xc] sm:$0xf]
        %v2347 = vld [vmem:[#allocation17 + $0x10] sm:$0xf]
        %v2348 = vld [vmem:[#allocation17 + $0x14] sm:$0xf]
        %v2349 = vld [vmem:[#allocation17 + $0x18] sm:$0xf]
        %v2350 = vld [vmem:[#allocation17 + $0x1c] sm:$0xf]
        %v2351 = vld [vmem:[#allocation17 + $0x20] sm:$0xf]
        %v2352 = vld [vmem:[#allocation17 + $0x24] sm:$0xf]
        %v2353 = vld [vmem:[#allocation17 + $0x28] sm:$0xf]
        %v2354 = vld [vmem:[#allocation17 + $0x2c] sm:$0xf]
        %v2355 = vld [vmem:[#allocation17 + $0x30] sm:$0xf]
        %v2356 = vld [vmem:[#allocation17 + $0x34] sm:$0xf]
        %v2357 = vld [vmem:[#allocation17 + $0x38] sm:$0xf]
        %v2358 = vld [vmem:[#allocation17 + $0x3c] sm:$0xf]
        %v2359 = vld [vmem:[%s35] sm:$0x1]
        %v2361 = vlaneseq
        %v2362 = vshrl.u32 %v2361, 7
        %v2363 = vsub.s32 0, %v2362
        %v2364 = vrot.slane %v2359, %v2363
        %v2382 = vunpack.c.l.b16 %v2343
        %v2383 = vunpack.c.l.b16 %v2344
        %v2384 = vunpack.c.l.b16 %v2345
        %v2385 = vunpack.c.l.b16 %v2346
        %v2386 = vunpack.c.l.b16 %v2347
        %v2387 = vunpack.c.l.b16 %v2348
        %v2388 = vunpack.c.l.b16 %v2349
        %v2389 = vunpack.c.l.b16 %v2350
        %v2390 = vunpack.c.l.b16 %v2351
        %v2391 = vunpack.c.l.b16 %v2352
        %v2392 = vunpack.c.l.b16 %v2353
        %v2393 = vunpack.c.l.b16 %v2354
        %v2394 = vunpack.c.l.b16 %v2355
        %v2395 = vunpack.c.l.b16 %v2356
        %v2396 = vunpack.c.l.b16 %v2357
        %v2397 = vunpack.c.l.b16 %v2358
        %v2398 = vpack.c.b16 %v2383, %v2382
        %v2399 = vpack.c.b16 %v2385, %v2384
        %v2400 = vpack.c.b16 %v2387, %v2386
        %v2401 = vpack.c.b16 %v2389, %v2388
        %v2402 = vpack.c.b16 %v2391, %v2390
        %v2403 = vpack.c.b16 %v2393, %v2392
        %v2404 = vpack.c.b16 %v2395, %v2394
        %v2405 = vpack.c.b16 %v2397, %v2396
        %2414 = vmatprep.subr.bf16.mxu0 0
        %2415 = vmatpush1.bf16.msra.mxu0 %v2405
        %2416 = vmatprep.subr.bf16.mxu0 0
        %2417 = vmatpush1.bf16.msra.mxu0 %v2404
        %2418 = vmatprep.subr.bf16.mxu0 0
        %2419 = vmatpush1.bf16.msra.mxu0 %v2403
        %2420 = vmatprep.subr.bf16.mxu0 0
        %2421 = vmatpush1.bf16.msra.mxu0 %v2402
        %2422 = vmatprep.subr.bf16.mxu0 0
        %2423 = vmatpush1.bf16.msra.mxu0 %v2401
        %2424 = vmatprep.subr.bf16.mxu0 0
        %2425 = vmatpush1.bf16.msra.mxu0 %v2400
        %2426 = vmatprep.subr.bf16.mxu0 0
        %2427 = vmatpush1.bf16.msra.mxu0 %v2399
        %2428 = vmatprep.subr.bf16.mxu0 0
        %2429 = vmatpush1.bf16.msra.mxu0 %v2398
        %2430 = vmatprep.subr.bf16.mxu0 0
        %2431 = vmatpush2.bf16.msra.mxu0 0
        %2432 = vmatprep.subr.bf16.mxu0 0
        %2433 = vmatpush2.bf16.msra.mxu0 0
        %2434 = vmatprep.subr.bf16.mxu0 0
        %2435 = vmatpush2.bf16.msra.mxu0 0
        %2436 = vmatprep.subr.bf16.mxu0 0
        %2437 = vmatpush2.bf16.msra.mxu0 0
        %2438 = vmatprep.subr.bf16.mxu0 0
        %2439 = vmatpush2.bf16.msra.mxu0 0
        %2440 = vmatprep.subr.bf16.mxu0 0
        %2441 = vmatpush2.bf16.msra.mxu0 0
        %2442 = vmatprep.subr.bf16.mxu0 0
        %2443 = vmatpush2.bf16.msra.mxu0 0
        %2444 = vmatprep.subr.bf16.mxu0 0
        %2445 = vmatpush2.bf16.msra.mxu0 0
        %2446 = vmatprep.mubr.bf16.mxu0 0
        %2447 = vmatmul.mubr.bf16.gmra.mxu0 %v2342
        %v2448 = vpop.f32.mrf.mxu0
        %v2449 = vadd.f32 %v2364, %v2448
        %v2450 = vpop.f32.mrf.mxu0
        %v2451 = vpop.f32.mrf.mxu0
        %v2452 = vadd.f32 %v2364, %v2451
        %v2453 = vpop.f32.mrf.mxu0
        %2454 = vdwg.mxu0
        %v2455 = vpack.c.bf16 %v2339, %v2338
        %v2456 = vpack.c.bf16 %v2341, %v2340
        %v2457 = vld [vmem:[#allocation18] sm:$0xf]
        %v2458 = vld [vmem:[#allocation18 + $0x4] sm:$0xf]
        %v2459 = vld [vmem:[#allocation18 + $0x8] sm:$0xf]
        %v2460 = vld [vmem:[#allocation18 + $0xc] sm:$0xf]
        %v2461 = vld [vmem:[#allocation18 + $0x10] sm:$0xf]
        %v2462 = vld [vmem:[#allocation18 + $0x14] sm:$0xf]
        %v2463 = vld [vmem:[#allocation18 + $0x18] sm:$0xf]
        %v2464 = vld [vmem:[#allocation18 + $0x1c] sm:$0xf]
        %v2465 = vld [vmem:[#allocation18 + $0x20] sm:$0xf]
        %v2466 = vld [vmem:[#allocation18 + $0x24] sm:$0xf]
        %v2467 = vld [vmem:[#allocation18 + $0x28] sm:$0xf]
        %v2468 = vld [vmem:[#allocation18 + $0x2c] sm:$0xf]
        %v2469 = vld [vmem:[#allocation18 + $0x30] sm:$0xf]
        %v2470 = vld [vmem:[#allocation18 + $0x34] sm:$0xf]
        %v2471 = vld [vmem:[#allocation18 + $0x38] sm:$0xf]
        %v2472 = vld [vmem:[#allocation18 + $0x3c] sm:$0xf]
        %v2473 = vld [vmem:[%s39] sm:$0x1]
        %v2475 = vlaneseq
        %v2476 = vshrl.u32 %v2475, 7
        %v2477 = vsub.s32 0, %v2476
        %v2478 = vrot.slane %v2473, %v2477
        %v2496 = vunpack.c.l.b16 %v2457
        %v2497 = vunpack.c.l.b16 %v2458
        %v2498 = vunpack.c.l.b16 %v2459
        %v2499 = vunpack.c.l.b16 %v2460
        %v2500 = vunpack.c.l.b16 %v2461
        %v2501 = vunpack.c.l.b16 %v2462
        %v2502 = vunpack.c.l.b16 %v2463
        %v2503 = vunpack.c.l.b16 %v2464
        %v2504 = vunpack.c.l.b16 %v2465
        %v2505 = vunpack.c.l.b16 %v2466
        %v2506 = vunpack.c.l.b16 %v2467
        %v2507 = vunpack.c.l.b16 %v2468
        %v2508 = vunpack.c.l.b16 %v2469
        %v2509 = vunpack.c.l.b16 %v2470
        %v2510 = vunpack.c.l.b16 %v2471
        %v2511 = vunpack.c.l.b16 %v2472
        %v2512 = vpack.c.b16 %v2497, %v2496
        %v2513 = vpack.c.b16 %v2499, %v2498
        %v2514 = vpack.c.b16 %v2501, %v2500
        %v2515 = vpack.c.b16 %v2503, %v2502
        %v2516 = vpack.c.b16 %v2505, %v2504
        %v2517 = vpack.c.b16 %v2507, %v2506
        %v2518 = vpack.c.b16 %v2509, %v2508
        %v2519 = vpack.c.b16 %v2511, %v2510
        %2528 = vmatprep.subr.bf16.mxu0 0
        %2529 = vmatpush1.bf16.msra.mxu0 %v2519
        %2530 = vmatprep.subr.bf16.mxu0 0
        %2531 = vmatpush1.bf16.msra.mxu0 %v2518
        %2532 = vmatprep.subr.bf16.mxu0 0
        %2533 = vmatpush1.bf16.msra.mxu0 %v2517
        %2534 = vmatprep.subr.bf16.mxu0 0
        %2535 = vmatpush1.bf16.msra.mxu0 %v2516
        %2536 = vmatprep.subr.bf16.mxu0 0
        %2537 = vmatpush1.bf16.msra.mxu0 %v2515
        %2538 = vmatprep.subr.bf16.mxu0 0
        %2539 = vmatpush1.bf16.msra.mxu0 %v2514
        %2540 = vmatprep.subr.bf16.mxu0 0
        %2541 = vmatpush1.bf16.msra.mxu0 %v2513
        %2542 = vmatprep.subr.bf16.mxu0 0
        %2543 = vmatpush1.bf16.msra.mxu0 %v2512
        %2544 = vmatprep.subr.bf16.mxu0 0
        %2545 = vmatpush2.bf16.msra.mxu0 0
        %2546 = vmatprep.subr.bf16.mxu0 0
        %2547 = vmatpush2.bf16.msra.mxu0 0
        %2548 = vmatprep.subr.bf16.mxu0 0
        %2549 = vmatpush2.bf16.msra.mxu0 0
        %2550 = vmatprep.subr.bf16.mxu0 0
        %2551 = vmatpush2.bf16.msra.mxu0 0
        %2552 = vmatprep.subr.bf16.mxu0 0
        %2553 = vmatpush2.bf16.msra.mxu0 0
        %2554 = vmatprep.subr.bf16.mxu0 0
        %2555 = vmatpush2.bf16.msra.mxu0 0
        %2556 = vmatprep.subr.bf16.mxu0 0
        %2557 = vmatpush2.bf16.msra.mxu0 0
        %2558 = vmatprep.subr.bf16.mxu0 0
        %2559 = vmatpush2.bf16.msra.mxu0 0
        %2560 = vmatprep.mubr.bf16.mxu0 0
        %2561 = vmatmul.mubr.bf16.gmra.mxu0 %v2455
        %v2562 = vpop.f32.mrf.mxu0
        %v2563 = vadd.f32 %v2478, %v2562
        %v2564 = vpop.f32.mrf.mxu0
        %v2565 = vpop.f32.mrf.mxu0
        %v2566 = vadd.f32 %v2478, %v2565
        %v2567 = vpop.f32.mrf.mxu0
        %2568 = vmatprep.mubr.bf16.mxu0 0
        %2569 = vmatmul.mubr.bf16.gmra.mxu0 %v2456
        %v2570 = vpop.f32.mrf.mxu0
        %v2571 = vadd.f32 %v2478, %v2570
        %v2572 = vpop.f32.mrf.mxu0
        %v2573 = vpop.f32.mrf.mxu0
        %v2574 = vadd.f32 %v2478, %v2573
        %v2575 = vpop.f32.mrf.mxu0
        %2576 = vdwg.mxu0
        %v2577 = vpack.c.bf16 %v2333, %v2332
        %v2578 = vpack.c.bf16 %v2335, %v2334
        %v2579 = vld [vmem:[#allocation20] sm:$0xf]
        %v2580 = vld [vmem:[#allocation20 + $0x4] sm:$0xf]
        %v2581 = vld [vmem:[#allocation20 + $0x8] sm:$0xf]
        %v2582 = vld [vmem:[#allocation20 + $0xc] sm:$0xf]
        %v2583 = vld [vmem:[#allocation20 + $0x10] sm:$0xf]
        %v2584 = vld [vmem:[#allocation20 + $0x14] sm:$0xf]
        %v2585 = vld [vmem:[#allocation20 + $0x18] sm:$0xf]
        %v2586 = vld [vmem:[#allocation20 + $0x1c] sm:$0xf]
        %v2587 = vld [vmem:[#allocation20 + $0x20] sm:$0xf]
        %v2588 = vld [vmem:[#allocation20 + $0x24] sm:$0xf]
        %v2589 = vld [vmem:[#allocation20 + $0x28] sm:$0xf]
        %v2590 = vld [vmem:[#allocation20 + $0x2c] sm:$0xf]
        %v2591 = vld [vmem:[#allocation20 + $0x30] sm:$0xf]
        %v2592 = vld [vmem:[#allocation20 + $0x34] sm:$0xf]
        %v2593 = vld [vmem:[#allocation20 + $0x38] sm:$0xf]
        %v2594 = vld [vmem:[#allocation20 + $0x3c] sm:$0xf]
        %v2595 = vld [vmem:[%s43] sm:$0x1]
        %v2597 = vlaneseq
        %v2598 = vshrl.u32 %v2597, 7
        %v2599 = vsub.s32 0, %v2598
        %v2600 = vrot.slane %v2595, %v2599
        %v2618 = vunpack.c.l.b16 %v2579
        %v2619 = vunpack.c.l.b16 %v2580
        %v2620 = vunpack.c.l.b16 %v2581
        %v2621 = vunpack.c.l.b16 %v2582
        %v2622 = vunpack.c.l.b16 %v2583
        %v2623 = vunpack.c.l.b16 %v2584
        %v2624 = vunpack.c.l.b16 %v2585
        %v2625 = vunpack.c.l.b16 %v2586
        %v2626 = vunpack.c.l.b16 %v2587
        %v2627 = vunpack.c.l.b16 %v2588
        %v2628 = vunpack.c.l.b16 %v2589
        %v2629 = vunpack.c.l.b16 %v2590
        %v2630 = vunpack.c.l.b16 %v2591
        %v2631 = vunpack.c.l.b16 %v2592
        %v2632 = vunpack.c.l.b16 %v2593
        %v2633 = vunpack.c.l.b16 %v2594
        %v2634 = vpack.c.b16 %v2619, %v2618
        %v2635 = vpack.c.b16 %v2621, %v2620
        %v2636 = vpack.c.b16 %v2623, %v2622
        %v2637 = vpack.c.b16 %v2625, %v2624
        %v2638 = vpack.c.b16 %v2627, %v2626
        %v2639 = vpack.c.b16 %v2629, %v2628
        %v2640 = vpack.c.b16 %v2631, %v2630
        %v2641 = vpack.c.b16 %v2633, %v2632
        %2650 = vmatprep.subr.bf16.mxu0 0
        %2651 = vmatpush1.bf16.msra.mxu0 %v2641
        %2652 = vmatprep.subr.bf16.mxu0 0
        %2653 = vmatpush1.bf16.msra.mxu0 %v2640
        %2654 = vmatprep.subr.bf16.mxu0 0
        %2655 = vmatpush1.bf16.msra.mxu0 %v2639
        %2656 = vmatprep.subr.bf16.mxu0 0
        %2657 = vmatpush1.bf16.msra.mxu0 %v2638
        %2658 = vmatprep.subr.bf16.mxu0 0
        %2659 = vmatpush1.bf16.msra.mxu0 %v2637
        %2660 = vmatprep.subr.bf16.mxu0 0
        %2661 = vmatpush1.bf16.msra.mxu0 %v2636
        %2662 = vmatprep.subr.bf16.mxu0 0
        %2663 = vmatpush1.bf16.msra.mxu0 %v2635
        %2664 = vmatprep.subr.bf16.mxu0 0
        %2665 = vmatpush1.bf16.msra.mxu0 %v2634
        %2666 = vmatprep.subr.bf16.mxu0 0
        %2667 = vmatpush2.bf16.msra.mxu0 0
        %2668 = vmatprep.subr.bf16.mxu0 0
        %2669 = vmatpush2.bf16.msra.mxu0 0
        %2670 = vmatprep.subr.bf16.mxu0 0
        %2671 = vmatpush2.bf16.msra.mxu0 0
        %2672 = vmatprep.subr.bf16.mxu0 0
        %2673 = vmatpush2.bf16.msra.mxu0 0
        %2674 = vmatprep.subr.bf16.mxu0 0
        %2675 = vmatpush2.bf16.msra.mxu0 0
        %2676 = vmatprep.subr.bf16.mxu0 0
        %2677 = vmatpush2.bf16.msra.mxu0 0
        %2678 = vmatprep.subr.bf16.mxu0 0
        %2679 = vmatpush2.bf16.msra.mxu0 0
        %2680 = vmatprep.subr.bf16.mxu0 0
        %2681 = vmatpush2.bf16.msra.mxu0 0
        %2682 = vmatprep.mubr.bf16.mxu0 0
        %2683 = vmatmul.mubr.bf16.gmra.mxu0 %v2577
        %v2684 = vpop.f32.mrf.mxu0
        %v2685 = vadd.f32 %v2600, %v2684
        %v2686 = vpop.f32.mrf.mxu0
        %v2687 = vpop.f32.mrf.mxu0
        %v2688 = vadd.f32 %v2600, %v2687
        %v2689 = vpop.f32.mrf.mxu0
        %2690 = vmatprep.mubr.bf16.mxu0 0
        %2691 = vmatmul.mubr.bf16.gmra.mxu0 %v2578
        %v2692 = vpop.f32.mrf.mxu0
        %v2693 = vadd.f32 %v2600, %v2692
        %v2694 = vpop.f32.mrf.mxu0
        %v2695 = vpop.f32.mrf.mxu0
        %v2696 = vadd.f32 %v2600, %v2695
        %v2697 = vpop.f32.mrf.mxu0
        %2698 = vdwg.mxu0
        %v2699 = vmul.f32 %v2449, 0.17677669
        %v2700 = vmul.f32 %v2452, 0.17677669
        %v2701 = vpack.c.bf16 %v2700, %v2699
        %v2702 = vpack.c.bf16 %v2566, %v2563
        %v2703 = vpack.c.bf16 %v2574, %v2571
        %v2704 = vpack.c.bf16 %v2688, %v2685
        %v2705 = vpack.c.bf16 %v2696, %v2693
        %v2707 = vsel %vm1610, %v2701, 0
        %v2710 = vsel %vm1610, %v2702, 0
        %v2713 = vsel %vm1610, %v2703, 0
        %2715 = vmatprep.subr.bf16.mxu0 0
        %2716 = vmatpush1.bf16.xpose.msra.mxu0 0
        %2717 = vmatprep.subr.bf16.mxu0 0
        %2718 = vmatpush1.bf16.xpose.msra.mxu0 0
        %2719 = vmatprep.subr.bf16.mxu0 0
        %2720 = vmatpush1.bf16.xpose.msra.mxu0 0
        %2721 = vmatprep.subr.bf16.mxu0 0
        %2722 = vmatpush1.bf16.xpose.msra.mxu0 0
        %2723 = vmatprep.subr.bf16.mxu0 0
        %2724 = vmatpush1.bf16.xpose.msra.mxu0 0
        %2725 = vmatprep.subr.bf16.mxu0 0
        %2726 = vmatpush1.bf16.xpose.msra.mxu0 0
        %2727 = vmatprep.subr.bf16.mxu0 0
        %2728 = vmatpush1.bf16.xpose.msra.mxu0 %v2713
        %2729 = vmatprep.subr.bf16.mxu0 0
        %2730 = vmatpush1.bf16.xpose.msra.mxu0 %v2710
        %2731 = vmatprep.subr.bf16.mxu0 0
        %2732 = vmatpush2.bf16.xpose.msra.mxu0 0
        %2733 = vmatprep.subr.bf16.mxu0 0
        %2734 = vmatpush2.bf16.xpose.msra.mxu0 0
        %2735 = vmatprep.subr.bf16.mxu0 0
        %2736 = vmatpush2.bf16.xpose.msra.mxu0 0
        %2737 = vmatprep.subr.bf16.mxu0 0
        %2738 = vmatpush2.bf16.xpose.msra.mxu0 0
        %2739 = vmatprep.subr.bf16.mxu0 0
        %2740 = vmatpush2.bf16.xpose.msra.mxu0 0
        %2741 = vmatprep.subr.bf16.mxu0 0
        %2742 = vmatpush2.bf16.xpose.msra.mxu0 0
        %2743 = vmatprep.subr.bf16.mxu0 0
        %2744 = vmatpush2.bf16.xpose.msra.mxu0 0
        %2745 = vmatprep.subr.bf16.mxu0 0
        %2746 = vmatpush2.bf16.xpose.msra.mxu0 0
        %2747 = vmatprep.mubr.bf16.mxu0 0
        %2748 = vmatmul.mubr.bf16.gmra.mxu0 %v2707
        %v2749 = vpop.f32.mrf.mxu0
        %v2750 = vadd.f32 0.0, %v2749
        %v2751 = vpop.f32.mrf.mxu0
        %v2752 = vpop.f32.mrf.mxu0
        %v2753 = vadd.f32 0.0, %v2752
        %v2754 = vpop.f32.mrf.mxu0
        %2755 = vdwg.mxu0
        %v2756 = vsel %vm1610, %v2750, -inf
        %2757 = vmax.xlane.f32.xlu0 %v2756
        %v2758 = vpop.xlane.xlu0 %2757
        %v2759 = vsel %vm1610, %v2753, -inf
        %2760 = vmax.xlane.f32.xlu0 %v2759
        %v2761 = vpop.xlane.xlu0 %2760
        %v2762 = vsub.f32 %v2750, %v2758
        %v2763 = vsub.f32 %v2753, %v2761
        %v2764 = vmul.f32 %v2762, 1.442695
        %v2765 = vpow.pop %v2764
        %v2766 = vmul.f32 %v2763, 1.442695
        %v2767 = vpow.pop %v2766
        %v2768 = vsel %vm1610, %v2765, 0.0
        %2769 = vadd.xlane.f32.xlu0 %v2768
        %v2770 = vpop.xlane.xlu0 %2769
        %v2771 = vsel %vm1610, %v2767, 0.0
        %2772 = vadd.xlane.f32.xlu0 %v2771
        %v2773 = vpop.xlane.xlu0 %2772
        %v2774 = vrcp.pop %v2770
        %v2775 = vrcp.pop %v2773
        %v2776 = vmul.f32 %v2765, %v2774
        %v2777 = vmul.f32 %v2767, %v2775
        %v2778 = vpack.c.bf16 %v2777, %v2776
        %v2780 = vsel %vm1610, %v2778, 0
        %2782 = vmatprep.subr.bf16.mxu0 0
        %2783 = vmatpush1.bf16.msra.mxu0 0
        %2784 = vmatprep.subr.bf16.mxu0 0
        %2785 = vmatpush1.bf16.msra.mxu0 0
        %2786 = vmatprep.subr.bf16.mxu0 0
        %2787 = vmatpush1.bf16.msra.mxu0 0
        %2788 = vmatprep.subr.bf16.mxu0 0
        %2789 = vmatpush1.bf16.msra.mxu0 0
        %2790 = vmatprep.subr.bf16.mxu0 0
        %2791 = vmatpush1.bf16.msra.mxu0 0
        %2792 = vmatprep.subr.bf16.mxu0 0
        %2793 = vmatpush1.bf16.msra.mxu0 0
        %2794 = vmatprep.subr.bf16.mxu0 0
        %2795 = vmatpush1.bf16.msra.mxu0 %v2705
        %2796 = vmatprep.subr.bf16.mxu0 0
        %2797 = vmatpush1.bf16.msra.mxu0 %v2704
        %2798 = vmatprep.subr.bf16.mxu0 0
        %2799 = vmatpush2.bf16.msra.mxu0 0
        %2800 = vmatprep.subr.bf16.mxu0 0
        %2801 = vmatpush2.bf16.msra.mxu0 0
        %2802 = vmatprep.subr.bf16.mxu0 0
        %2803 = vmatpush2.bf16.msra.mxu0 0
        %2804 = vmatprep.subr.bf16.mxu0 0
        %2805 = vmatpush2.bf16.msra.mxu0 0
        %2806 = vmatprep.subr.bf16.mxu0 0
        %2807 = vmatpush2.bf16.msra.mxu0 0
        %2808 = vmatprep.subr.bf16.mxu0 0
        %2809 = vmatpush2.bf16.msra.mxu0 0
        %2810 = vmatprep.subr.bf16.mxu0 0
        %2811 = vmatpush2.bf16.msra.mxu0 0
        %2812 = vmatprep.subr.bf16.mxu0 0
        %2813 = vmatpush2.bf16.msra.mxu0 0
        %2814 = vmatprep.mubr.bf16.mxu0 0
        %2815 = vmatmul.mubr.bf16.gmra.mxu0 %v2780
        %v2816 = vpop.f32.mrf.mxu0
        %v2817 = vadd.f32 0.0, %v2816
        %v2818 = vpop.f32.mrf.mxu0
        %v2819 = vpop.f32.mrf.mxu0
        %v2820 = vadd.f32 0.0, %v2819
        %v2821 = vpop.f32.mrf.mxu0
        %2822 = vdwg.mxu0
        %2823 = vst.msk [vmem:[#allocation2] sm:$0xff] %vm1610, %v2817
        %2824 = vst.msk [vmem:[#allocation2 + $0x8] sm:$0xff] %vm1610, %v2820
        %2826 = vrot.lane.b32.xlu0 %v2701, 96
        %v2827 = vpop.permute.xlu0 %2826
        %2830 = vrot.lane.b32.xlu0 %v2702, 96
        %v2831 = vpop.permute.xlu0 %2830
        %2832 = vrot.lane.b32.xlu0 %v2703, 96
        %v2833 = vpop.permute.xlu0 %2832
        %v2835 = vsel %vm1610, %v2827, 0
        %v2838 = vsel %vm1610, %v2831, 0
        %v2841 = vsel %vm1610, %v2833, 0
        %2843 = vmatprep.subr.bf16.mxu0 0
        %2844 = vmatpush1.bf16.xpose.msra.mxu0 0
        %2845 = vmatprep.subr.bf16.mxu0 0
        %2846 = vmatpush1.bf16.xpose.msra.mxu0 0
        %2847 = vmatprep.subr.bf16.mxu0 0
        %2848 = vmatpush1.bf16.xpose.msra.mxu0 0
        %2849 = vmatprep.subr.bf16.mxu0 0
        %2850 = vmatpush1.bf16.xpose.msra.mxu0 0
        %2851 = vmatprep.subr.bf16.mxu0 0
        %2852 = vmatpush1.bf16.xpose.msra.mxu0 0
        %2853 = vmatprep.subr.bf16.mxu0 0
        %2854 = vmatpush1.bf16.xpose.msra.mxu0 0
        %2855 = vmatprep.subr.bf16.mxu0 0
        %2856 = vmatpush1.bf16.xpose.msra.mxu0 %v2841
        %2857 = vmatprep.subr.bf16.mxu0 0
        %2858 = vmatpush1.bf16.xpose.msra.mxu0 %v2838
        %2859 = vmatprep.subr.bf16.mxu0 0
        %2860 = vmatpush2.bf16.xpose.msra.mxu0 0
        %2861 = vmatprep.subr.bf16.mxu0 0
        %2862 = vmatpush2.bf16.xpose.msra.mxu0 0
        %2863 = vmatprep.subr.bf16.mxu0 0
        %2864 = vmatpush2.bf16.xpose.msra.mxu0 0
        %2865 = vmatprep.subr.bf16.mxu0 0
        %2866 = vmatpush2.bf16.xpose.msra.mxu0 0
        %2867 = vmatprep.subr.bf16.mxu0 0
        %2868 = vmatpush2.bf16.xpose.msra.mxu0 0
        %2869 = vmatprep.subr.bf16.mxu0 0
        %2870 = vmatpush2.bf16.xpose.msra.mxu0 0
        %2871 = vmatprep.subr.bf16.mxu0 0
        %2872 = vmatpush2.bf16.xpose.msra.mxu0 0
        %2873 = vmatprep.subr.bf16.mxu0 0
        %2874 = vmatpush2.bf16.xpose.msra.mxu0 0
        %2875 = vmatprep.mubr.bf16.mxu0 0
        %2876 = vmatmul.mubr.bf16.gmra.mxu0 %v2835
        %v2877 = vpop.f32.mrf.mxu0
        %v2878 = vadd.f32 0.0, %v2877
        %v2879 = vpop.f32.mrf.mxu0
        %v2880 = vpop.f32.mrf.mxu0
        %v2881 = vadd.f32 0.0, %v2880
        %v2882 = vpop.f32.mrf.mxu0
        %2883 = vdwg.mxu0
        %v2884 = vsel %vm1610, %v2878, -inf
        %2885 = vmax.xlane.f32.xlu0 %v2884
        %v2886 = vpop.xlane.xlu0 %2885
        %v2887 = vsel %vm1610, %v2881, -inf
        %2888 = vmax.xlane.f32.xlu0 %v2887
        %v2889 = vpop.xlane.xlu0 %2888
        %v2890 = vsub.f32 %v2878, %v2886
        %v2891 = vsub.f32 %v2881, %v2889
        %v2892 = vmul.f32 %v2890, 1.442695
        %v2893 = vpow.pop %v2892
        %v2894 = vmul.f32 %v2891, 1.442695
        %v2895 = vpow.pop %v2894
        %v2896 = vsel %vm1610, %v2893, 0.0
        %2897 = vadd.xlane.f32.xlu0 %v2896
        %v2898 = vpop.xlane.xlu0 %2897
        %v2899 = vsel %vm1610, %v2895, 0.0
        %2900 = vadd.xlane.f32.xlu0 %v2899
        %v2901 = vpop.xlane.xlu0 %2900
        %v2902 = vrcp.pop %v2898
        %v2903 = vrcp.pop %v2901
        %v2904 = vmul.f32 %v2893, %v2902
        %v2905 = vmul.f32 %v2895, %v2903
        %v2906 = vpack.c.bf16 %v2905, %v2904
        %2909 = vrot.lane.b32.xlu0 %v2704, 96
        %v2910 = vpop.permute.xlu0 %2909
        %2911 = vrot.lane.b32.xlu0 %v2705, 96
        %v2912 = vpop.permute.xlu0 %2911
        %v2916 = vsel %vm1610, %v2906, 0
        %2918 = vmatprep.subr.bf16.mxu0 0
        %2919 = vmatpush1.bf16.msra.mxu0 0
        %2920 = vmatprep.subr.bf16.mxu0 0
        %2921 = vmatpush1.bf16.msra.mxu0 0
        %2922 = vmatprep.subr.bf16.mxu0 0
        %2923 = vmatpush1.bf16.msra.mxu0 0
        %2924 = vmatprep.subr.bf16.mxu0 0
        %2925 = vmatpush1.bf16.msra.mxu0 0
        %2926 = vmatprep.subr.bf16.mxu0 0
        %2927 = vmatpush1.bf16.msra.mxu0 0
        %2928 = vmatprep.subr.bf16.mxu0 0
        %2929 = vmatpush1.bf16.msra.mxu0 0
        %2930 = vmatprep.subr.bf16.mxu0 0
        %2931 = vmatpush1.bf16.msra.mxu0 %v2912
        %2932 = vmatprep.subr.bf16.mxu0 0
        %2933 = vmatpush1.bf16.msra.mxu0 %v2910
        %2934 = vmatprep.subr.bf16.mxu0 0
        %2935 = vmatpush2.bf16.msra.mxu0 0
        %2936 = vmatprep.subr.bf16.mxu0 0
        %2937 = vmatpush2.bf16.msra.mxu0 0
        %2938 = vmatprep.subr.bf16.mxu0 0
        %2939 = vmatpush2.bf16.msra.mxu0 0
        %2940 = vmatprep.subr.bf16.mxu0 0
        %2941 = vmatpush2.bf16.msra.mxu0 0
        %2942 = vmatprep.subr.bf16.mxu0 0
        %2943 = vmatpush2.bf16.msra.mxu0 0
        %2944 = vmatprep.subr.bf16.mxu0 0
        %2945 = vmatpush2.bf16.msra.mxu0 0
        %2946 = vmatprep.subr.bf16.mxu0 0
        %2947 = vmatpush2.bf16.msra.mxu0 0
        %2948 = vmatprep.subr.bf16.mxu0 0
        %2949 = vmatpush2.bf16.msra.mxu0 0
        %2950 = vmatprep.mubr.bf16.mxu0 0
        %2951 = vmatmul.mubr.bf16.gmra.mxu0 %v2916
        %v2952 = vpop.f32.mrf.mxu0
        %v2953 = vadd.f32 0.0, %v2952
        %v2954 = vpop.f32.mrf.mxu0
        %v2955 = vpop.f32.mrf.mxu0
        %v2956 = vadd.f32 0.0, %v2955
        %v2957 = vpop.f32.mrf.mxu0
        %2958 = vdwg.mxu0
        %2961 = vrot.lane.b32.xlu0 %v2953, 32
        %v2962 = vpop.permute.xlu0 %2961
        %2963 = vrot.lane.b32.xlu0 %v2956, 32
        %v2964 = vpop.permute.xlu0 %2963
        %2967 = vst.msk [vmem:[#allocation2] sm:$0xff] %vm1860, %v2962
        %2968 = vst.msk [vmem:[#allocation2 + $0x8] sm:$0xff] %vm1860, %v2964
        %2969 = vrot.lane.b32.xlu0 %v2701, 64
        %v2970 = vpop.permute.xlu0 %2969
        %2971 = vrot.lane.b32.xlu0 %v2702, 64
        %v2972 = vpop.permute.xlu0 %2971
        %2973 = vrot.lane.b32.xlu0 %v2703, 64
        %v2974 = vpop.permute.xlu0 %2973
        %v2976 = vsel %vm1610, %v2970, 0
        %v2979 = vsel %vm1610, %v2972, 0
        %v2982 = vsel %vm1610, %v2974, 0
        %2984 = vmatprep.subr.bf16.mxu0 0
        %2985 = vmatpush1.bf16.xpose.msra.mxu0 0
        %2986 = vmatprep.subr.bf16.mxu0 0
        %2987 = vmatpush1.bf16.xpose.msra.mxu0 0
        %2988 = vmatprep.subr.bf16.mxu0 0
        %2989 = vmatpush1.bf16.xpose.msra.mxu0 0
        %2990 = vmatprep.subr.bf16.mxu0 0
        %2991 = vmatpush1.bf16.xpose.msra.mxu0 0
        %2992 = vmatprep.subr.bf16.mxu0 0
        %2993 = vmatpush1.bf16.xpose.msra.mxu0 0
        %2994 = vmatprep.subr.bf16.mxu0 0
        %2995 = vmatpush1.bf16.xpose.msra.mxu0 0
        %2996 = vmatprep.subr.bf16.mxu0 0
        %2997 = vmatpush1.bf16.xpose.msra.mxu0 %v2982
        %2998 = vmatprep.subr.bf16.mxu0 0
        %2999 = vmatpush1.bf16.xpose.msra.mxu0 %v2979
        %3000 = vmatprep.subr.bf16.mxu0 0
        %3001 = vmatpush2.bf16.xpose.msra.mxu0 0
        %3002 = vmatprep.subr.bf16.mxu0 0
        %3003 = vmatpush2.bf16.xpose.msra.mxu0 0
        %3004 = vmatprep.subr.bf16.mxu0 0
        %3005 = vmatpush2.bf16.xpose.msra.mxu0 0
        %3006 = vmatprep.subr.bf16.mxu0 0
        %3007 = vmatpush2.bf16.xpose.msra.mxu0 0
        %3008 = vmatprep.subr.bf16.mxu0 0
        %3009 = vmatpush2.bf16.xpose.msra.mxu0 0
        %3010 = vmatprep.subr.bf16.mxu0 0
        %3011 = vmatpush2.bf16.xpose.msra.mxu0 0
        %3012 = vmatprep.subr.bf16.mxu0 0
        %3013 = vmatpush2.bf16.xpose.msra.mxu0 0
        %3014 = vmatprep.subr.bf16.mxu0 0
        %3015 = vmatpush2.bf16.xpose.msra.mxu0 0
        %3016 = vmatprep.mubr.bf16.mxu0 0
        %3017 = vmatmul.mubr.bf16.gmra.mxu0 %v2976
        %v3018 = vpop.f32.mrf.mxu0
        %v3019 = vadd.f32 0.0, %v3018
        %v3020 = vpop.f32.mrf.mxu0
        %v3021 = vpop.f32.mrf.mxu0
        %v3022 = vadd.f32 0.0, %v3021
        %v3023 = vpop.f32.mrf.mxu0
        %3024 = vdwg.mxu0
        %v3025 = vsel %vm1610, %v3019, -inf
        %3026 = vmax.xlane.f32.xlu0 %v3025
        %v3027 = vpop.xlane.xlu0 %3026
        %v3028 = vsel %vm1610, %v3022, -inf
        %3029 = vmax.xlane.f32.xlu0 %v3028
        %v3030 = vpop.xlane.xlu0 %3029
        %v3031 = vsub.f32 %v3019, %v3027
        %v3032 = vsub.f32 %v3022, %v3030
        %v3033 = vmul.f32 %v3031, 1.442695
        %v3034 = vpow.pop %v3033
        %v3035 = vmul.f32 %v3032, 1.442695
        %v3036 = vpow.pop %v3035
        %v3037 = vsel %vm1610, %v3034, 0.0
        %3038 = vadd.xlane.f32.xlu0 %v3037
        %v3039 = vpop.xlane.xlu0 %3038
        %v3040 = vsel %vm1610, %v3036, 0.0
        %3041 = vadd.xlane.f32.xlu0 %v3040
        %v3042 = vpop.xlane.xlu0 %3041
        %v3043 = vrcp.pop %v3039
        %v3044 = vrcp.pop %v3042
        %v3045 = vmul.f32 %v3034, %v3043
        %v3046 = vmul.f32 %v3036, %v3044
        %v3047 = vpack.c.bf16 %v3046, %v3045
        %3048 = vrot.lane.b32.xlu0 %v2704, 64
        %v3049 = vpop.permute.xlu0 %3048
        %3050 = vrot.lane.b32.xlu0 %v2705, 64
        %v3051 = vpop.permute.xlu0 %3050
        %v3055 = vsel %vm1610, %v3047, 0
        %3057 = vmatprep.subr.bf16.mxu0 0
        %3058 = vmatpush1.bf16.msra.mxu0 0
        %3059 = vmatprep.subr.bf16.mxu0 0
        %3060 = vmatpush1.bf16.msra.mxu0 0
        %3061 = vmatprep.subr.bf16.mxu0 0
        %3062 = vmatpush1.bf16.msra.mxu0 0
        %3063 = vmatprep.subr.bf16.mxu0 0
        %3064 = vmatpush1.bf16.msra.mxu0 0
        %3065 = vmatprep.subr.bf16.mxu0 0
        %3066 = vmatpush1.bf16.msra.mxu0 0
        %3067 = vmatprep.subr.bf16.mxu0 0
        %3068 = vmatpush1.bf16.msra.mxu0 0
        %3069 = vmatprep.subr.bf16.mxu0 0
        %3070 = vmatpush1.bf16.msra.mxu0 %v3051
        %3071 = vmatprep.subr.bf16.mxu0 0
        %3072 = vmatpush1.bf16.msra.mxu0 %v3049
        %3073 = vmatprep.subr.bf16.mxu0 0
        %3074 = vmatpush2.bf16.msra.mxu0 0
        %3075 = vmatprep.subr.bf16.mxu0 0
        %3076 = vmatpush2.bf16.msra.mxu0 0
        %3077 = vmatprep.subr.bf16.mxu0 0
        %3078 = vmatpush2.bf16.msra.mxu0 0
        %3079 = vmatprep.subr.bf16.mxu0 0
        %3080 = vmatpush2.bf16.msra.mxu0 0
        %3081 = vmatprep.subr.bf16.mxu0 0
        %3082 = vmatpush2.bf16.msra.mxu0 0
        %3083 = vmatprep.subr.bf16.mxu0 0
        %3084 = vmatpush2.bf16.msra.mxu0 0
        %3085 = vmatprep.subr.bf16.mxu0 0
        %3086 = vmatpush2.bf16.msra.mxu0 0
        %3087 = vmatprep.subr.bf16.mxu0 0
        %3088 = vmatpush2.bf16.msra.mxu0 0
        %3089 = vmatprep.mubr.bf16.mxu0 0
        %3090 = vmatmul.mubr.bf16.gmra.mxu0 %v3055
        %v3091 = vpop.f32.mrf.mxu0
        %v3092 = vadd.f32 0.0, %v3091
        %v3093 = vpop.f32.mrf.mxu0
        %v3094 = vpop.f32.mrf.mxu0
        %v3095 = vadd.f32 0.0, %v3094
        %v3096 = vpop.f32.mrf.mxu0
        %3097 = vdwg.mxu0
        %3100 = vrot.lane.b32.xlu0 %v3092, 64
        %v3101 = vpop.permute.xlu0 %3100
        %3102 = vrot.lane.b32.xlu0 %v3095, 64
        %v3103 = vpop.permute.xlu0 %3102
        %3106 = vst.msk [vmem:[#allocation2] sm:$0xff] %vm1992, %v3101
        %3107 = vst.msk [vmem:[#allocation2 + $0x8] sm:$0xff] %vm1992, %v3103
        %3108 = vrot.lane.b32.xlu0 %v2701, 32
        %v3109 = vpop.permute.xlu0 %3108
        %3110 = vrot.lane.b32.xlu0 %v2702, 32
        %v3111 = vpop.permute.xlu0 %3110
        %3112 = vrot.lane.b32.xlu0 %v2703, 32
        %v3113 = vpop.permute.xlu0 %3112
        %v3115 = vsel %vm1610, %v3109, 0
        %v3118 = vsel %vm1610, %v3111, 0
        %v3121 = vsel %vm1610, %v3113, 0
        %3123 = vmatprep.subr.bf16.mxu0 0
        %3124 = vmatpush1.bf16.xpose.msra.mxu0 0
        %3125 = vmatprep.subr.bf16.mxu0 0
        %3126 = vmatpush1.bf16.xpose.msra.mxu0 0
        %3127 = vmatprep.subr.bf16.mxu0 0
        %3128 = vmatpush1.bf16.xpose.msra.mxu0 0
        %3129 = vmatprep.subr.bf16.mxu0 0
        %3130 = vmatpush1.bf16.xpose.msra.mxu0 0
        %3131 = vmatprep.subr.bf16.mxu0 0
        %3132 = vmatpush1.bf16.xpose.msra.mxu0 0
        %3133 = vmatprep.subr.bf16.mxu0 0
        %3134 = vmatpush1.bf16.xpose.msra.mxu0 0
        %3135 = vmatprep.subr.bf16.mxu0 0
        %3136 = vmatpush1.bf16.xpose.msra.mxu0 %v3121
        %3137 = vmatprep.subr.bf16.mxu0 0
        %3138 = vmatpush1.bf16.xpose.msra.mxu0 %v3118
        %3139 = vmatprep.subr.bf16.mxu0 0
        %3140 = vmatpush2.bf16.xpose.msra.mxu0 0
        %3141 = vmatprep.subr.bf16.mxu0 0
        %3142 = vmatpush2.bf16.xpose.msra.mxu0 0
        %3143 = vmatprep.subr.bf16.mxu0 0
        %3144 = vmatpush2.bf16.xpose.msra.mxu0 0
        %3145 = vmatprep.subr.bf16.mxu0 0
        %3146 = vmatpush2.bf16.xpose.msra.mxu0 0
        %3147 = vmatprep.subr.bf16.mxu0 0
        %3148 = vmatpush2.bf16.xpose.msra.mxu0 0
        %3149 = vmatprep.subr.bf16.mxu0 0
        %3150 = vmatpush2.bf16.xpose.msra.mxu0 0
        %3151 = vmatprep.subr.bf16.mxu0 0
        %3152 = vmatpush2.bf16.xpose.msra.mxu0 0
        %3153 = vmatprep.subr.bf16.mxu0 0
        %3154 = vmatpush2.bf16.xpose.msra.mxu0 0
        %3155 = vmatprep.mubr.bf16.mxu0 0
        %3156 = vmatmul.mubr.bf16.gmra.mxu0 %v3115
        %v3157 = vpop.f32.mrf.mxu0
        %v3158 = vadd.f32 0.0, %v3157
        %v3159 = vpop.f32.mrf.mxu0
        %v3160 = vpop.f32.mrf.mxu0
        %v3161 = vadd.f32 0.0, %v3160
        %v3162 = vpop.f32.mrf.mxu0
        %3163 = vdwg.mxu0
        %v3164 = vsel %vm1610, %v3158, -inf
        %3165 = vmax.xlane.f32.xlu0 %v3164
        %v3166 = vpop.xlane.xlu0 %3165
        %v3167 = vsel %vm1610, %v3161, -inf
        %3168 = vmax.xlane.f32.xlu0 %v3167
        %v3169 = vpop.xlane.xlu0 %3168
        %v3170 = vsub.f32 %v3158, %v3166
        %v3171 = vsub.f32 %v3161, %v3169
        %v3172 = vmul.f32 %v3170, 1.442695
        %v3173 = vpow.pop %v3172
        %v3174 = vmul.f32 %v3171, 1.442695
        %v3175 = vpow.pop %v3174
        %v3176 = vsel %vm1610, %v3173, 0.0
        %3177 = vadd.xlane.f32.xlu0 %v3176
        %v3178 = vpop.xlane.xlu0 %3177
        %v3179 = vsel %vm1610, %v3175, 0.0
        %3180 = vadd.xlane.f32.xlu0 %v3179
        %v3181 = vpop.xlane.xlu0 %3180
        %v3182 = vrcp.pop %v3178
        %v3183 = vrcp.pop %v3181
        %v3184 = vmul.f32 %v3173, %v3182
        %v3185 = vmul.f32 %v3175, %v3183
        %v3186 = vpack.c.bf16 %v3185, %v3184
        %3187 = vrot.lane.b32.xlu0 %v2704, 32
        %v3188 = vpop.permute.xlu0 %3187
        %3189 = vrot.lane.b32.xlu0 %v2705, 32
        %v3190 = vpop.permute.xlu0 %3189
        %v3194 = vsel %vm1610, %v3186, 0
        %3196 = vmatprep.subr.bf16.mxu0 0
        %3197 = vmatpush1.bf16.msra.mxu0 0
        %3198 = vmatprep.subr.bf16.mxu0 0
        %3199 = vmatpush1.bf16.msra.mxu0 0
        %3200 = vmatprep.subr.bf16.mxu0 0
        %3201 = vmatpush1.bf16.msra.mxu0 0
        %3202 = vmatprep.subr.bf16.mxu0 0
        %3203 = vmatpush1.bf16.msra.mxu0 0
        %3204 = vmatprep.subr.bf16.mxu0 0
        %3205 = vmatpush1.bf16.msra.mxu0 0
        %3206 = vmatprep.subr.bf16.mxu0 0
        %3207 = vmatpush1.bf16.msra.mxu0 0
        %3208 = vmatprep.subr.bf16.mxu0 0
        %3209 = vmatpush1.bf16.msra.mxu0 %v3190
        %3210 = vmatprep.subr.bf16.mxu0 0
        %3211 = vmatpush1.bf16.msra.mxu0 %v3188
        %3212 = vmatprep.subr.bf16.mxu0 0
        %3213 = vmatpush2.bf16.msra.mxu0 0
        %3214 = vmatprep.subr.bf16.mxu0 0
        %3215 = vmatpush2.bf16.msra.mxu0 0
        %3216 = vmatprep.subr.bf16.mxu0 0
        %3217 = vmatpush2.bf16.msra.mxu0 0
        %3218 = vmatprep.subr.bf16.mxu0 0
        %3219 = vmatpush2.bf16.msra.mxu0 0
        %3220 = vmatprep.subr.bf16.mxu0 0
        %3221 = vmatpush2.bf16.msra.mxu0 0
        %3222 = vmatprep.subr.bf16.mxu0 0
        %3223 = vmatpush2.bf16.msra.mxu0 0
        %3224 = vmatprep.subr.bf16.mxu0 0
        %3225 = vmatpush2.bf16.msra.mxu0 0
        %3226 = vmatprep.subr.bf16.mxu0 0
        %3227 = vmatpush2.bf16.msra.mxu0 0
        %3228 = vmatprep.mubr.bf16.mxu0 0
        %3229 = vmatmul.mubr.bf16.gmra.mxu0 %v3194
        %v3230 = vpop.f32.mrf.mxu0
        %v3231 = vadd.f32 0.0, %v3230
        %v3232 = vpop.f32.mrf.mxu0
        %v3233 = vpop.f32.mrf.mxu0
        %v3234 = vadd.f32 0.0, %v3233
        %v3235 = vpop.f32.mrf.mxu0
        %3236 = vdwg.mxu0
        %3239 = vrot.lane.b32.xlu0 %v3231, 96
        %v3240 = vpop.permute.xlu0 %3239
        %3241 = vrot.lane.b32.xlu0 %v3234, 96
        %v3242 = vpop.permute.xlu0 %3241
        %3245 = vst.msk [vmem:[#allocation2] sm:$0xff] %vm2124, %v3240
        %3246 = vst.msk [vmem:[#allocation2 + $0x8] sm:$0xff] %vm2124, %v3242
        %v3247 = vld [vmem:[#allocation2] sm:$0xff]
        %v3248 = vld [vmem:[#allocation2 + $0x8] sm:$0xff]
        %v3249 = vpack.c.bf16 %v3248, %v3247
        %v3250 = vld [vmem:[#allocation21] sm:$0xf]
        %v3251 = vld [vmem:[#allocation21 + $0x4] sm:$0xf]
        %v3252 = vld [vmem:[#allocation21 + $0x8] sm:$0xf]
        %v3253 = vld [vmem:[#allocation21 + $0xc] sm:$0xf]
        %v3254 = vld [vmem:[#allocation21 + $0x10] sm:$0xf]
        %v3255 = vld [vmem:[#allocation21 + $0x14] sm:$0xf]
        %v3256 = vld [vmem:[#allocation21 + $0x18] sm:$0xf]
        %v3257 = vld [vmem:[#allocation21 + $0x1c] sm:$0xf]
        %v3258 = vld [vmem:[#allocation21 + $0x20] sm:$0xf]
        %v3259 = vld [vmem:[#allocation21 + $0x24] sm:$0xf]
        %v3260 = vld [vmem:[#allocation21 + $0x28] sm:$0xf]
        %v3261 = vld [vmem:[#allocation21 + $0x2c] sm:$0xf]
        %v3262 = vld [vmem:[#allocation21 + $0x30] sm:$0xf]
        %v3263 = vld [vmem:[#allocation21 + $0x34] sm:$0xf]
        %v3264 = vld [vmem:[#allocation21 + $0x38] sm:$0xf]
        %v3265 = vld [vmem:[#allocation21 + $0x3c] sm:$0xf]
        %v3266 = vld [vmem:[%s47] sm:$0x1]
        %v3268 = vlaneseq
        %v3269 = vshrl.u32 %v3268, 7
        %v3270 = vsub.s32 0, %v3269
        %v3271 = vrot.slane %v3266, %v3270
        %v3289 = vunpack.c.l.b16 %v3250
        %v3290 = vunpack.c.l.b16 %v3251
        %v3291 = vunpack.c.l.b16 %v3252
        %v3292 = vunpack.c.l.b16 %v3253
        %v3293 = vunpack.c.l.b16 %v3254
        %v3294 = vunpack.c.l.b16 %v3255
        %v3295 = vunpack.c.l.b16 %v3256
        %v3296 = vunpack.c.l.b16 %v3257
        %v3297 = vunpack.c.l.b16 %v3258
        %v3298 = vunpack.c.l.b16 %v3259
        %v3299 = vunpack.c.l.b16 %v3260
        %v3300 = vunpack.c.l.b16 %v3261
        %v3301 = vunpack.c.l.b16 %v3262
        %v3302 = vunpack.c.l.b16 %v3263
        %v3303 = vunpack.c.l.b16 %v3264
        %v3304 = vunpack.c.l.b16 %v3265
        %v3305 = vpack.c.b16 %v3290, %v3289
        %v3306 = vpack.c.b16 %v3292, %v3291
        %v3307 = vpack.c.b16 %v3294, %v3293
        %v3308 = vpack.c.b16 %v3296, %v3295
        %v3309 = vpack.c.b16 %v3298, %v3297
        %v3310 = vpack.c.b16 %v3300, %v3299
        %v3311 = vpack.c.b16 %v3302, %v3301
        %v3312 = vpack.c.b16 %v3304, %v3303
        %3321 = vmatprep.subr.bf16.mxu0 0
        %3322 = vmatpush1.bf16.msra.mxu0 %v3312
        %3323 = vmatprep.subr.bf16.mxu0 0
        %3324 = vmatpush1.bf16.msra.mxu0 %v3311
        %3325 = vmatprep.subr.bf16.mxu0 0
        %3326 = vmatpush1.bf16.msra.mxu0 %v3310
        %3327 = vmatprep.subr.bf16.mxu0 0
        %3328 = vmatpush1.bf16.msra.mxu0 %v3309
        %3329 = vmatprep.subr.bf16.mxu0 0
        %3330 = vmatpush1.bf16.msra.mxu0 %v3308
        %3331 = vmatprep.subr.bf16.mxu0 0
        %3332 = vmatpush1.bf16.msra.mxu0 %v3307
        %3333 = vmatprep.subr.bf16.mxu0 0
        %3334 = vmatpush1.bf16.msra.mxu0 %v3306
        %3335 = vmatprep.subr.bf16.mxu0 0
        %3336 = vmatpush1.bf16.msra.mxu0 %v3305
        %3337 = vmatprep.subr.bf16.mxu0 0
        %3338 = vmatpush2.bf16.msra.mxu0 0
        %3339 = vmatprep.subr.bf16.mxu0 0
        %3340 = vmatpush2.bf16.msra.mxu0 0
        %3341 = vmatprep.subr.bf16.mxu0 0
        %3342 = vmatpush2.bf16.msra.mxu0 0
        %3343 = vmatprep.subr.bf16.mxu0 0
        %3344 = vmatpush2.bf16.msra.mxu0 0
        %3345 = vmatprep.subr.bf16.mxu0 0
        %3346 = vmatpush2.bf16.msra.mxu0 0
        %3347 = vmatprep.subr.bf16.mxu0 0
        %3348 = vmatpush2.bf16.msra.mxu0 0
        %3349 = vmatprep.subr.bf16.mxu0 0
        %3350 = vmatpush2.bf16.msra.mxu0 0
        %3351 = vmatprep.subr.bf16.mxu0 0
        %3352 = vmatpush2.bf16.msra.mxu0 0
        %3353 = vmatprep.mubr.bf16.mxu0 0
        %3354 = vmatmul.mubr.bf16.gmra.mxu0 %v3249
        %v3355 = vpop.f32.mrf.mxu0
        %v3356 = vadd.f32 %v3271, %v3355
        %v3357 = vpop.f32.mrf.mxu0
        %v3358 = vpop.f32.mrf.mxu0
        %v3359 = vadd.f32 %v3271, %v3358
        %v3360 = vpop.f32.mrf.mxu0
        %3361 = vdwg.mxu0
        %v3362 = vadd.f32 %v2242, %v3356
        %v3363 = vadd.f32 %v2243, %v3359
        %3364 = vadd.xlane.f32.xlu0 %v3362
        %v3365 = vpop.xlane.xlu0 %3364
        %3366 = vadd.xlane.f32.xlu0 %v3363
        %v3367 = vpop.xlane.xlu0 %3366
        %v3368 = vmul.f32 %v3365, %v1228
        %v3369 = vmul.f32 %v3367, %v1228
        %v3370 = vsub.f32 %v3362, %v3368
        %v3371 = vsub.f32 %v3363, %v3369
        %v3372 = vmul.f32 %v3370, %v3370
        %v3373 = vmul.f32 %v3371, %v3371
        %3374 = vadd.xlane.f32.xlu0 %v3372
        %v3375 = vpop.xlane.xlu0 %3374
        %3376 = vadd.xlane.f32.xlu0 %v3373
        %v3377 = vpop.xlane.xlu0 %3376
        %v3378 = vmul.f32 %v3375, %v1228
        %v3379 = vmul.f32 %v3377, %v1228
        %v3380 = vadd.f32 %v3378, 1e-05
        %v3381 = vadd.f32 %v3379, 1e-05
        %v3382 = vrsqrt.pop %v3380
        %v3383 = vrsqrt.pop %v3381
        %v3384 = vmul.f32 %v3370, %v3382
        %v3385 = vmul.f32 %v3371, %v3383
        %v3386 = vld [vmem:[%s49] sm:$0x1]
        %v3388 = vlaneseq
        %v3389 = vshrl.u32 %v3388, 7
        %v3390 = vsub.s32 0, %v3389
        %v3391 = vrot.slane %v3386, %v3390
        %v3393 = vmul.f32 %v3384, %v3391
        %v3394 = vmul.f32 %v3385, %v3391
        %v3395 = vld [vmem:[%s51] sm:$0x1]
        %v3397 = vlaneseq
        %v3398 = vshrl.u32 %v3397, 7
        %v3399 = vsub.s32 0, %v3398
        %v3400 = vrot.slane %v3395, %v3399
        %v3402 = vadd.f32 %v3393, %v3400
        %v3403 = vadd.f32 %v3394, %v3400
        %v3404 = vpack.c.bf16 %v3403, %v3402
        %v3405 = vld [vmem:[#allocation23] sm:$0xff]
        %v3406 = vld [vmem:[#allocation23 + $0x8] sm:$0xff]
        %v3407 = vld [vmem:[#allocation23 + $0x10] sm:$0xff]
        %v3408 = vld [vmem:[#allocation23 + $0x18] sm:$0xff]
        %v3409 = vld [vmem:[#allocation23 + $0x20] sm:$0xff]
        %v3410 = vld [vmem:[#allocation23 + $0x28] sm:$0xff]
        %v3411 = vld [vmem:[#allocation23 + $0x30] sm:$0xff]
        %v3412 = vld [vmem:[#allocation23 + $0x38] sm:$0xff]
        %v3413 = vld [vmem:[#allocation23 + $0x40] sm:$0xff]
        %v3414 = vld [vmem:[#allocation23 + $0x48] sm:$0xff]
        %v3415 = vld [vmem:[#allocation23 + $0x50] sm:$0xff]
        %v3416 = vld [vmem:[#allocation23 + $0x58] sm:$0xff]
        %v3417 = vld [vmem:[#allocation23 + $0x60] sm:$0xff]
        %v3418 = vld [vmem:[#allocation23 + $0x68] sm:$0xff]
        %v3419 = vld [vmem:[#allocation23 + $0x70] sm:$0xff]
        %v3420 = vld [vmem:[#allocation23 + $0x78] sm:$0xff]
        %v3421 = vld [vmem:[%s55] sm:$0x3]
        %v3423 = vlaneseq
        %v3424 = vshrl.u32 %v3423, 7
        %v3425 = vsub.s32 0, %v3424
        %v3426 = vrot.slane %v3421, %v3425
        %v3427 = vlaneseq
        %v3428 = vshrl.u32 %v3427, 7
        %v3429 = vsub.s32 1, %v3428
        %v3430 = vrot.slane %v3421, %v3429
        %v3449 = vunpack.c.l.b16 %v3405
        %v3450 = vunpack.c.h.b16 %v3405
        %v3451 = vunpack.c.l.b16 %v3406
        %v3452 = vunpack.c.h.b16 %v3406
        %v3453 = vunpack.c.l.b16 %v3407
        %v3454 = vunpack.c.h.b16 %v3407
        %v3455 = vunpack.c.l.b16 %v3408
        %v3456 = vunpack.c.h.b16 %v3408
        %v3457 = vunpack.c.l.b16 %v3409
        %v3458 = vunpack.c.h.b16 %v3409
        %v3459 = vunpack.c.l.b16 %v3410
        %v3460 = vunpack.c.h.b16 %v3410
        %v3461 = vunpack.c.l.b16 %v3411
        %v3462 = vunpack.c.h.b16 %v3411
        %v3463 = vunpack.c.l.b16 %v3412
        %v3464 = vunpack.c.h.b16 %v3412
        %v3465 = vunpack.c.l.b16 %v3413
        %v3466 = vunpack.c.h.b16 %v3413
        %v3467 = vunpack.c.l.b16 %v3414
        %v3468 = vunpack.c.h.b16 %v3414
        %v3469 = vunpack.c.l.b16 %v3415
        %v3470 = vunpack.c.h.b16 %v3415
        %v3471 = vunpack.c.l.b16 %v3416
        %v3472 = vunpack.c.h.b16 %v3416
        %v3473 = vunpack.c.l.b16 %v3417
        %v3474 = vunpack.c.h.b16 %v3417
        %v3475 = vunpack.c.l.b16 %v3418
        %v3476 = vunpack.c.h.b16 %v3418
        %v3477 = vunpack.c.l.b16 %v3419
        %v3478 = vunpack.c.h.b16 %v3419
        %v3479 = vunpack.c.l.b16 %v3420
        %v3480 = vunpack.c.h.b16 %v3420
        %v3481 = vpack.c.b16 %v3451, %v3449
        %v3482 = vpack.c.b16 %v3452, %v3450
        %v3483 = vpack.c.b16 %v3455, %v3453
        %v3484 = vpack.c.b16 %v3456, %v3454
        %v3485 = vpack.c.b16 %v3459, %v3457
        %v3486 = vpack.c.b16 %v3460, %v3458
        %v3487 = vpack.c.b16 %v3463, %v3461
        %v3488 = vpack.c.b16 %v3464, %v3462
        %v3489 = vpack.c.b16 %v3467, %v3465
        %v3490 = vpack.c.b16 %v3468, %v3466
        %v3491 = vpack.c.b16 %v3471, %v3469
        %v3492 = vpack.c.b16 %v3472, %v3470
        %v3493 = vpack.c.b16 %v3475, %v3473
        %v3494 = vpack.c.b16 %v3476, %v3474
        %v3495 = vpack.c.b16 %v3479, %v3477
        %v3496 = vpack.c.b16 %v3480, %v3478
        %3513 = vmatprep.subr.bf16.mxu0 %v3496
        %3514 = vmatpush1.bf16.msra.mxu0 %v3495
        %3515 = vmatprep.subr.bf16.mxu0 %v3494
        %3516 = vmatpush1.bf16.msra.mxu0 %v3493
        %3517 = vmatprep.subr.bf16.mxu0 %v3492
        %3518 = vmatpush1.bf16.msra.mxu0 %v3491
        %3519 = vmatprep.subr.bf16.mxu0 %v3490
        %3520 = vmatpush1.bf16.msra.mxu0 %v3489
        %3521 = vmatprep.subr.bf16.mxu0 %v3488
        %3522 = vmatpush1.bf16.msra.mxu0 %v3487
        %3523 = vmatprep.subr.bf16.mxu0 %v3486
        %3524 = vmatpush1.bf16.msra.mxu0 %v3485
        %3525 = vmatprep.subr.bf16.mxu0 %v3484
        %3526 = vmatpush1.bf16.msra.mxu0 %v3483
        %3527 = vmatprep.subr.bf16.mxu0 %v3482
        %3528 = vmatpush1.bf16.msra.mxu0 %v3481
        %3529 = vmatprep.subr.bf16.mxu0 0
        %3530 = vmatpush2.bf16.msra.mxu0 0
        %3531 = vmatprep.subr.bf16.mxu0 0
        %3532 = vmatpush2.bf16.msra.mxu0 0
        %3533 = vmatprep.subr.bf16.mxu0 0
        %3534 = vmatpush2.bf16.msra.mxu0 0
        %3535 = vmatprep.subr.bf16.mxu0 0
        %3536 = vmatpush2.bf16.msra.mxu0 0
        %3537 = vmatprep.subr.bf16.mxu0 0
        %3538 = vmatpush2.bf16.msra.mxu0 0
        %3539 = vmatprep.subr.bf16.mxu0 0
        %3540 = vmatpush2.bf16.msra.mxu0 0
        %3541 = vmatprep.subr.bf16.mxu0 0
        %3542 = vmatpush2.bf16.msra.mxu0 0
        %3543 = vmatprep.subr.bf16.mxu0 0
        %3544 = vmatpush2.bf16.msra.mxu0 0
        %3545 = vmatprep.mubr.bf16.mxu0 0
        %3546 = vmatmul.mubr.bf16.gmra.mxu0 %v3404
        %v3547 = vpop.f32.mrf.mxu0
        %v3548 = vadd.f32 %v3426, %v3547
        %v3549 = vpop.f32.mrf.mxu0
        %v3550 = vadd.f32 %v3430, %v3549
        %v3551 = vpop.f32.mrf.mxu0
        %v3552 = vadd.f32 %v3426, %v3551
        %v3553 = vpop.f32.mrf.mxu0
        %v3554 = vadd.f32 %v3430, %v3553
        %3555 = vdwg.mxu0
        %v3556 = vmul.f32 %v3548, 0.5
        %v3557 = vmul.f32 %v3550, 0.5
        %v3558 = vmul.f32 %v3552, 0.5
        %v3559 = vmul.f32 %v3554, 0.5
        %v3560 = vmul.f32 %v3548, 0.70710677
        %v3561 = vmul.f32 %v3550, 0.70710677
        %v3562 = vmul.f32 %v3552, 0.70710677
        %v3563 = vmul.f32 %v3554, 0.70710677
        %v3564 = verf.f32.pop %v3560
        %v3565 = verf.f32.pop %v3561
        %v3566 = verf.f32.pop %v3562
        %v3567 = verf.f32.pop %v3563
        %v3568 = vadd.f32 %v3564, 1.0
        %v3569 = vadd.f32 %v3565, 1.0
        %v3570 = vadd.f32 %v3566, 1.0
        %v3571 = vadd.f32 %v3567, 1.0
        %v3572 = vmul.f32 %v3556, %v3568
        %v3573 = vmul.f32 %v3557, %v3569
        %v3574 = vmul.f32 %v3558, %v3570
        %v3575 = vmul.f32 %v3559, %v3571
        %v3576 = vpack.c.bf16 %v3574, %v3572
        %v3577 = vpack.c.bf16 %v3575, %v3573
        %v3578 = vld [vmem:[#allocation24] sm:$0xf]
        %v3579 = vld [vmem:[#allocation24 + $0x4] sm:$0xf]
        %v3580 = vld [vmem:[#allocation24 + $0x8] sm:$0xf]
        %v3581 = vld [vmem:[#allocation24 + $0xc] sm:$0xf]
        %v3582 = vld [vmem:[#allocation24 + $0x10] sm:$0xf]
        %v3583 = vld [vmem:[#allocation24 + $0x14] sm:$0xf]
        %v3584 = vld [vmem:[#allocation24 + $0x18] sm:$0xf]
        %v3585 = vld [vmem:[#allocation24 + $0x1c] sm:$0xf]
        %v3586 = vld [vmem:[#allocation24 + $0x20] sm:$0xf]
        %v3587 = vld [vmem:[#allocation24 + $0x24] sm:$0xf]
        %v3588 = vld [vmem:[#allocation24 + $0x28] sm:$0xf]
        %v3589 = vld [vmem:[#allocation24 + $0x2c] sm:$0xf]
        %v3590 = vld [vmem:[#allocation24 + $0x30] sm:$0xf]
        %v3591 = vld [vmem:[#allocation24 + $0x34] sm:$0xf]
        %v3592 = vld [vmem:[#allocation24 + $0x38] sm:$0xf]
        %v3593 = vld [vmem:[#allocation24 + $0x3c] sm:$0xf]
        %v3594 = vld [vmem:[#allocation24 + $0x40] sm:$0xf]
        %v3595 = vld [vmem:[#allocation24 + $0x44] sm:$0xf]
        %v3596 = vld [vmem:[#allocation24 + $0x48] sm:$0xf]
        %v3597 = vld [vmem:[#allocation24 + $0x4c] sm:$0xf]
        %v3598 = vld [vmem:[#allocation24 + $0x50] sm:$0xf]
        %v3599 = vld [vmem:[#allocation24 + $0x54] sm:$0xf]
        %v3600 = vld [vmem:[#allocation24 + $0x58] sm:$0xf]
        %v3601 = vld [vmem:[#allocation24 + $0x5c] sm:$0xf]
        %v3602 = vld [vmem:[#allocation24 + $0x60] sm:$0xf]
        %v3603 = vld [vmem:[#allocation24 + $0x64] sm:$0xf]
        %v3604 = vld [vmem:[#allocation24 + $0x68] sm:$0xf]
        %v3605 = vld [vmem:[#allocation24 + $0x6c] sm:$0xf]
        %v3606 = vld [vmem:[#allocation24 + $0x70] sm:$0xf]
        %v3607 = vld [vmem:[#allocation24 + $0x74] sm:$0xf]
        %v3608 = vld [vmem:[#allocation24 + $0x78] sm:$0xf]
        %v3609 = vld [vmem:[#allocation24 + $0x7c] sm:$0xf]
        %v3610 = vld [vmem:[%s59] sm:$0x1]
        %v3612 = vlaneseq
        %v3613 = vshrl.u32 %v3612, 7
        %v3614 = vsub.s32 0, %v3613
        %v3615 = vrot.slane %v3610, %v3614
        %v3649 = vunpack.c.l.b16 %v3578
        %v3650 = vunpack.c.l.b16 %v3579
        %v3651 = vunpack.c.l.b16 %v3580
        %v3652 = vunpack.c.l.b16 %v3581
        %v3653 = vunpack.c.l.b16 %v3582
        %v3654 = vunpack.c.l.b16 %v3583
        %v3655 = vunpack.c.l.b16 %v3584
        %v3656 = vunpack.c.l.b16 %v3585
        %v3657 = vunpack.c.l.b16 %v3586
        %v3658 = vunpack.c.l.b16 %v3587
        %v3659 = vunpack.c.l.b16 %v3588
        %v3660 = vunpack.c.l.b16 %v3589
        %v3661 = vunpack.c.l.b16 %v3590
        %v3662 = vunpack.c.l.b16 %v3591
        %v3663 = vunpack.c.l.b16 %v3592
        %v3664 = vunpack.c.l.b16 %v3593
        %v3665 = vunpack.c.l.b16 %v3594
        %v3666 = vunpack.c.l.b16 %v3595
        %v3667 = vunpack.c.l.b16 %v3596
        %v3668 = vunpack.c.l.b16 %v3597
        %v3669 = vunpack.c.l.b16 %v3598
        %v3670 = vunpack.c.l.b16 %v3599
        %v3671 = vunpack.c.l.b16 %v3600
        %v3672 = vunpack.c.l.b16 %v3601
        %v3673 = vunpack.c.l.b16 %v3602
        %v3674 = vunpack.c.l.b16 %v3603
        %v3675 = vunpack.c.l.b16 %v3604
        %v3676 = vunpack.c.l.b16 %v3605
        %v3677 = vunpack.c.l.b16 %v3606
        %v3678 = vunpack.c.l.b16 %v3607
        %v3679 = vunpack.c.l.b16 %v3608
        %v3680 = vunpack.c.l.b16 %v3609
        %v3681 = vpack.c.b16 %v3650, %v3649
        %v3682 = vpack.c.b16 %v3652, %v3651
        %v3683 = vpack.c.b16 %v3654, %v3653
        %v3684 = vpack.c.b16 %v3656, %v3655
        %v3685 = vpack.c.b16 %v3658, %v3657
        %v3686 = vpack.c.b16 %v3660, %v3659
        %v3687 = vpack.c.b16 %v3662, %v3661
        %v3688 = vpack.c.b16 %v3664, %v3663
        %v3689 = vpack.c.b16 %v3666, %v3665
        %v3690 = vpack.c.b16 %v3668, %v3667
        %v3691 = vpack.c.b16 %v3670, %v3669
        %v3692 = vpack.c.b16 %v3672, %v3671
        %v3693 = vpack.c.b16 %v3674, %v3673
        %v3694 = vpack.c.b16 %v3676, %v3675
        %v3695 = vpack.c.b16 %v3678, %v3677
        %v3696 = vpack.c.b16 %v3680, %v3679
        %3713 = vmatprep.subr.bf16.mxu0 0
        %3714 = vmatpush1.bf16.msra.mxu0 %v3688
        %3715 = vmatprep.subr.bf16.mxu0 0
        %3716 = vmatpush1.bf16.msra.mxu0 %v3687
        %3717 = vmatprep.subr.bf16.mxu0 0
        %3718 = vmatpush1.bf16.msra.mxu0 %v3686
        %3719 = vmatprep.subr.bf16.mxu0 0
        %3720 = vmatpush1.bf16.msra.mxu0 %v3685
        %3721 = vmatprep.subr.bf16.mxu0 0
        %3722 = vmatpush1.bf16.msra.mxu0 %v3684
        %3723 = vmatprep.subr.bf16.mxu0 0
        %3724 = vmatpush1.bf16.msra.mxu0 %v3683
        %3725 = vmatprep.subr.bf16.mxu0 0
        %3726 = vmatpush1.bf16.msra.mxu0 %v3682
        %3727 = vmatprep.subr.bf16.mxu0 0
        %3728 = vmatpush1.bf16.msra.mxu0 %v3681
        %3729 = vmatprep.subr.bf16.mxu0 0
        %3730 = vmatpush2.bf16.msra.mxu0 %v3696
        %3731 = vmatprep.subr.bf16.mxu0 0
        %3732 = vmatpush2.bf16.msra.mxu0 %v3695
        %3733 = vmatprep.subr.bf16.mxu0 0
        %3734 = vmatpush2.bf16.msra.mxu0 %v3694
        %3735 = vmatprep.subr.bf16.mxu0 0
        %3736 = vmatpush2.bf16.msra.mxu0 %v3693
        %3737 = vmatprep.subr.bf16.mxu0 0
        %3738 = vmatpush2.bf16.msra.mxu0 %v3692
        %3739 = vmatprep.subr.bf16.mxu0 0
        %3740 = vmatpush2.bf16.msra.mxu0 %v3691
        %3741 = vmatprep.subr.bf16.mxu0 0
        %3742 = vmatpush2.bf16.msra.mxu0 %v3690
        %3743 = vmatprep.subr.bf16.mxu0 0
        %3744 = vmatpush2.bf16.msra.mxu0 %v3689
        %3745 = vmatprep.mubr.bf16.mxu0 %v3577
        %3746 = vmatmul.mubr.bf16.gmra.mxu0 %v3576
        %v3747 = vpop.f32.mrf.mxu0
        %v3748 = vadd.f32 %v3615, %v3747
        %v3749 = vpop.f32.mrf.mxu0
        %v3750 = vpop.f32.mrf.mxu0
        %v3751 = vadd.f32 %v3615, %v3750
        %v3752 = vpop.f32.mrf.mxu0
        %3753 = vdwg.mxu0
        %v3754 = vadd.f32 %v3362, %v3748
        %v3755 = vadd.f32 %v3363, %v3751
        %3756 = vst [vmem:[%s1210] sm:$0xff] %v3754
        %3757 = vst [vmem:[%s1210 + $0x8] sm:$0xff] %v3755
        %s3758 = sand.u32 %s747, 1
        %s3759 = scalar_lea.sflag [#allocation5], %s3758
        %s3760 = sand.u32 %s747, 1
        %s3761 = smul.addr %s3760, 16
        %s3762 = scalar_lea.vmem [#allocation26], %s3761
        // Predicated region
        $region197: #{tpu_custom_call.1} parent=139 // pred_check
          %p3763 = pneg %p757
        $region198: #{tpu_custom_call.1} parent=139 // pred_check_branch
          %3765 = sbr.rel (%p3763) target = $region200
        $region199: #{tpu_custom_call.1} parent=139 // pred_region
          %s3767 = ssub.s32 256, 256
          %3768 = vsyncadd %s3759, %s3767
          %s3769 = smul.addr %s89, 2
          %s3770 = smul.addr %s3769, 128
          %s3771 = scalar_lea.hbm %s61, %s3770
          %s3772 = sshll.u32 %s3762, 4
          %s3773 = int_to_ptr.vmem [resolvable:$true] %s3772
          %3778 = dma.vmem_to_hbm [thread:$0]  %s3773, 256, %s3771, %s3759, 128, 128, 8
        $region200: #{tpu_custom_call.1} parent=139 // pred_fallthru
          _
      $region140: #{tpu_custom_call.1} parent=5 // pred_fallthru
        _
      %p3779 = scmp.le.s32.totalorder 2, %s84
      // Predicated region
      $region201: #{tpu_custom_call.1} parent=5 // pred_check
        %p3780 = pneg %p3779
      $region202: #{tpu_custom_call.1} parent=5 // pred_check_branch
        %3782 = sbr.rel (%p3780) target = $region204
      $region203: #{tpu_custom_call.1} parent=5 // pred_region
        %s3783 = ssub.s32 %s84, 2
        // Predicated region
        $region205: #{tpu_custom_call.1} parent=203 // pred_check
          %p3784 = pneg %p763
        $region206: #{tpu_custom_call.1} parent=203 // pred_check_branch
          %3786 = sbr.rel (%p3784) target = $region208
        $region207: #{tpu_custom_call.1} parent=203 // pred_region
          %s3787 = sand.u32 %s748, 1
          %s3788 = scalar_lea.sflag [#allocation5], %s3787
          %s3789 = sand.u32 %s748, 1
          %s3790 = smul.addr %s3789, 16
          %s3791 = scalar_lea.vmem [#allocation26], %s3790
          %3792 = dma.done %s3788, 256
        $region208: #{tpu_custom_call.1} parent=203 // pred_fallthru
          _
      $region204: #{tpu_custom_call.1} parent=5 // pred_fallthru
        _
    $region6: #{tpu_custom_call.1} parent=1 // loop_footer
      %s88 = sadd.s32 1, %s84
    $region7: #{tpu_custom_call.1} parent=1 // loop_footer_branch
      %83 = sbr.rel target = $region3
    $region8: #{tpu_custom_call.1} parent=1 // loop_exit
      _
    %3793 = vsyncpa [#allocation4], 1
    %s3794 = scalar_lea.sflag [#allocation4], 1
    %3795 = vsyncpa %s3794, 1
    %3796 = vsyncpa [#allocation7], 1
    %s3797 = scalar_lea.sflag [#allocation7], 1
    %3798 = vsyncpa %s3797, 1
    %3799 = vsyncpa [#allocation10], 1
    %s3800 = scalar_lea.sflag [#allocation10], 1
    %3801 = vsyncpa %s3800, 1
    %3802 = vsyncpa [#allocation13], 1
    %3803 = vsyncpa [#allocation16], 1
    %3804 = vsyncpa [#allocation19], 1
    %3805 = vsyncpa [#allocation22], 1
    %3806 = vsyncpa [#allocation25], 1
    %3807 = vsyncpa [#allocation5], 1
    %s3808 = scalar_lea.sflag [#allocation5], 1
    %3809 = vsyncpa %s3808, 1

</llo_original>
